<compile_context>
chip_gen: v7x
topology: tpu7x:2x2x1
jax: 0.10.0
libtpu: 0.0.40
codegen_flags: <defaults>
</compile_context>

<pallas_src>
from functools import partial

import jax
import jax.numpy as jnp
from jax.experimental import pallas as pl
from jax.experimental.pallas import tpu as pltpu

# ---- module "parameters" (deterministic, from __init__ defaults) -------------
COCO_NON_OBJECT_LABELS = {
    0, 94, 97, 101, 102, 103, 106, 111, 113, 114, 115, 116, 117, 118, 119, 120,
    124, 125, 126, 127, 129, 131, 132, 134, 135, 136, 138, 139, 140, 141, 142,
    143, 145, 146, 147, 148, 149, 150, 151, 152, 154, 155, 157, 159, 160, 162,
    164, 167, 168, 169, 171, 172, 173, 174, 175, 176, 177, 178, 179, 182, 183,
}
COCO_NUM_CLASSES_WITHOUT_UNKNOWN = 182
NUM_CLASSES = COCO_NUM_CLASSES_WITHOUT_UNKNOWN + 1            # 183
NUM_SEM_CHANNELS = NUM_CLASSES + 1                            # 184
OBJECT_INDICES = tuple(sorted(set(range(NUM_CLASSES + 1)) - COCO_NON_OBJECT_LABELS))

W0, W1 = 9.0, 1.0                 # weights = [9, 1]
_VMEM_BUDGET_BYTES = 48 << 20     # v7x-safe (64 MiB physical / TC); fine on v5e/v6e


# ---- kernel helpers -----------------------------------------------------------
def _interleaved_channel_sum(sem_ref, channels, spatial_shape, n_acc=4):
    """sum_c f32(sem_ref[0, c]) over a static channel list, split across n_acc
    independent accumulator chains so the vadds can co-issue on the 4 VALU
    slots (instead of one 123-long dependent chain)."""
    if not channels:
        return jnp.zeros(spatial_shape, jnp.float32)
    parts = []
    for k in range(min(n_acc, len(channels))):
        sub = channels[k::n_acc]
        acc = sem_ref[0, sub[0]].astype(jnp.float32)
        for c in sub[1:]:
            acc = acc + sem_ref[0, c].astype(jnp.float32)
        parts.append(acc)
    while len(parts) > 1:                      # pairwise combine
        nxt = [parts[i] + parts[i + 1] for i in range(0, len(parts) - 1, 2)]
        if len(parts) % 2:
            nxt.append(parts[-1])
        parts = nxt
    return parts[0]


def _make_fused_kernel(reduce_channels, invert, num_loss_channels):
    def fused_kernel(sem_ref, loss_ref, pht_ref, pw_ref, out_ref):
        spatial = sem_ref.shape[2:]                               # (THS, Ws)

        # object map for this spatial tile (cast-to-f32-before-add, v5e-safe).
        csum = _interleaved_channel_sum(sem_ref, reduce_channels, spatial)
        obj = (1.0 - csum) if invert else csum

        # unnormalized weights map: W0*obj + W1*(1-obj)
        wm = W1 + (W0 - W1) * obj                                 # (THS, Ws) f32

        # channel-reduce the loss in f32, then pool DOWN to the source tile
        # (Ph_tile^T @ sum_c loss @ Pw == exact adjoint of nearest upsampling).
        lsum = loss_ref[0, 0].astype(jnp.float32)                 # (HLB, Wl)
        for c in range(1, num_loss_channels):
            lsum = lsum + loss_ref[0, c].astype(jnp.float32)
        tmp = jnp.dot(pht_ref[...], lsum,
                      preferred_element_type=jnp.float32)         # (THS, Wl)
        pooled = jnp.dot(tmp, pw_ref[...],
                         preferred_element_type=jnp.float32)      # (THS, Ws)

        # per-(n, tile) partial sums, written as full lane-dense (8,128) tiles.
        out_ref[0, 0] = jnp.full((8, 128), jnp.sum(wm), dtype=jnp.float32)
        out_ref[0, 1] = jnp.full((8, 128), jnp.sum(wm * pooled), dtype=jnp.float32)

    return fused_kernel


# ---- tile selection against the VMEM budget -----------------------------------
def _pick_h_tile(Hs, Hl, C, Ws, Cl, Wl, sem_itemsize, loss_itemsize, budget):
    """Largest source-row tile whose double-buffered footprint fits `budget`;
    prefers >= 2 tiles (pipeline depth + 2-TC balance on v7x for small N)."""
    def footprint(ths):
        t = Hs // ths
        hlb = Hl // t
        blocks = (C * ths * Ws * sem_itemsize        # semantics tile
                  + Cl * hlb * Wl * loss_itemsize    # loss tile
                  + (ths * hlb + Wl * Ws) * 4        # pooling operators
                  + 2 * 8 * 128 * 4)                 # partial-sum slab
        temps = (8 * ths * Ws + hlb * Wl + ths * Wl) * 4
        return 2 * blocks + temps + (2 << 20)        # x2 double-buffer + headroom

    # sublane multiple that satisfies both dtypes' packing (bf16 -> 16, i8 -> 32)
    min_mult = max(8 * max(1, 4 // sem_itemsize), 8 * max(1, 4 // loss_itemsize), 8)
    cands = ([d for d in range(min_mult, Hs + 1, min_mult) if Hs % d == 0]
             if Hl % Hs == 0 else [])
    for d in sorted((c for c in cands if c < Hs), reverse=True):
        if footprint(d) <= budget:
            return d, footprint(d)
    if not cands or footprint(Hs) <= budget:
        return Hs, footprint(Hs)
    d = min(cands)                                   # budget-bound: best effort
    return d, footprint(d)


# ---- wrapper -------------------------------------------------------------------
@partial(jax.jit, static_argnames=("assume_channels_sum_to_one",))
def object_aware_loss(unreduced_loss, input_semantics, *,
                      assume_channels_sum_to_one=False):
    N, C, Hs, Ws = input_semantics.shape
    Nl, Cl, Hl, Wl = unreduced_loss.shape
    assert Nl == N, "batch mismatch"

    obj_channels = tuple(i for i in OBJECT_INDICES if i < C)
    if assume_channels_sum_to_one:
        # gated fast path: valid only when channels sum to 1 (one-hot/softmax)
        reduce_channels = tuple(i for i in range(C) if i not in OBJECT_INDICES)
        invert = True
    else:
        reduce_channels, invert = obj_channels, False

    ths, fp = _pick_h_tile(Hs, Hl, C, Ws, Cl, Wl,
                           input_semantics.dtype.itemsize,
                           unreduced_loss.dtype.itemsize,
                           _VMEM_BUDGET_BYTES)
    T = Hs // ths
    hlb = Hl // T            # loss rows covered by one source-row tile

    # F.interpolate(..., mode='nearest'): src = floor(dst * in / out).
    # For integer Hl/Hs the per-tile Ph^T block is identical for every tile.
    ih = (jnp.arange(hlb) * Hs) // Hl
    pht = (jnp.arange(ths)[:, None] == ih[None, :]).astype(jnp.float32)  # (THS, HLB)
    iw = (jnp.arange(Wl) * Ws) // Wl
    pw = (iw[:, None] == jnp.arange(Ws)[None, :]).astype(jnp.float32)    # (Wl, Ws)

    partials = pl.pallas_call(
        _make_fused_kernel(reduce_channels, invert, Cl),
        grid=(N, T),
        in_specs=[
            pl.BlockSpec((1, C, ths, Ws), lambda n, t: (n, 0, t, 0)),
            pl.BlockSpec((1, Cl, hlb, Wl), lambda n, t: (n, 0, t, 0)),
            pl.BlockSpec((ths, hlb), lambda n, t: (0, 0)),
            pl.BlockSpec((Wl, Ws), lambda n, t: (0, 0)),
        ],
        out_specs=pl.BlockSpec((1, 2, 8, 128), lambda n, t: (n * T + t, 0, 0, 0)),
        out_shape=jax.ShapeDtypeStruct((N * T, 2, 8, 128), jnp.float32),
        compiler_params=pltpu.CompilerParams(
            dimension_semantics=("parallel", "parallel"),
            vmem_limit_bytes=int(max(_VMEM_BUDGET_BYTES, fp)),
        ),
    )(input_semantics, unreduced_loss, pht, pw)

    sum_wm = jnp.sum(partials[:, 0, 0, 0])   # global sum(weights_map), unnormalized
    wsum = jnp.sum(partials[:, 1, 0, 0])     # global sum(wm * pooled(sum_c loss))
    # sum(object_map + non_object_map) == N*Hs*Ws exactly (non_obj := 1 - obj)
    scale = (N * Hs * Ws) / sum_wm
    return wsum * scale / (N * Cl * Hl * Wl)   # == torch.mean(wm_interp * loss)


# ---- pure-JAX reference for validation ------------------------------------------
def _reference(unreduced_loss, input_semantics):
    sem = input_semantics.astype(jnp.float32)
    C = sem.shape[1]
    obj_idx = jnp.array([i for i in OBJECT_INDICES if i < C], dtype=jnp.int32)
    obj = jnp.sum(sem[:, obj_idx], axis=1, keepdims=True)
    non_obj = 1.0 - obj
    wm = W0 * obj + W1 * non_obj
    wm = wm / jnp.sum(wm) * jnp.sum(obj + non_obj)
    Hs, Ws = sem.shape[-2:]
    Hl, Wl = unreduced_loss.shape[-2:]
    ih = (jnp.arange(Hl) * Hs) // Hl
    iw = (jnp.arange(Wl) * Ws) // Wl
    wm_i = wm[:, :, ih, :][:, :, :, iw]
    return jnp.mean(wm_i * unreduced_loss)


if __name__ == "__main__":
    key = jax.random.PRNGKey(0)
    k1, k2 = jax.random.split(key)

    N, Hs, Ws = 2, 32, 32
    Cl, Hl, Wl = 3, 64, 64

    labels = jax.random.randint(k1, (N, Hs, Ws), 0, NUM_SEM_CHANNELS)
    # narrowed semantics dtype (bf16 one-hot is exact); kernel casts per channel
    input_semantics = jax.nn.one_hot(labels, NUM_SEM_CHANNELS, dtype=jnp.bfloat16)
    input_semantics = jnp.transpose(input_semantics, (0, 3, 1, 2))   # NCHW [2,184,32,32]
    unreduced_loss = jax.random.uniform(k2, (N, Cl, Hl, Wl), dtype=jnp.float32)

    out = object_aware_loss(unreduced_loss, input_semantics)
    out = jax.block_until_ready(out)
    ref = _reference(unreduced_loss, input_semantics)
    assert jnp.allclose(out, ref, rtol=1e-4, atol=1e-6), (out, ref)

    # gated fast path is valid here because the test inputs are one-hot
    out2 = object_aware_loss(unreduced_loss, input_semantics,
                             assume_channels_sum_to_one=True)
    out2 = jax.block_until_ready(out2)
    assert jnp.allclose(out2, ref, rtol=1e-4, atol=1e-6), (out2, ref)

    print("KERNEL_OK")
</pallas_src>

<mosaic_0001>
module attributes {stable_mosaic.version = 11 : i64} {
  func.func @fused_kernel(%arg0: i32, %arg1: i32, %arg2: memref<1x184x16x32xbf16, #tpu.memory_space<vmem>>, %arg3: memref<1x3x32x64xf32, #tpu.memory_space<vmem>>, %arg4: memref<16x32xf32, #tpu.memory_space<vmem>>, %arg5: memref<64x32xf32, #tpu.memory_space<vmem>>, %arg6: memref<1x2x8x128xf32, #tpu.memory_space<vmem>>) attributes {dimension_semantics = [#tpu.dimension_semantics<parallel>, #tpu.dimension_semantics<parallel>], iteration_bounds = array<i64: 2, 2>, scalar_prefetch = 0 : i64, scratch_operands = 0 : i64, tpu.core_type = #tpu.core_type<tc>, window_params = [{transform_indices = @transform_0, window_bounds = array<i64: 1, 184, 16, 32>}, {transform_indices = @transform_1, window_bounds = array<i64: 1, 3, 32, 64>}, {pipeline_mode = #tpu.pipeline_mode<synchronous>, transform_indices = @transform_2, window_bounds = array<i64: 16, 32>}, {pipeline_mode = #tpu.pipeline_mode<synchronous>, transform_indices = @transform_3, window_bounds = array<i64: 64, 32>}, {transform_indices = @transform_4, window_bounds = array<i64: 1, 2, 8, 128>}]} {
    %c0 = arith.constant 0 : index
    %c1 = arith.constant 1 : index
    %c0_0 = arith.constant 0 : index
    %c0_1 = arith.constant 0 : index
    %0 = vector.load %arg2[%c0, %c1, %c0_0, %c0_1] : memref<1x184x16x32xbf16, #tpu.memory_space<vmem>>, vector<1x1x16x32xbf16>
    %1 = vector.shape_cast %0 : vector<1x1x16x32xbf16> to vector<16x32xbf16>
    %2 = arith.extf %1 : vector<16x32xbf16> to vector<16x32xf32>
    %c0_2 = arith.constant 0 : index
    %c5 = arith.constant 5 : index
    %c0_3 = arith.constant 0 : index
    %c0_4 = arith.constant 0 : index
    %3 = vector.load %arg2[%c0_2, %c5, %c0_3, %c0_4] : memref<1x184x16x32xbf16, #tpu.memory_space<vmem>>, vector<1x1x16x32xbf16>
    %4 = vector.shape_cast %3 : vector<1x1x16x32xbf16> to vector<16x32xbf16>
    %5 = arith.extf %4 : vector<16x32xbf16> to vector<16x32xf32>
    %6 = arith.addf %2, %5 : vector<16x32xf32>
    %c0_5 = arith.constant 0 : index
    %c9 = arith.constant 9 : index
    %c0_6 = arith.constant 0 : index
    %c0_7 = arith.constant 0 : index
    %7 = vector.load %arg2[%c0_5, %c9, %c0_6, %c0_7] : memref<1x184x16x32xbf16, #tpu.memory_space<vmem>>, vector<1x1x16x32xbf16>
    %8 = vector.shape_cast %7 : vector<1x1x16x32xbf16> to vector<16x32xbf16>
    %9 = arith.extf %8 : vector<16x32xbf16> to vector<16x32xf32>
    %10 = arith.addf %6, %9 : vector<16x32xf32>
    %c0_8 = arith.constant 0 : index
    %c13 = arith.constant 13 : index
    %c0_9 = arith.constant 0 : index
    %c0_10 = arith.constant 0 : index
    %11 = vector.load %arg2[%c0_8, %c13, %c0_9, %c0_10] : memref<1x184x16x32xbf16, #tpu.memory_space<vmem>>, vector<1x1x16x32xbf16>
    %12 = vector.shape_cast %11 : vector<1x1x16x32xbf16> to vector<16x32xbf16>
    %13 = arith.extf %12 : vector<16x32xbf16> to vector<16x32xf32>
    %14 = arith.addf %10, %13 : vector<16x32xf32>
    %c0_11 = arith.constant 0 : index
    %c17 = arith.constant 17 : index
    %c0_12 = arith.constant 0 : index
    %c0_13 = arith.constant 0 : index
    %15 = vector.load %arg2[%c0_11, %c17, %c0_12, %c0_13] : memref<1x184x16x32xbf16, #tpu.memory_space<vmem>>, vector<1x1x16x32xbf16>
    %16 = vector.shape_cast %15 : vector<1x1x16x32xbf16> to vector<16x32xbf16>
    %17 = arith.extf %16 : vector<16x32xbf16> to vector<16x32xf32>
    %18 = arith.addf %14, %17 : vector<16x32xf32>
    %c0_14 = arith.constant 0 : index
    %c21 = arith.constant 21 : index
    %c0_15 = arith.constant 0 : index
    %c0_16 = arith.constant 0 : index
    %19 = vector.load %arg2[%c0_14, %c21, %c0_15, %c0_16] : memref<1x184x16x32xbf16, #tpu.memory_space<vmem>>, vector<1x1x16x32xbf16>
    %20 = vector.shape_cast %19 : vector<1x1x16x32xbf16> to vector<16x32xbf16>
    %21 = arith.extf %20 : vector<16x32xbf16> to vector<16x32xf32>
    %22 = arith.addf %18, %21 : vector<16x32xf32>
    %c0_17 = arith.constant 0 : index
    %c25 = arith.constant 25 : index
    %c0_18 = arith.constant 0 : index
    %c0_19 = arith.constant 0 : index
    %23 = vector.load %arg2[%c0_17, %c25, %c0_18, %c0_19] : memref<1x184x16x32xbf16, #tpu.memory_space<vmem>>, vector<1x1x16x32xbf16>
    %24 = vector.shape_cast %23 : vector<1x1x16x32xbf16> to vector<16x32xbf16>
    %25 = arith.extf %24 : vector<16x32xbf16> to vector<16x32xf32>
    %26 = arith.addf %22, %25 : vector<16x32xf32>
    %c0_20 = arith.constant 0 : index
    %c29 = arith.constant 29 : index
    %c0_21 = arith.constant 0 : index
    %c0_22 = arith.constant 0 : index
    %27 = vector.load %arg2[%c0_20, %c29, %c0_21, %c0_22] : memref<1x184x16x32xbf16, #tpu.memory_space<vmem>>, vector<1x1x16x32xbf16>
    %28 = vector.shape_cast %27 : vector<1x1x16x32xbf16> to vector<16x32xbf16>
    %29 = arith.extf %28 : vector<16x32xbf16> to vector<16x32xf32>
    %30 = arith.addf %26, %29 : vector<16x32xf32>
    %c0_23 = arith.constant 0 : index
    %c33 = arith.constant 33 : index
    %c0_24 = arith.constant 0 : index
    %c0_25 = arith.constant 0 : index
    %31 = vector.load %arg2[%c0_23, %c33, %c0_24, %c0_25] : memref<1x184x16x32xbf16, #tpu.memory_space<vmem>>, vector<1x1x16x32xbf16>
    %32 = vector.shape_cast %31 : vector<1x1x16x32xbf16> to vector<16x32xbf16>
    %33 = arith.extf %32 : vector<16x32xbf16> to vector<16x32xf32>
    %34 = arith.addf %30, %33 : vector<16x32xf32>
    %c0_26 = arith.constant 0 : index
    %c37 = arith.constant 37 : index
    %c0_27 = arith.constant 0 : index
    %c0_28 = arith.constant 0 : index
    %35 = vector.load %arg2[%c0_26, %c37, %c0_27, %c0_28] : memref<1x184x16x32xbf16, #tpu.memory_space<vmem>>, vector<1x1x16x32xbf16>
    %36 = vector.shape_cast %35 : vector<1x1x16x32xbf16> to vector<16x32xbf16>
    %37 = arith.extf %36 : vector<16x32xbf16> to vector<16x32xf32>
    %38 = arith.addf %34, %37 : vector<16x32xf32>
    %c0_29 = arith.constant 0 : index
    %c41 = arith.constant 41 : index
    %c0_30 = arith.constant 0 : index
    %c0_31 = arith.constant 0 : index
    %39 = vector.load %arg2[%c0_29, %c41, %c0_30, %c0_31] : memref<1x184x16x32xbf16, #tpu.memory_space<vmem>>, vector<1x1x16x32xbf16>
    %40 = vector.shape_cast %39 : vector<1x1x16x32xbf16> to vector<16x32xbf16>
    %41 = arith.extf %40 : vector<16x32xbf16> to vector<16x32xf32>
    %42 = arith.addf %38, %41 : vector<16x32xf32>
    %c0_32 = arith.constant 0 : index
    %c45 = arith.constant 45 : index
    %c0_33 = arith.constant 0 : index
    %c0_34 = arith.constant 0 : index
    %43 = vector.load %arg2[%c0_32, %c45, %c0_33, %c0_34] : memref<1x184x16x32xbf16, #tpu.memory_space<vmem>>, vector<1x1x16x32xbf16>
    %44 = vector.shape_cast %43 : vector<1x1x16x32xbf16> to vector<16x32xbf16>
    %45 = arith.extf %44 : vector<16x32xbf16> to vector<16x32xf32>
    %46 = arith.addf %42, %45 : vector<16x32xf32>
    %c0_35 = arith.constant 0 : index
    %c49 = arith.constant 49 : index
    %c0_36 = arith.constant 0 : index
    %c0_37 = arith.constant 0 : index
    %47 = vector.load %arg2[%c0_35, %c49, %c0_36, %c0_37] : memref<1x184x16x32xbf16, #tpu.memory_space<vmem>>, vector<1x1x16x32xbf16>
    %48 = vector.shape_cast %47 : vector<1x1x16x32xbf16> to vector<16x32xbf16>
    %49 = arith.extf %48 : vector<16x32xbf16> to vector<16x32xf32>
    %50 = arith.addf %46, %49 : vector<16x32xf32>
    %c0_38 = arith.constant 0 : index
    %c53 = arith.constant 53 : index
    %c0_39 = arith.constant 0 : index
    %c0_40 = arith.constant 0 : index
    %51 = vector.load %arg2[%c0_38, %c53, %c0_39, %c0_40] : memref<1x184x16x32xbf16, #tpu.memory_space<vmem>>, vector<1x1x16x32xbf16>
    %52 = vector.shape_cast %51 : vector<1x1x16x32xbf16> to vector<16x32xbf16>
    %53 = arith.extf %52 : vector<16x32xbf16> to vector<16x32xf32>
    %54 = arith.addf %50, %53 : vector<16x32xf32>
    %c0_41 = arith.constant 0 : index
    %c57 = arith.constant 57 : index
    %c0_42 = arith.constant 0 : index
    %c0_43 = arith.constant 0 : index
    %55 = vector.load %arg2[%c0_41, %c57, %c0_42, %c0_43] : memref<1x184x16x32xbf16, #tpu.memory_space<vmem>>, vector<1x1x16x32xbf16>
    %56 = vector.shape_cast %55 : vector<1x1x16x32xbf16> to vector<16x32xbf16>
    %57 = arith.extf %56 : vector<16x32xbf16> to vector<16x32xf32>
    %58 = arith.addf %54, %57 : vector<16x32xf32>
    %c0_44 = arith.constant 0 : index
    %c61 = arith.constant 61 : index
    %c0_45 = arith.constant 0 : index
    %c0_46 = arith.constant 0 : index
    %59 = vector.load %arg2[%c0_44, %c61, %c0_45, %c0_46] : memref<1x184x16x32xbf16, #tpu.memory_space<vmem>>, vector<1x1x16x32xbf16>
    %60 = vector.shape_cast %59 : vector<1x1x16x32xbf16> to vector<16x32xbf16>
    %61 = arith.extf %60 : vector<16x32xbf16> to vector<16x32xf32>
    %62 = arith.addf %58, %61 : vector<16x32xf32>
    %c0_47 = arith.constant 0 : index
    %c65 = arith.constant 65 : index
    %c0_48 = arith.constant 0 : index
    %c0_49 = arith.constant 0 : index
    %63 = vector.load %arg2[%c0_47, %c65, %c0_48, %c0_49] : memref<1x184x16x32xbf16, #tpu.memory_space<vmem>>, vector<1x1x16x32xbf16>
    %64 = vector.shape_cast %63 : vector<1x1x16x32xbf16> to vector<16x32xbf16>
    %65 = arith.extf %64 : vector<16x32xbf16> to vector<16x32xf32>
    %66 = arith.addf %62, %65 : vector<16x32xf32>
    %c0_50 = arith.constant 0 : index
    %c69 = arith.constant 69 : index
    %c0_51 = arith.constant 0 : index
    %c0_52 = arith.constant 0 : index
    %67 = vector.load %arg2[%c0_50, %c69, %c0_51, %c0_52] : memref<1x184x16x32xbf16, #tpu.memory_space<vmem>>, vector<1x1x16x32xbf16>
    %68 = vector.shape_cast %67 : vector<1x1x16x32xbf16> to vector<16x32xbf16>
    %69 = arith.extf %68 : vector<16x32xbf16> to vector<16x32xf32>
    %70 = arith.addf %66, %69 : vector<16x32xf32>
    %c0_53 = arith.constant 0 : index
    %c73 = arith.constant 73 : index
    %c0_54 = arith.constant 0 : index
    %c0_55 = arith.constant 0 : index
    %71 = vector.load %arg2[%c0_53, %c73, %c0_54, %c0_55] : memref<1x184x16x32xbf16, #tpu.memory_space<vmem>>, vector<1x1x16x32xbf16>
    %72 = vector.shape_cast %71 : vector<1x1x16x32xbf16> to vector<16x32xbf16>
    %73 = arith.extf %72 : vector<16x32xbf16> to vector<16x32xf32>
    %74 = arith.addf %70, %73 : vector<16x32xf32>
    %c0_56 = arith.constant 0 : index
    %c77 = arith.constant 77 : index
    %c0_57 = arith.constant 0 : index
    %c0_58 = arith.constant 0 : index
    %75 = vector.load %arg2[%c0_56, %c77, %c0_57, %c0_58] : memref<1x184x16x32xbf16, #tpu.memory_space<vmem>>, vector<1x1x16x32xbf16>
    %76 = vector.shape_cast %75 : vector<1x1x16x32xbf16> to vector<16x32xbf16>
    %77 = arith.extf %76 : vector<16x32xbf16> to vector<16x32xf32>
    %78 = arith.addf %74, %77 : vector<16x32xf32>
    %c0_59 = arith.constant 0 : index
    %c81 = arith.constant 81 : index
    %c0_60 = arith.constant 0 : index
    %c0_61 = arith.constant 0 : index
    %79 = vector.load %arg2[%c0_59, %c81, %c0_60, %c0_61] : memref<1x184x16x32xbf16, #tpu.memory_space<vmem>>, vector<1x1x16x32xbf16>
    %80 = vector.shape_cast %79 : vector<1x1x16x32xbf16> to vector<16x32xbf16>
    %81 = arith.extf %80 : vector<16x32xbf16> to vector<16x32xf32>
    %82 = arith.addf %78, %81 : vector<16x32xf32>
    %c0_62 = arith.constant 0 : index
    %c85 = arith.constant 85 : index
    %c0_63 = arith.constant 0 : index
    %c0_64 = arith.constant 0 : index
    %83 = vector.load %arg2[%c0_62, %c85, %c0_63, %c0_64] : memref<1x184x16x32xbf16, #tpu.memory_space<vmem>>, vector<1x1x16x32xbf16>
    %84 = vector.shape_cast %83 : vector<1x1x16x32xbf16> to vector<16x32xbf16>
    %85 = arith.extf %84 : vector<16x32xbf16> to vector<16x32xf32>
    %86 = arith.addf %82, %85 : vector<16x32xf32>
    %c0_65 = arith.constant 0 : index
    %c89 = arith.constant 89 : index
    %c0_66 = arith.constant 0 : index
    %c0_67 = arith.constant 0 : index
    %87 = vector.load %arg2[%c0_65, %c89, %c0_66, %c0_67] : memref<1x184x16x32xbf16, #tpu.memory_space<vmem>>, vector<1x1x16x32xbf16>
    %88 = vector.shape_cast %87 : vector<1x1x16x32xbf16> to vector<16x32xbf16>
    %89 = arith.extf %88 : vector<16x32xbf16> to vector<16x32xf32>
    %90 = arith.addf %86, %89 : vector<16x32xf32>
    %c0_68 = arith.constant 0 : index
    %c93 = arith.constant 93 : index
    %c0_69 = arith.constant 0 : index
    %c0_70 = arith.constant 0 : index
    %91 = vector.load %arg2[%c0_68, %c93, %c0_69, %c0_70] : memref<1x184x16x32xbf16, #tpu.memory_space<vmem>>, vector<1x1x16x32xbf16>
    %92 = vector.shape_cast %91 : vector<1x1x16x32xbf16> to vector<16x32xbf16>
    %93 = arith.extf %92 : vector<16x32xbf16> to vector<16x32xf32>
    %94 = arith.addf %90, %93 : vector<16x32xf32>
    %c0_71 = arith.constant 0 : index
    %c99 = arith.constant 99 : index
    %c0_72 = arith.constant 0 : index
    %c0_73 = arith.constant 0 : index
    %95 = vector.load %arg2[%c0_71, %c99, %c0_72, %c0_73] : memref<1x184x16x32xbf16, #tpu.memory_space<vmem>>, vector<1x1x16x32xbf16>
    %96 = vector.shape_cast %95 : vector<1x1x16x32xbf16> to vector<16x32xbf16>
    %97 = arith.extf %96 : vector<16x32xbf16> to vector<16x32xf32>
    %98 = arith.addf %94, %97 : vector<16x32xf32>
    %c0_74 = arith.constant 0 : index
    %c107 = arith.constant 107 : index
    %c0_75 = arith.constant 0 : index
    %c0_76 = arith.constant 0 : index
    %99 = vector.load %arg2[%c0_74, %c107, %c0_75, %c0_76] : memref<1x184x16x32xbf16, #tpu.memory_space<vmem>>, vector<1x1x16x32xbf16>
    %100 = vector.shape_cast %99 : vector<1x1x16x32xbf16> to vector<16x32xbf16>
    %101 = arith.extf %100 : vector<16x32xbf16> to vector<16x32xf32>
    %102 = arith.addf %98, %101 : vector<16x32xf32>
    %c0_77 = arith.constant 0 : index
    %c112 = arith.constant 112 : index
    %c0_78 = arith.constant 0 : index
    %c0_79 = arith.constant 0 : index
    %103 = vector.load %arg2[%c0_77, %c112, %c0_78, %c0_79] : memref<1x184x16x32xbf16, #tpu.memory_space<vmem>>, vector<1x1x16x32xbf16>
    %104 = vector.shape_cast %103 : vector<1x1x16x32xbf16> to vector<16x32xbf16>
    %105 = arith.extf %104 : vector<16x32xbf16> to vector<16x32xf32>
    %106 = arith.addf %102, %105 : vector<16x32xf32>
    %c0_80 = arith.constant 0 : index
    %c128 = arith.constant 128 : index
    %c0_81 = arith.constant 0 : index
    %c0_82 = arith.constant 0 : index
    %107 = vector.load %arg2[%c0_80, %c128, %c0_81, %c0_82] : memref<1x184x16x32xbf16, #tpu.memory_space<vmem>>, vector<1x1x16x32xbf16>
    %108 = vector.shape_cast %107 : vector<1x1x16x32xbf16> to vector<16x32xbf16>
    %109 = arith.extf %108 : vector<16x32xbf16> to vector<16x32xf32>
    %110 = arith.addf %106, %109 : vector<16x32xf32>
    %c0_83 = arith.constant 0 : index
    %c144 = arith.constant 144 : index
    %c0_84 = arith.constant 0 : index
    %c0_85 = arith.constant 0 : index
    %111 = vector.load %arg2[%c0_83, %c144, %c0_84, %c0_85] : memref<1x184x16x32xbf16, #tpu.memory_space<vmem>>, vector<1x1x16x32xbf16>
    %112 = vector.shape_cast %111 : vector<1x1x16x32xbf16> to vector<16x32xbf16>
    %113 = arith.extf %112 : vector<16x32xbf16> to vector<16x32xf32>
    %114 = arith.addf %110, %113 : vector<16x32xf32>
    %c0_86 = arith.constant 0 : index
    %c161 = arith.constant 161 : index
    %c0_87 = arith.constant 0 : index
    %c0_88 = arith.constant 0 : index
    %115 = vector.load %arg2[%c0_86, %c161, %c0_87, %c0_88] : memref<1x184x16x32xbf16, #tpu.memory_space<vmem>>, vector<1x1x16x32xbf16>
    %116 = vector.shape_cast %115 : vector<1x1x16x32xbf16> to vector<16x32xbf16>
    %117 = arith.extf %116 : vector<16x32xbf16> to vector<16x32xf32>
    %118 = arith.addf %114, %117 : vector<16x32xf32>
    %c0_89 = arith.constant 0 : index
    %c170 = arith.constant 170 : index
    %c0_90 = arith.constant 0 : index
    %c0_91 = arith.constant 0 : index
    %119 = vector.load %arg2[%c0_89, %c170, %c0_90, %c0_91] : memref<1x184x16x32xbf16, #tpu.memory_space<vmem>>, vector<1x1x16x32xbf16>
    %120 = vector.shape_cast %119 : vector<1x1x16x32xbf16> to vector<16x32xbf16>
    %121 = arith.extf %120 : vector<16x32xbf16> to vector<16x32xf32>
    %122 = arith.addf %118, %121 : vector<16x32xf32>
    %c0_92 = arith.constant 0 : index
    %c2 = arith.constant 2 : index
    %c0_93 = arith.constant 0 : index
    %c0_94 = arith.constant 0 : index
    %123 = vector.load %arg2[%c0_92, %c2, %c0_93, %c0_94] : memref<1x184x16x32xbf16, #tpu.memory_space<vmem>>, vector<1x1x16x32xbf16>
    %124 = vector.shape_cast %123 : vector<1x1x16x32xbf16> to vector<16x32xbf16>
    %125 = arith.extf %124 : vector<16x32xbf16> to vector<16x32xf32>
    %c0_95 = arith.constant 0 : index
    %c6 = arith.constant 6 : index
    %c0_96 = arith.constant 0 : index
    %c0_97 = arith.constant 0 : index
    %126 = vector.load %arg2[%c0_95, %c6, %c0_96, %c0_97] : memref<1x184x16x32xbf16, #tpu.memory_space<vmem>>, vector<1x1x16x32xbf16>
    %127 = vector.shape_cast %126 : vector<1x1x16x32xbf16> to vector<16x32xbf16>
    %128 = arith.extf %127 : vector<16x32xbf16> to vector<16x32xf32>
    %129 = arith.addf %125, %128 : vector<16x32xf32>
    %c0_98 = arith.constant 0 : index
    %c10 = arith.constant 10 : index
    %c0_99 = arith.constant 0 : index
    %c0_100 = arith.constant 0 : index
    %130 = vector.load %arg2[%c0_98, %c10, %c0_99, %c0_100] : memref<1x184x16x32xbf16, #tpu.memory_space<vmem>>, vector<1x1x16x32xbf16>
    %131 = vector.shape_cast %130 : vector<1x1x16x32xbf16> to vector<16x32xbf16>
    %132 = arith.extf %131 : vector<16x32xbf16> to vector<16x32xf32>
    %133 = arith.addf %129, %132 : vector<16x32xf32>
    %c0_101 = arith.constant 0 : index
    %c14 = arith.constant 14 : index
    %c0_102 = arith.constant 0 : index
    %c0_103 = arith.constant 0 : index
    %134 = vector.load %arg2[%c0_101, %c14, %c0_102, %c0_103] : memref<1x184x16x32xbf16, #tpu.memory_space<vmem>>, vector<1x1x16x32xbf16>
    %135 = vector.shape_cast %134 : vector<1x1x16x32xbf16> to vector<16x32xbf16>
    %136 = arith.extf %135 : vector<16x32xbf16> to vector<16x32xf32>
    %137 = arith.addf %133, %136 : vector<16x32xf32>
    %c0_104 = arith.constant 0 : index
    %c18 = arith.constant 18 : index
    %c0_105 = arith.constant 0 : index
    %c0_106 = arith.constant 0 : index
    %138 = vector.load %arg2[%c0_104, %c18, %c0_105, %c0_106] : memref<1x184x16x32xbf16, #tpu.memory_space<vmem>>, vector<1x1x16x32xbf16>
    %139 = vector.shape_cast %138 : vector<1x1x16x32xbf16> to vector<16x32xbf16>
    %140 = arith.extf %139 : vector<16x32xbf16> to vector<16x32xf32>
    %141 = arith.addf %137, %140 : vector<16x32xf32>
    %c0_107 = arith.constant 0 : index
    %c22 = arith.constant 22 : index
    %c0_108 = arith.constant 0 : index
    %c0_109 = arith.constant 0 : index
    %142 = vector.load %arg2[%c0_107, %c22, %c0_108, %c0_109] : memref<1x184x16x32xbf16, #tpu.memory_space<vmem>>, vector<1x1x16x32xbf16>
    %143 = vector.shape_cast %142 : vector<1x1x16x32xbf16> to vector<16x32xbf16>
    %144 = arith.extf %143 : vector<16x32xbf16> to vector<16x32xf32>
    %145 = arith.addf %141, %144 : vector<16x32xf32>
    %c0_110 = arith.constant 0 : index
    %c26 = arith.constant 26 : index
    %c0_111 = arith.constant 0 : index
    %c0_112 = arith.constant 0 : index
    %146 = vector.load %arg2[%c0_110, %c26, %c0_111, %c0_112] : memref<1x184x16x32xbf16, #tpu.memory_space<vmem>>, vector<1x1x16x32xbf16>
    %147 = vector.shape_cast %146 : vector<1x1x16x32xbf16> to vector<16x32xbf16>
    %148 = arith.extf %147 : vector<16x32xbf16> to vector<16x32xf32>
    %149 = arith.addf %145, %148 : vector<16x32xf32>
    %c0_113 = arith.constant 0 : index
    %c30 = arith.constant 30 : index
    %c0_114 = arith.constant 0 : index
    %c0_115 = arith.constant 0 : index
    %150 = vector.load %arg2[%c0_113, %c30, %c0_114, %c0_115] : memref<1x184x16x32xbf16, #tpu.memory_space<vmem>>, vector<1x1x16x32xbf16>
    %151 = vector.shape_cast %150 : vector<1x1x16x32xbf16> to vector<16x32xbf16>
    %152 = arith.extf %151 : vector<16x32xbf16> to vector<16x32xf32>
    %153 = arith.addf %149, %152 : vector<16x32xf32>
    %c0_116 = arith.constant 0 : index
    %c34 = arith.constant 34 : index
    %c0_117 = arith.constant 0 : index
    %c0_118 = arith.constant 0 : index
    %154 = vector.load %arg2[%c0_116, %c34, %c0_117, %c0_118] : memref<1x184x16x32xbf16, #tpu.memory_space<vmem>>, vector<1x1x16x32xbf16>
    %155 = vector.shape_cast %154 : vector<1x1x16x32xbf16> to vector<16x32xbf16>
    %156 = arith.extf %155 : vector<16x32xbf16> to vector<16x32xf32>
    %157 = arith.addf %153, %156 : vector<16x32xf32>
    %c0_119 = arith.constant 0 : index
    %c38 = arith.constant 38 : index
    %c0_120 = arith.constant 0 : index
    %c0_121 = arith.constant 0 : index
    %158 = vector.load %arg2[%c0_119, %c38, %c0_120, %c0_121] : memref<1x184x16x32xbf16, #tpu.memory_space<vmem>>, vector<1x1x16x32xbf16>
    %159 = vector.shape_cast %158 : vector<1x1x16x32xbf16> to vector<16x32xbf16>
    %160 = arith.extf %159 : vector<16x32xbf16> to vector<16x32xf32>
    %161 = arith.addf %157, %160 : vector<16x32xf32>
    %c0_122 = arith.constant 0 : index
    %c42 = arith.constant 42 : index
    %c0_123 = arith.constant 0 : index
    %c0_124 = arith.constant 0 : index
    %162 = vector.load %arg2[%c0_122, %c42, %c0_123, %c0_124] : memref<1x184x16x32xbf16, #tpu.memory_space<vmem>>, vector<1x1x16x32xbf16>
    %163 = vector.shape_cast %162 : vector<1x1x16x32xbf16> to vector<16x32xbf16>
    %164 = arith.extf %163 : vector<16x32xbf16> to vector<16x32xf32>
    %165 = arith.addf %161, %164 : vector<16x32xf32>
    %c0_125 = arith.constant 0 : index
    %c46 = arith.constant 46 : index
    %c0_126 = arith.constant 0 : index
    %c0_127 = arith.constant 0 : index
    %166 = vector.load %arg2[%c0_125, %c46, %c0_126, %c0_127] : memref<1x184x16x32xbf16, #tpu.memory_space<vmem>>, vector<1x1x16x32xbf16>
    %167 = vector.shape_cast %166 : vector<1x1x16x32xbf16> to vector<16x32xbf16>
    %168 = arith.extf %167 : vector<16x32xbf16> to vector<16x32xf32>
    %169 = arith.addf %165, %168 : vector<16x32xf32>
    %c0_128 = arith.constant 0 : index
    %c50 = arith.constant 50 : index
    %c0_129 = arith.constant 0 : index
    %c0_130 = arith.constant 0 : index
    %170 = vector.load %arg2[%c0_128, %c50, %c0_129, %c0_130] : memref<1x184x16x32xbf16, #tpu.memory_space<vmem>>, vector<1x1x16x32xbf16>
    %171 = vector.shape_cast %170 : vector<1x1x16x32xbf16> to vector<16x32xbf16>
    %172 = arith.extf %171 : vector<16x32xbf16> to vector<16x32xf32>
    %173 = arith.addf %169, %172 : vector<16x32xf32>
    %c0_131 = arith.constant 0 : index
    %c54 = arith.constant 54 : index
    %c0_132 = arith.constant 0 : index
    %c0_133 = arith.constant 0 : index
    %174 = vector.load %arg2[%c0_131, %c54, %c0_132, %c0_133] : memref<1x184x16x32xbf16, #tpu.memory_space<vmem>>, vector<1x1x16x32xbf16>
    %175 = vector.shape_cast %174 : vector<1x1x16x32xbf16> to vector<16x32xbf16>
    %176 = arith.extf %175 : vector<16x32xbf16> to vector<16x32xf32>
    %177 = arith.addf %173, %176 : vector<16x32xf32>
    %c0_134 = arith.constant 0 : index
    %c58 = arith.constant 58 : index
    %c0_135 = arith.constant 0 : index
    %c0_136 = arith.constant 0 : index
    %178 = vector.load %arg2[%c0_134, %c58, %c0_135, %c0_136] : memref<1x184x16x32xbf16, #tpu.memory_space<vmem>>, vector<1x1x16x32xbf16>
    %179 = vector.shape_cast %178 : vector<1x1x16x32xbf16> to vector<16x32xbf16>
    %180 = arith.extf %179 : vector<16x32xbf16> to vector<16x32xf32>
    %181 = arith.addf %177, %180 : vector<16x32xf32>
    %c0_137 = arith.constant 0 : index
    %c62 = arith.constant 62 : index
    %c0_138 = arith.constant 0 : index
    %c0_139 = arith.constant 0 : index
    %182 = vector.load %arg2[%c0_137, %c62, %c0_138, %c0_139] : memref<1x184x16x32xbf16, #tpu.memory_space<vmem>>, vector<1x1x16x32xbf16>
    %183 = vector.shape_cast %182 : vector<1x1x16x32xbf16> to vector<16x32xbf16>
    %184 = arith.extf %183 : vector<16x32xbf16> to vector<16x32xf32>
    %185 = arith.addf %181, %184 : vector<16x32xf32>
    %c0_140 = arith.constant 0 : index
    %c66 = arith.constant 66 : index
    %c0_141 = arith.constant 0 : index
    %c0_142 = arith.constant 0 : index
    %186 = vector.load %arg2[%c0_140, %c66, %c0_141, %c0_142] : memref<1x184x16x32xbf16, #tpu.memory_space<vmem>>, vector<1x1x16x32xbf16>
    %187 = vector.shape_cast %186 : vector<1x1x16x32xbf16> to vector<16x32xbf16>
    %188 = arith.extf %187 : vector<16x32xbf16> to vector<16x32xf32>
    %189 = arith.addf %185, %188 : vector<16x32xf32>
    %c0_143 = arith.constant 0 : index
    %c70 = arith.constant 70 : index
    %c0_144 = arith.constant 0 : index
    %c0_145 = arith.constant 0 : index
    %190 = vector.load %arg2[%c0_143, %c70, %c0_144, %c0_145] : memref<1x184x16x32xbf16, #tpu.memory_space<vmem>>, vector<1x1x16x32xbf16>
    %191 = vector.shape_cast %190 : vector<1x1x16x32xbf16> to vector<16x32xbf16>
    %192 = arith.extf %191 : vector<16x32xbf16> to vector<16x32xf32>
    %193 = arith.addf %189, %192 : vector<16x32xf32>
    %c0_146 = arith.constant 0 : index
    %c74 = arith.constant 74 : index
    %c0_147 = arith.constant 0 : index
    %c0_148 = arith.constant 0 : index
    %194 = vector.load %arg2[%c0_146, %c74, %c0_147, %c0_148] : memref<1x184x16x32xbf16, #tpu.memory_space<vmem>>, vector<1x1x16x32xbf16>
    %195 = vector.shape_cast %194 : vector<1x1x16x32xbf16> to vector<16x32xbf16>
    %196 = arith.extf %195 : vector<16x32xbf16> to vector<16x32xf32>
    %197 = arith.addf %193, %196 : vector<16x32xf32>
    %c0_149 = arith.constant 0 : index
    %c78 = arith.constant 78 : index
    %c0_150 = arith.constant 0 : index
    %c0_151 = arith.constant 0 : index
    %198 = vector.load %arg2[%c0_149, %c78, %c0_150, %c0_151] : memref<1x184x16x32xbf16, #tpu.memory_space<vmem>>, vector<1x1x16x32xbf16>
    %199 = vector.shape_cast %198 : vector<1x1x16x32xbf16> to vector<16x32xbf16>
    %200 = arith.extf %199 : vector<16x32xbf16> to vector<16x32xf32>
    %201 = arith.addf %197, %200 : vector<16x32xf32>
    %c0_152 = arith.constant 0 : index
    %c82 = arith.constant 82 : index
    %c0_153 = arith.constant 0 : index
    %c0_154 = arith.constant 0 : index
    %202 = vector.load %arg2[%c0_152, %c82, %c0_153, %c0_154] : memref<1x184x16x32xbf16, #tpu.memory_space<vmem>>, vector<1x1x16x32xbf16>
    %203 = vector.shape_cast %202 : vector<1x1x16x32xbf16> to vector<16x32xbf16>
    %204 = arith.extf %203 : vector<16x32xbf16> to vector<16x32xf32>
    %205 = arith.addf %201, %204 : vector<16x32xf32>
    %c0_155 = arith.constant 0 : index
    %c86 = arith.constant 86 : index
    %c0_156 = arith.constant 0 : index
    %c0_157 = arith.constant 0 : index
    %206 = vector.load %arg2[%c0_155, %c86, %c0_156, %c0_157] : memref<1x184x16x32xbf16, #tpu.memory_space<vmem>>, vector<1x1x16x32xbf16>
    %207 = vector.shape_cast %206 : vector<1x1x16x32xbf16> to vector<16x32xbf16>
    %208 = arith.extf %207 : vector<16x32xbf16> to vector<16x32xf32>
    %209 = arith.addf %205, %208 : vector<16x32xf32>
    %c0_158 = arith.constant 0 : index
    %c90 = arith.constant 90 : index
    %c0_159 = arith.constant 0 : index
    %c0_160 = arith.constant 0 : index
    %210 = vector.load %arg2[%c0_158, %c90, %c0_159, %c0_160] : memref<1x184x16x32xbf16, #tpu.memory_space<vmem>>, vector<1x1x16x32xbf16>
    %211 = vector.shape_cast %210 : vector<1x1x16x32xbf16> to vector<16x32xbf16>
    %212 = arith.extf %211 : vector<16x32xbf16> to vector<16x32xf32>
    %213 = arith.addf %209, %212 : vector<16x32xf32>
    %c0_161 = arith.constant 0 : index
    %c95 = arith.constant 95 : index
    %c0_162 = arith.constant 0 : index
    %c0_163 = arith.constant 0 : index
    %214 = vector.load %arg2[%c0_161, %c95, %c0_162, %c0_163] : memref<1x184x16x32xbf16, #tpu.memory_space<vmem>>, vector<1x1x16x32xbf16>
    %215 = vector.shape_cast %214 : vector<1x1x16x32xbf16> to vector<16x32xbf16>
    %216 = arith.extf %215 : vector<16x32xbf16> to vector<16x32xf32>
    %217 = arith.addf %213, %216 : vector<16x32xf32>
    %c0_164 = arith.constant 0 : index
    %c100 = arith.constant 100 : index
    %c0_165 = arith.constant 0 : index
    %c0_166 = arith.constant 0 : index
    %218 = vector.load %arg2[%c0_164, %c100, %c0_165, %c0_166] : memref<1x184x16x32xbf16, #tpu.memory_space<vmem>>, vector<1x1x16x32xbf16>
    %219 = vector.shape_cast %218 : vector<1x1x16x32xbf16> to vector<16x32xbf16>
    %220 = arith.extf %219 : vector<16x32xbf16> to vector<16x32xf32>
    %221 = arith.addf %217, %220 : vector<16x32xf32>
    %c0_167 = arith.constant 0 : index
    %c108 = arith.constant 108 : index
    %c0_168 = arith.constant 0 : index
    %c0_169 = arith.constant 0 : index
    %222 = vector.load %arg2[%c0_167, %c108, %c0_168, %c0_169] : memref<1x184x16x32xbf16, #tpu.memory_space<vmem>>, vector<1x1x16x32xbf16>
    %223 = vector.shape_cast %222 : vector<1x1x16x32xbf16> to vector<16x32xbf16>
    %224 = arith.extf %223 : vector<16x32xbf16> to vector<16x32xf32>
    %225 = arith.addf %221, %224 : vector<16x32xf32>
    %c0_170 = arith.constant 0 : index
    %c121 = arith.constant 121 : index
    %c0_171 = arith.constant 0 : index
    %c0_172 = arith.constant 0 : index
    %226 = vector.load %arg2[%c0_170, %c121, %c0_171, %c0_172] : memref<1x184x16x32xbf16, #tpu.memory_space<vmem>>, vector<1x1x16x32xbf16>
    %227 = vector.shape_cast %226 : vector<1x1x16x32xbf16> to vector<16x32xbf16>
    %228 = arith.extf %227 : vector<16x32xbf16> to vector<16x32xf32>
    %229 = arith.addf %225, %228 : vector<16x32xf32>
    %c0_173 = arith.constant 0 : index
    %c130 = arith.constant 130 : index
    %c0_174 = arith.constant 0 : index
    %c0_175 = arith.constant 0 : index
    %230 = vector.load %arg2[%c0_173, %c130, %c0_174, %c0_175] : memref<1x184x16x32xbf16, #tpu.memory_space<vmem>>, vector<1x1x16x32xbf16>
    %231 = vector.shape_cast %230 : vector<1x1x16x32xbf16> to vector<16x32xbf16>
    %232 = arith.extf %231 : vector<16x32xbf16> to vector<16x32xf32>
    %233 = arith.addf %229, %232 : vector<16x32xf32>
    %c0_176 = arith.constant 0 : index
    %c153 = arith.constant 153 : index
    %c0_177 = arith.constant 0 : index
    %c0_178 = arith.constant 0 : index
    %234 = vector.load %arg2[%c0_176, %c153, %c0_177, %c0_178] : memref<1x184x16x32xbf16, #tpu.memory_space<vmem>>, vector<1x1x16x32xbf16>
    %235 = vector.shape_cast %234 : vector<1x1x16x32xbf16> to vector<16x32xbf16>
    %236 = arith.extf %235 : vector<16x32xbf16> to vector<16x32xf32>
    %237 = arith.addf %233, %236 : vector<16x32xf32>
    %c0_179 = arith.constant 0 : index
    %c163 = arith.constant 163 : index
    %c0_180 = arith.constant 0 : index
    %c0_181 = arith.constant 0 : index
    %238 = vector.load %arg2[%c0_179, %c163, %c0_180, %c0_181] : memref<1x184x16x32xbf16, #tpu.memory_space<vmem>>, vector<1x1x16x32xbf16>
    %239 = vector.shape_cast %238 : vector<1x1x16x32xbf16> to vector<16x32xbf16>
    %240 = arith.extf %239 : vector<16x32xbf16> to vector<16x32xf32>
    %241 = arith.addf %237, %240 : vector<16x32xf32>
    %c0_182 = arith.constant 0 : index
    %c180 = arith.constant 180 : index
    %c0_183 = arith.constant 0 : index
    %c0_184 = arith.constant 0 : index
    %242 = vector.load %arg2[%c0_182, %c180, %c0_183, %c0_184] : memref<1x184x16x32xbf16, #tpu.memory_space<vmem>>, vector<1x1x16x32xbf16>
    %243 = vector.shape_cast %242 : vector<1x1x16x32xbf16> to vector<16x32xbf16>
    %244 = arith.extf %243 : vector<16x32xbf16> to vector<16x32xf32>
    %245 = arith.addf %241, %244 : vector<16x32xf32>
    %c0_185 = arith.constant 0 : index
    %c3 = arith.constant 3 : index
    %c0_186 = arith.constant 0 : index
    %c0_187 = arith.constant 0 : index
    %246 = vector.load %arg2[%c0_185, %c3, %c0_186, %c0_187] : memref<1x184x16x32xbf16, #tpu.memory_space<vmem>>, vector<1x1x16x32xbf16>
    %247 = vector.shape_cast %246 : vector<1x1x16x32xbf16> to vector<16x32xbf16>
    %248 = arith.extf %247 : vector<16x32xbf16> to vector<16x32xf32>
    %c0_188 = arith.constant 0 : index
    %c7 = arith.constant 7 : index
    %c0_189 = arith.constant 0 : index
    %c0_190 = arith.constant 0 : index
    %249 = vector.load %arg2[%c0_188, %c7, %c0_189, %c0_190] : memref<1x184x16x32xbf16, #tpu.memory_space<vmem>>, vector<1x1x16x32xbf16>
    %250 = vector.shape_cast %249 : vector<1x1x16x32xbf16> to vector<16x32xbf16>
    %251 = arith.extf %250 : vector<16x32xbf16> to vector<16x32xf32>
    %252 = arith.addf %248, %251 : vector<16x32xf32>
    %c0_191 = arith.constant 0 : index
    %c11 = arith.constant 11 : index
    %c0_192 = arith.constant 0 : index
    %c0_193 = arith.constant 0 : index
    %253 = vector.load %arg2[%c0_191, %c11, %c0_192, %c0_193] : memref<1x184x16x32xbf16, #tpu.memory_space<vmem>>, vector<1x1x16x32xbf16>
    %254 = vector.shape_cast %253 : vector<1x1x16x32xbf16> to vector<16x32xbf16>
    %255 = arith.extf %254 : vector<16x32xbf16> to vector<16x32xf32>
    %256 = arith.addf %252, %255 : vector<16x32xf32>
    %c0_194 = arith.constant 0 : index
    %c15 = arith.constant 15 : index
    %c0_195 = arith.constant 0 : index
    %c0_196 = arith.constant 0 : index
    %257 = vector.load %arg2[%c0_194, %c15, %c0_195, %c0_196] : memref<1x184x16x32xbf16, #tpu.memory_space<vmem>>, vector<1x1x16x32xbf16>
    %258 = vector.shape_cast %257 : vector<1x1x16x32xbf16> to vector<16x32xbf16>
    %259 = arith.extf %258 : vector<16x32xbf16> to vector<16x32xf32>
    %260 = arith.addf %256, %259 : vector<16x32xf32>
    %c0_197 = arith.constant 0 : index
    %c19 = arith.constant 19 : index
    %c0_198 = arith.constant 0 : index
    %c0_199 = arith.constant 0 : index
    %261 = vector.load %arg2[%c0_197, %c19, %c0_198, %c0_199] : memref<1x184x16x32xbf16, #tpu.memory_space<vmem>>, vector<1x1x16x32xbf16>
    %262 = vector.shape_cast %261 : vector<1x1x16x32xbf16> to vector<16x32xbf16>
    %263 = arith.extf %262 : vector<16x32xbf16> to vector<16x32xf32>
    %264 = arith.addf %260, %263 : vector<16x32xf32>
    %c0_200 = arith.constant 0 : index
    %c23 = arith.constant 23 : index
    %c0_201 = arith.constant 0 : index
    %c0_202 = arith.constant 0 : index
    %265 = vector.load %arg2[%c0_200, %c23, %c0_201, %c0_202] : memref<1x184x16x32xbf16, #tpu.memory_space<vmem>>, vector<1x1x16x32xbf16>
    %266 = vector.shape_cast %265 : vector<1x1x16x32xbf16> to vector<16x32xbf16>
    %267 = arith.extf %266 : vector<16x32xbf16> to vector<16x32xf32>
    %268 = arith.addf %264, %267 : vector<16x32xf32>
    %c0_203 = arith.constant 0 : index
    %c27 = arith.constant 27 : index
    %c0_204 = arith.constant 0 : index
    %c0_205 = arith.constant 0 : index
    %269 = vector.load %arg2[%c0_203, %c27, %c0_204, %c0_205] : memref<1x184x16x32xbf16, #tpu.memory_space<vmem>>, vector<1x1x16x32xbf16>
    %270 = vector.shape_cast %269 : vector<1x1x16x32xbf16> to vector<16x32xbf16>
    %271 = arith.extf %270 : vector<16x32xbf16> to vector<16x32xf32>
    %272 = arith.addf %268, %271 : vector<16x32xf32>
    %c0_206 = arith.constant 0 : index
    %c31 = arith.constant 31 : index
    %c0_207 = arith.constant 0 : index
    %c0_208 = arith.constant 0 : index
    %273 = vector.load %arg2[%c0_206, %c31, %c0_207, %c0_208] : memref<1x184x16x32xbf16, #tpu.memory_space<vmem>>, vector<1x1x16x32xbf16>
    %274 = vector.shape_cast %273 : vector<1x1x16x32xbf16> to vector<16x32xbf16>
    %275 = arith.extf %274 : vector<16x32xbf16> to vector<16x32xf32>
    %276 = arith.addf %272, %275 : vector<16x32xf32>
    %c0_209 = arith.constant 0 : index
    %c35 = arith.constant 35 : index
    %c0_210 = arith.constant 0 : index
    %c0_211 = arith.constant 0 : index
    %277 = vector.load %arg2[%c0_209, %c35, %c0_210, %c0_211] : memref<1x184x16x32xbf16, #tpu.memory_space<vmem>>, vector<1x1x16x32xbf16>
    %278 = vector.shape_cast %277 : vector<1x1x16x32xbf16> to vector<16x32xbf16>
    %279 = arith.extf %278 : vector<16x32xbf16> to vector<16x32xf32>
    %280 = arith.addf %276, %279 : vector<16x32xf32>
    %c0_212 = arith.constant 0 : index
    %c39 = arith.constant 39 : index
    %c0_213 = arith.constant 0 : index
    %c0_214 = arith.constant 0 : index
    %281 = vector.load %arg2[%c0_212, %c39, %c0_213, %c0_214] : memref<1x184x16x32xbf16, #tpu.memory_space<vmem>>, vector<1x1x16x32xbf16>
    %282 = vector.shape_cast %281 : vector<1x1x16x32xbf16> to vector<16x32xbf16>
    %283 = arith.extf %282 : vector<16x32xbf16> to vector<16x32xf32>
    %284 = arith.addf %280, %283 : vector<16x32xf32>
    %c0_215 = arith.constant 0 : index
    %c43 = arith.constant 43 : index
    %c0_216 = arith.constant 0 : index
    %c0_217 = arith.constant 0 : index
    %285 = vector.load %arg2[%c0_215, %c43, %c0_216, %c0_217] : memref<1x184x16x32xbf16, #tpu.memory_space<vmem>>, vector<1x1x16x32xbf16>
    %286 = vector.shape_cast %285 : vector<1x1x16x32xbf16> to vector<16x32xbf16>
    %287 = arith.extf %286 : vector<16x32xbf16> to vector<16x32xf32>
    %288 = arith.addf %284, %287 : vector<16x32xf32>
    %c0_218 = arith.constant 0 : index
    %c47 = arith.constant 47 : index
    %c0_219 = arith.constant 0 : index
    %c0_220 = arith.constant 0 : index
    %289 = vector.load %arg2[%c0_218, %c47, %c0_219, %c0_220] : memref<1x184x16x32xbf16, #tpu.memory_space<vmem>>, vector<1x1x16x32xbf16>
    %290 = vector.shape_cast %289 : vector<1x1x16x32xbf16> to vector<16x32xbf16>
    %291 = arith.extf %290 : vector<16x32xbf16> to vector<16x32xf32>
    %292 = arith.addf %288, %291 : vector<16x32xf32>
    %c0_221 = arith.constant 0 : index
    %c51 = arith.constant 51 : index
    %c0_222 = arith.constant 0 : index
    %c0_223 = arith.constant 0 : index
    %293 = vector.load %arg2[%c0_221, %c51, %c0_222, %c0_223] : memref<1x184x16x32xbf16, #tpu.memory_space<vmem>>, vector<1x1x16x32xbf16>
    %294 = vector.shape_cast %293 : vector<1x1x16x32xbf16> to vector<16x32xbf16>
    %295 = arith.extf %294 : vector<16x32xbf16> to vector<16x32xf32>
    %296 = arith.addf %292, %295 : vector<16x32xf32>
    %c0_224 = arith.constant 0 : index
    %c55 = arith.constant 55 : index
    %c0_225 = arith.constant 0 : index
    %c0_226 = arith.constant 0 : index
    %297 = vector.load %arg2[%c0_224, %c55, %c0_225, %c0_226] : memref<1x184x16x32xbf16, #tpu.memory_space<vmem>>, vector<1x1x16x32xbf16>
    %298 = vector.shape_cast %297 : vector<1x1x16x32xbf16> to vector<16x32xbf16>
    %299 = arith.extf %298 : vector<16x32xbf16> to vector<16x32xf32>
    %300 = arith.addf %296, %299 : vector<16x32xf32>
    %c0_227 = arith.constant 0 : index
    %c59 = arith.constant 59 : index
    %c0_228 = arith.constant 0 : index
    %c0_229 = arith.constant 0 : index
    %301 = vector.load %arg2[%c0_227, %c59, %c0_228, %c0_229] : memref<1x184x16x32xbf16, #tpu.memory_space<vmem>>, vector<1x1x16x32xbf16>
    %302 = vector.shape_cast %301 : vector<1x1x16x32xbf16> to vector<16x32xbf16>
    %303 = arith.extf %302 : vector<16x32xbf16> to vector<16x32xf32>
    %304 = arith.addf %300, %303 : vector<16x32xf32>
    %c0_230 = arith.constant 0 : index
    %c63 = arith.constant 63 : index
    %c0_231 = arith.constant 0 : index
    %c0_232 = arith.constant 0 : index
    %305 = vector.load %arg2[%c0_230, %c63, %c0_231, %c0_232] : memref<1x184x16x32xbf16, #tpu.memory_space<vmem>>, vector<1x1x16x32xbf16>
    %306 = vector.shape_cast %305 : vector<1x1x16x32xbf16> to vector<16x32xbf16>
    %307 = arith.extf %306 : vector<16x32xbf16> to vector<16x32xf32>
    %308 = arith.addf %304, %307 : vector<16x32xf32>
    %c0_233 = arith.constant 0 : index
    %c67 = arith.constant 67 : index
    %c0_234 = arith.constant 0 : index
    %c0_235 = arith.constant 0 : index
    %309 = vector.load %arg2[%c0_233, %c67, %c0_234, %c0_235] : memref<1x184x16x32xbf16, #tpu.memory_space<vmem>>, vector<1x1x16x32xbf16>
    %310 = vector.shape_cast %309 : vector<1x1x16x32xbf16> to vector<16x32xbf16>
    %311 = arith.extf %310 : vector<16x32xbf16> to vector<16x32xf32>
    %312 = arith.addf %308, %311 : vector<16x32xf32>
    %c0_236 = arith.constant 0 : index
    %c71 = arith.constant 71 : index
    %c0_237 = arith.constant 0 : index
    %c0_238 = arith.constant 0 : index
    %313 = vector.load %arg2[%c0_236, %c71, %c0_237, %c0_238] : memref<1x184x16x32xbf16, #tpu.memory_space<vmem>>, vector<1x1x16x32xbf16>
    %314 = vector.shape_cast %313 : vector<1x1x16x32xbf16> to vector<16x32xbf16>
    %315 = arith.extf %314 : vector<16x32xbf16> to vector<16x32xf32>
    %316 = arith.addf %312, %315 : vector<16x32xf32>
    %c0_239 = arith.constant 0 : index
    %c75 = arith.constant 75 : index
    %c0_240 = arith.constant 0 : index
    %c0_241 = arith.constant 0 : index
    %317 = vector.load %arg2[%c0_239, %c75, %c0_240, %c0_241] : memref<1x184x16x32xbf16, #tpu.memory_space<vmem>>, vector<1x1x16x32xbf16>
    %318 = vector.shape_cast %317 : vector<1x1x16x32xbf16> to vector<16x32xbf16>
    %319 = arith.extf %318 : vector<16x32xbf16> to vector<16x32xf32>
    %320 = arith.addf %316, %319 : vector<16x32xf32>
    %c0_242 = arith.constant 0 : index
    %c79 = arith.constant 79 : index
    %c0_243 = arith.constant 0 : index
    %c0_244 = arith.constant 0 : index
    %321 = vector.load %arg2[%c0_242, %c79, %c0_243, %c0_244] : memref<1x184x16x32xbf16, #tpu.memory_space<vmem>>, vector<1x1x16x32xbf16>
    %322 = vector.shape_cast %321 : vector<1x1x16x32xbf16> to vector<16x32xbf16>
    %323 = arith.extf %322 : vector<16x32xbf16> to vector<16x32xf32>
    %324 = arith.addf %320, %323 : vector<16x32xf32>
    %c0_245 = arith.constant 0 : index
    %c83 = arith.constant 83 : index
    %c0_246 = arith.constant 0 : index
    %c0_247 = arith.constant 0 : index
    %325 = vector.load %arg2[%c0_245, %c83, %c0_246, %c0_247] : memref<1x184x16x32xbf16, #tpu.memory_space<vmem>>, vector<1x1x16x32xbf16>
    %326 = vector.shape_cast %325 : vector<1x1x16x32xbf16> to vector<16x32xbf16>
    %327 = arith.extf %326 : vector<16x32xbf16> to vector<16x32xf32>
    %328 = arith.addf %324, %327 : vector<16x32xf32>
    %c0_248 = arith.constant 0 : index
    %c87 = arith.constant 87 : index
    %c0_249 = arith.constant 0 : index
    %c0_250 = arith.constant 0 : index
    %329 = vector.load %arg2[%c0_248, %c87, %c0_249, %c0_250] : memref<1x184x16x32xbf16, #tpu.memory_space<vmem>>, vector<1x1x16x32xbf16>
    %330 = vector.shape_cast %329 : vector<1x1x16x32xbf16> to vector<16x32xbf16>
    %331 = arith.extf %330 : vector<16x32xbf16> to vector<16x32xf32>
    %332 = arith.addf %328, %331 : vector<16x32xf32>
    %c0_251 = arith.constant 0 : index
    %c91 = arith.constant 91 : index
    %c0_252 = arith.constant 0 : index
    %c0_253 = arith.constant 0 : index
    %333 = vector.load %arg2[%c0_251, %c91, %c0_252, %c0_253] : memref<1x184x16x32xbf16, #tpu.memory_space<vmem>>, vector<1x1x16x32xbf16>
    %334 = vector.shape_cast %333 : vector<1x1x16x32xbf16> to vector<16x32xbf16>
    %335 = arith.extf %334 : vector<16x32xbf16> to vector<16x32xf32>
    %336 = arith.addf %332, %335 : vector<16x32xf32>
    %c0_254 = arith.constant 0 : index
    %c96 = arith.constant 96 : index
    %c0_255 = arith.constant 0 : index
    %c0_256 = arith.constant 0 : index
    %337 = vector.load %arg2[%c0_254, %c96, %c0_255, %c0_256] : memref<1x184x16x32xbf16, #tpu.memory_space<vmem>>, vector<1x1x16x32xbf16>
    %338 = vector.shape_cast %337 : vector<1x1x16x32xbf16> to vector<16x32xbf16>
    %339 = arith.extf %338 : vector<16x32xbf16> to vector<16x32xf32>
    %340 = arith.addf %336, %339 : vector<16x32xf32>
    %c0_257 = arith.constant 0 : index
    %c104 = arith.constant 104 : index
    %c0_258 = arith.constant 0 : index
    %c0_259 = arith.constant 0 : index
    %341 = vector.load %arg2[%c0_257, %c104, %c0_258, %c0_259] : memref<1x184x16x32xbf16, #tpu.memory_space<vmem>>, vector<1x1x16x32xbf16>
    %342 = vector.shape_cast %341 : vector<1x1x16x32xbf16> to vector<16x32xbf16>
    %343 = arith.extf %342 : vector<16x32xbf16> to vector<16x32xf32>
    %344 = arith.addf %340, %343 : vector<16x32xf32>
    %c0_260 = arith.constant 0 : index
    %c109 = arith.constant 109 : index
    %c0_261 = arith.constant 0 : index
    %c0_262 = arith.constant 0 : index
    %345 = vector.load %arg2[%c0_260, %c109, %c0_261, %c0_262] : memref<1x184x16x32xbf16, #tpu.memory_space<vmem>>, vector<1x1x16x32xbf16>
    %346 = vector.shape_cast %345 : vector<1x1x16x32xbf16> to vector<16x32xbf16>
    %347 = arith.extf %346 : vector<16x32xbf16> to vector<16x32xf32>
    %348 = arith.addf %344, %347 : vector<16x32xf32>
    %c0_263 = arith.constant 0 : index
    %c122 = arith.constant 122 : index
    %c0_264 = arith.constant 0 : index
    %c0_265 = arith.constant 0 : index
    %349 = vector.load %arg2[%c0_263, %c122, %c0_264, %c0_265] : memref<1x184x16x32xbf16, #tpu.memory_space<vmem>>, vector<1x1x16x32xbf16>
    %350 = vector.shape_cast %349 : vector<1x1x16x32xbf16> to vector<16x32xbf16>
    %351 = arith.extf %350 : vector<16x32xbf16> to vector<16x32xf32>
    %352 = arith.addf %348, %351 : vector<16x32xf32>
    %c0_266 = arith.constant 0 : index
    %c133 = arith.constant 133 : index
    %c0_267 = arith.constant 0 : index
    %c0_268 = arith.constant 0 : index
    %353 = vector.load %arg2[%c0_266, %c133, %c0_267, %c0_268] : memref<1x184x16x32xbf16, #tpu.memory_space<vmem>>, vector<1x1x16x32xbf16>
    %354 = vector.shape_cast %353 : vector<1x1x16x32xbf16> to vector<16x32xbf16>
    %355 = arith.extf %354 : vector<16x32xbf16> to vector<16x32xf32>
    %356 = arith.addf %352, %355 : vector<16x32xf32>
    %c0_269 = arith.constant 0 : index
    %c156 = arith.constant 156 : index
    %c0_270 = arith.constant 0 : index
    %c0_271 = arith.constant 0 : index
    %357 = vector.load %arg2[%c0_269, %c156, %c0_270, %c0_271] : memref<1x184x16x32xbf16, #tpu.memory_space<vmem>>, vector<1x1x16x32xbf16>
    %358 = vector.shape_cast %357 : vector<1x1x16x32xbf16> to vector<16x32xbf16>
    %359 = arith.extf %358 : vector<16x32xbf16> to vector<16x32xf32>
    %360 = arith.addf %356, %359 : vector<16x32xf32>
    %c0_272 = arith.constant 0 : index
    %c165 = arith.constant 165 : index
    %c0_273 = arith.constant 0 : index
    %c0_274 = arith.constant 0 : index
    %361 = vector.load %arg2[%c0_272, %c165, %c0_273, %c0_274] : memref<1x184x16x32xbf16, #tpu.memory_space<vmem>>, vector<1x1x16x32xbf16>
    %362 = vector.shape_cast %361 : vector<1x1x16x32xbf16> to vector<16x32xbf16>
    %363 = arith.extf %362 : vector<16x32xbf16> to vector<16x32xf32>
    %364 = arith.addf %360, %363 : vector<16x32xf32>
    %c0_275 = arith.constant 0 : index
    %c181 = arith.constant 181 : index
    %c0_276 = arith.constant 0 : index
    %c0_277 = arith.constant 0 : index
    %365 = vector.load %arg2[%c0_275, %c181, %c0_276, %c0_277] : memref<1x184x16x32xbf16, #tpu.memory_space<vmem>>, vector<1x1x16x32xbf16>
    %366 = vector.shape_cast %365 : vector<1x1x16x32xbf16> to vector<16x32xbf16>
    %367 = arith.extf %366 : vector<16x32xbf16> to vector<16x32xf32>
    %368 = arith.addf %364, %367 : vector<16x32xf32>
    %c0_278 = arith.constant 0 : index
    %c4 = arith.constant 4 : index
    %c0_279 = arith.constant 0 : index
    %c0_280 = arith.constant 0 : index
    %369 = vector.load %arg2[%c0_278, %c4, %c0_279, %c0_280] : memref<1x184x16x32xbf16, #tpu.memory_space<vmem>>, vector<1x1x16x32xbf16>
    %370 = vector.shape_cast %369 : vector<1x1x16x32xbf16> to vector<16x32xbf16>
    %371 = arith.extf %370 : vector<16x32xbf16> to vector<16x32xf32>
    %c0_281 = arith.constant 0 : index
    %c8 = arith.constant 8 : index
    %c0_282 = arith.constant 0 : index
    %c0_283 = arith.constant 0 : index
    %372 = vector.load %arg2[%c0_281, %c8, %c0_282, %c0_283] : memref<1x184x16x32xbf16, #tpu.memory_space<vmem>>, vector<1x1x16x32xbf16>
    %373 = vector.shape_cast %372 : vector<1x1x16x32xbf16> to vector<16x32xbf16>
    %374 = arith.extf %373 : vector<16x32xbf16> to vector<16x32xf32>
    %375 = arith.addf %371, %374 : vector<16x32xf32>
    %c0_284 = arith.constant 0 : index
    %c12 = arith.constant 12 : index
    %c0_285 = arith.constant 0 : index
    %c0_286 = arith.constant 0 : index
    %376 = vector.load %arg2[%c0_284, %c12, %c0_285, %c0_286] : memref<1x184x16x32xbf16, #tpu.memory_space<vmem>>, vector<1x1x16x32xbf16>
    %377 = vector.shape_cast %376 : vector<1x1x16x32xbf16> to vector<16x32xbf16>
    %378 = arith.extf %377 : vector<16x32xbf16> to vector<16x32xf32>
    %379 = arith.addf %375, %378 : vector<16x32xf32>
    %c0_287 = arith.constant 0 : index
    %c16 = arith.constant 16 : index
    %c0_288 = arith.constant 0 : index
    %c0_289 = arith.constant 0 : index
    %380 = vector.load %arg2[%c0_287, %c16, %c0_288, %c0_289] : memref<1x184x16x32xbf16, #tpu.memory_space<vmem>>, vector<1x1x16x32xbf16>
    %381 = vector.shape_cast %380 : vector<1x1x16x32xbf16> to vector<16x32xbf16>
    %382 = arith.extf %381 : vector<16x32xbf16> to vector<16x32xf32>
    %383 = arith.addf %379, %382 : vector<16x32xf32>
    %c0_290 = arith.constant 0 : index
    %c20 = arith.constant 20 : index
    %c0_291 = arith.constant 0 : index
    %c0_292 = arith.constant 0 : index
    %384 = vector.load %arg2[%c0_290, %c20, %c0_291, %c0_292] : memref<1x184x16x32xbf16, #tpu.memory_space<vmem>>, vector<1x1x16x32xbf16>
    %385 = vector.shape_cast %384 : vector<1x1x16x32xbf16> to vector<16x32xbf16>
    %386 = arith.extf %385 : vector<16x32xbf16> to vector<16x32xf32>
    %387 = arith.addf %383, %386 : vector<16x32xf32>
    %c0_293 = arith.constant 0 : index
    %c24 = arith.constant 24 : index
    %c0_294 = arith.constant 0 : index
    %c0_295 = arith.constant 0 : index
    %388 = vector.load %arg2[%c0_293, %c24, %c0_294, %c0_295] : memref<1x184x16x32xbf16, #tpu.memory_space<vmem>>, vector<1x1x16x32xbf16>
    %389 = vector.shape_cast %388 : vector<1x1x16x32xbf16> to vector<16x32xbf16>
    %390 = arith.extf %389 : vector<16x32xbf16> to vector<16x32xf32>
    %391 = arith.addf %387, %390 : vector<16x32xf32>
    %c0_296 = arith.constant 0 : index
    %c28 = arith.constant 28 : index
    %c0_297 = arith.constant 0 : index
    %c0_298 = arith.constant 0 : index
    %392 = vector.load %arg2[%c0_296, %c28, %c0_297, %c0_298] : memref<1x184x16x32xbf16, #tpu.memory_space<vmem>>, vector<1x1x16x32xbf16>
    %393 = vector.shape_cast %392 : vector<1x1x16x32xbf16> to vector<16x32xbf16>
    %394 = arith.extf %393 : vector<16x32xbf16> to vector<16x32xf32>
    %395 = arith.addf %391, %394 : vector<16x32xf32>
    %c0_299 = arith.constant 0 : index
    %c32 = arith.constant 32 : index
    %c0_300 = arith.constant 0 : index
    %c0_301 = arith.constant 0 : index
    %396 = vector.load %arg2[%c0_299, %c32, %c0_300, %c0_301] : memref<1x184x16x32xbf16, #tpu.memory_space<vmem>>, vector<1x1x16x32xbf16>
    %397 = vector.shape_cast %396 : vector<1x1x16x32xbf16> to vector<16x32xbf16>
    %398 = arith.extf %397 : vector<16x32xbf16> to vector<16x32xf32>
    %399 = arith.addf %395, %398 : vector<16x32xf32>
    %c0_302 = arith.constant 0 : index
    %c36 = arith.constant 36 : index
    %c0_303 = arith.constant 0 : index
    %c0_304 = arith.constant 0 : index
    %400 = vector.load %arg2[%c0_302, %c36, %c0_303, %c0_304] : memref<1x184x16x32xbf16, #tpu.memory_space<vmem>>, vector<1x1x16x32xbf16>
    %401 = vector.shape_cast %400 : vector<1x1x16x32xbf16> to vector<16x32xbf16>
    %402 = arith.extf %401 : vector<16x32xbf16> to vector<16x32xf32>
    %403 = arith.addf %399, %402 : vector<16x32xf32>
    %c0_305 = arith.constant 0 : index
    %c40 = arith.constant 40 : index
    %c0_306 = arith.constant 0 : index
    %c0_307 = arith.constant 0 : index
    %404 = vector.load %arg2[%c0_305, %c40, %c0_306, %c0_307] : memref<1x184x16x32xbf16, #tpu.memory_space<vmem>>, vector<1x1x16x32xbf16>
    %405 = vector.shape_cast %404 : vector<1x1x16x32xbf16> to vector<16x32xbf16>
    %406 = arith.extf %405 : vector<16x32xbf16> to vector<16x32xf32>
    %407 = arith.addf %403, %406 : vector<16x32xf32>
    %c0_308 = arith.constant 0 : index
    %c44 = arith.constant 44 : index
    %c0_309 = arith.constant 0 : index
    %c0_310 = arith.constant 0 : index
    %408 = vector.load %arg2[%c0_308, %c44, %c0_309, %c0_310] : memref<1x184x16x32xbf16, #tpu.memory_space<vmem>>, vector<1x1x16x32xbf16>
    %409 = vector.shape_cast %408 : vector<1x1x16x32xbf16> to vector<16x32xbf16>
    %410 = arith.extf %409 : vector<16x32xbf16> to vector<16x32xf32>
    %411 = arith.addf %407, %410 : vector<16x32xf32>
    %c0_311 = arith.constant 0 : index
    %c48 = arith.constant 48 : index
    %c0_312 = arith.constant 0 : index
    %c0_313 = arith.constant 0 : index
    %412 = vector.load %arg2[%c0_311, %c48, %c0_312, %c0_313] : memref<1x184x16x32xbf16, #tpu.memory_space<vmem>>, vector<1x1x16x32xbf16>
    %413 = vector.shape_cast %412 : vector<1x1x16x32xbf16> to vector<16x32xbf16>
    %414 = arith.extf %413 : vector<16x32xbf16> to vector<16x32xf32>
    %415 = arith.addf %411, %414 : vector<16x32xf32>
    %c0_314 = arith.constant 0 : index
    %c52 = arith.constant 52 : index
    %c0_315 = arith.constant 0 : index
    %c0_316 = arith.constant 0 : index
    %416 = vector.load %arg2[%c0_314, %c52, %c0_315, %c0_316] : memref<1x184x16x32xbf16, #tpu.memory_space<vmem>>, vector<1x1x16x32xbf16>
    %417 = vector.shape_cast %416 : vector<1x1x16x32xbf16> to vector<16x32xbf16>
    %418 = arith.extf %417 : vector<16x32xbf16> to vector<16x32xf32>
    %419 = arith.addf %415, %418 : vector<16x32xf32>
    %c0_317 = arith.constant 0 : index
    %c56 = arith.constant 56 : index
    %c0_318 = arith.constant 0 : index
    %c0_319 = arith.constant 0 : index
    %420 = vector.load %arg2[%c0_317, %c56, %c0_318, %c0_319] : memref<1x184x16x32xbf16, #tpu.memory_space<vmem>>, vector<1x1x16x32xbf16>
    %421 = vector.shape_cast %420 : vector<1x1x16x32xbf16> to vector<16x32xbf16>
    %422 = arith.extf %421 : vector<16x32xbf16> to vector<16x32xf32>
    %423 = arith.addf %419, %422 : vector<16x32xf32>
    %c0_320 = arith.constant 0 : index
    %c60 = arith.constant 60 : index
    %c0_321 = arith.constant 0 : index
    %c0_322 = arith.constant 0 : index
    %424 = vector.load %arg2[%c0_320, %c60, %c0_321, %c0_322] : memref<1x184x16x32xbf16, #tpu.memory_space<vmem>>, vector<1x1x16x32xbf16>
    %425 = vector.shape_cast %424 : vector<1x1x16x32xbf16> to vector<16x32xbf16>
    %426 = arith.extf %425 : vector<16x32xbf16> to vector<16x32xf32>
    %427 = arith.addf %423, %426 : vector<16x32xf32>
    %c0_323 = arith.constant 0 : index
    %c64 = arith.constant 64 : index
    %c0_324 = arith.constant 0 : index
    %c0_325 = arith.constant 0 : index
    %428 = vector.load %arg2[%c0_323, %c64, %c0_324, %c0_325] : memref<1x184x16x32xbf16, #tpu.memory_space<vmem>>, vector<1x1x16x32xbf16>
    %429 = vector.shape_cast %428 : vector<1x1x16x32xbf16> to vector<16x32xbf16>
    %430 = arith.extf %429 : vector<16x32xbf16> to vector<16x32xf32>
    %431 = arith.addf %427, %430 : vector<16x32xf32>
    %c0_326 = arith.constant 0 : index
    %c68 = arith.constant 68 : index
    %c0_327 = arith.constant 0 : index
    %c0_328 = arith.constant 0 : index
    %432 = vector.load %arg2[%c0_326, %c68, %c0_327, %c0_328] : memref<1x184x16x32xbf16, #tpu.memory_space<vmem>>, vector<1x1x16x32xbf16>
    %433 = vector.shape_cast %432 : vector<1x1x16x32xbf16> to vector<16x32xbf16>
    %434 = arith.extf %433 : vector<16x32xbf16> to vector<16x32xf32>
    %435 = arith.addf %431, %434 : vector<16x32xf32>
    %c0_329 = arith.constant 0 : index
    %c72 = arith.constant 72 : index
    %c0_330 = arith.constant 0 : index
    %c0_331 = arith.constant 0 : index
    %436 = vector.load %arg2[%c0_329, %c72, %c0_330, %c0_331] : memref<1x184x16x32xbf16, #tpu.memory_space<vmem>>, vector<1x1x16x32xbf16>
    %437 = vector.shape_cast %436 : vector<1x1x16x32xbf16> to vector<16x32xbf16>
    %438 = arith.extf %437 : vector<16x32xbf16> to vector<16x32xf32>
    %439 = arith.addf %435, %438 : vector<16x32xf32>
    %c0_332 = arith.constant 0 : index
    %c76 = arith.constant 76 : index
    %c0_333 = arith.constant 0 : index
    %c0_334 = arith.constant 0 : index
    %440 = vector.load %arg2[%c0_332, %c76, %c0_333, %c0_334] : memref<1x184x16x32xbf16, #tpu.memory_space<vmem>>, vector<1x1x16x32xbf16>
    %441 = vector.shape_cast %440 : vector<1x1x16x32xbf16> to vector<16x32xbf16>
    %442 = arith.extf %441 : vector<16x32xbf16> to vector<16x32xf32>
    %443 = arith.addf %439, %442 : vector<16x32xf32>
    %c0_335 = arith.constant 0 : index
    %c80 = arith.constant 80 : index
    %c0_336 = arith.constant 0 : index
    %c0_337 = arith.constant 0 : index
    %444 = vector.load %arg2[%c0_335, %c80, %c0_336, %c0_337] : memref<1x184x16x32xbf16, #tpu.memory_space<vmem>>, vector<1x1x16x32xbf16>
    %445 = vector.shape_cast %444 : vector<1x1x16x32xbf16> to vector<16x32xbf16>
    %446 = arith.extf %445 : vector<16x32xbf16> to vector<16x32xf32>
    %447 = arith.addf %443, %446 : vector<16x32xf32>
    %c0_338 = arith.constant 0 : index
    %c84 = arith.constant 84 : index
    %c0_339 = arith.constant 0 : index
    %c0_340 = arith.constant 0 : index
    %448 = vector.load %arg2[%c0_338, %c84, %c0_339, %c0_340] : memref<1x184x16x32xbf16, #tpu.memory_space<vmem>>, vector<1x1x16x32xbf16>
    %449 = vector.shape_cast %448 : vector<1x1x16x32xbf16> to vector<16x32xbf16>
    %450 = arith.extf %449 : vector<16x32xbf16> to vector<16x32xf32>
    %451 = arith.addf %447, %450 : vector<16x32xf32>
    %c0_341 = arith.constant 0 : index
    %c88 = arith.constant 88 : index
    %c0_342 = arith.constant 0 : index
    %c0_343 = arith.constant 0 : index
    %452 = vector.load %arg2[%c0_341, %c88, %c0_342, %c0_343] : memref<1x184x16x32xbf16, #tpu.memory_space<vmem>>, vector<1x1x16x32xbf16>
    %453 = vector.shape_cast %452 : vector<1x1x16x32xbf16> to vector<16x32xbf16>
    %454 = arith.extf %453 : vector<16x32xbf16> to vector<16x32xf32>
    %455 = arith.addf %451, %454 : vector<16x32xf32>
    %c0_344 = arith.constant 0 : index
    %c92 = arith.constant 92 : index
    %c0_345 = arith.constant 0 : index
    %c0_346 = arith.constant 0 : index
    %456 = vector.load %arg2[%c0_344, %c92, %c0_345, %c0_346] : memref<1x184x16x32xbf16, #tpu.memory_space<vmem>>, vector<1x1x16x32xbf16>
    %457 = vector.shape_cast %456 : vector<1x1x16x32xbf16> to vector<16x32xbf16>
    %458 = arith.extf %457 : vector<16x32xbf16> to vector<16x32xf32>
    %459 = arith.addf %455, %458 : vector<16x32xf32>
    %c0_347 = arith.constant 0 : index
    %c98 = arith.constant 98 : index
    %c0_348 = arith.constant 0 : index
    %c0_349 = arith.constant 0 : index
    %460 = vector.load %arg2[%c0_347, %c98, %c0_348, %c0_349] : memref<1x184x16x32xbf16, #tpu.memory_space<vmem>>, vector<1x1x16x32xbf16>
    %461 = vector.shape_cast %460 : vector<1x1x16x32xbf16> to vector<16x32xbf16>
    %462 = arith.extf %461 : vector<16x32xbf16> to vector<16x32xf32>
    %463 = arith.addf %459, %462 : vector<16x32xf32>
    %c0_350 = arith.constant 0 : index
    %c105 = arith.constant 105 : index
    %c0_351 = arith.constant 0 : index
    %c0_352 = arith.constant 0 : index
    %464 = vector.load %arg2[%c0_350, %c105, %c0_351, %c0_352] : memref<1x184x16x32xbf16, #tpu.memory_space<vmem>>, vector<1x1x16x32xbf16>
    %465 = vector.shape_cast %464 : vector<1x1x16x32xbf16> to vector<16x32xbf16>
    %466 = arith.extf %465 : vector<16x32xbf16> to vector<16x32xf32>
    %467 = arith.addf %463, %466 : vector<16x32xf32>
    %c0_353 = arith.constant 0 : index
    %c110 = arith.constant 110 : index
    %c0_354 = arith.constant 0 : index
    %c0_355 = arith.constant 0 : index
    %468 = vector.load %arg2[%c0_353, %c110, %c0_354, %c0_355] : memref<1x184x16x32xbf16, #tpu.memory_space<vmem>>, vector<1x1x16x32xbf16>
    %469 = vector.shape_cast %468 : vector<1x1x16x32xbf16> to vector<16x32xbf16>
    %470 = arith.extf %469 : vector<16x32xbf16> to vector<16x32xf32>
    %471 = arith.addf %467, %470 : vector<16x32xf32>
    %c0_356 = arith.constant 0 : index
    %c123 = arith.constant 123 : index
    %c0_357 = arith.constant 0 : index
    %c0_358 = arith.constant 0 : index
    %472 = vector.load %arg2[%c0_356, %c123, %c0_357, %c0_358] : memref<1x184x16x32xbf16, #tpu.memory_space<vmem>>, vector<1x1x16x32xbf16>
    %473 = vector.shape_cast %472 : vector<1x1x16x32xbf16> to vector<16x32xbf16>
    %474 = arith.extf %473 : vector<16x32xbf16> to vector<16x32xf32>
    %475 = arith.addf %471, %474 : vector<16x32xf32>
    %c0_359 = arith.constant 0 : index
    %c137 = arith.constant 137 : index
    %c0_360 = arith.constant 0 : index
    %c0_361 = arith.constant 0 : index
    %476 = vector.load %arg2[%c0_359, %c137, %c0_360, %c0_361] : memref<1x184x16x32xbf16, #tpu.memory_space<vmem>>, vector<1x1x16x32xbf16>
    %477 = vector.shape_cast %476 : vector<1x1x16x32xbf16> to vector<16x32xbf16>
    %478 = arith.extf %477 : vector<16x32xbf16> to vector<16x32xf32>
    %479 = arith.addf %475, %478 : vector<16x32xf32>
    %c0_362 = arith.constant 0 : index
    %c158 = arith.constant 158 : index
    %c0_363 = arith.constant 0 : index
    %c0_364 = arith.constant 0 : index
    %480 = vector.load %arg2[%c0_362, %c158, %c0_363, %c0_364] : memref<1x184x16x32xbf16, #tpu.memory_space<vmem>>, vector<1x1x16x32xbf16>
    %481 = vector.shape_cast %480 : vector<1x1x16x32xbf16> to vector<16x32xbf16>
    %482 = arith.extf %481 : vector<16x32xbf16> to vector<16x32xf32>
    %483 = arith.addf %479, %482 : vector<16x32xf32>
    %c0_365 = arith.constant 0 : index
    %c166 = arith.constant 166 : index
    %c0_366 = arith.constant 0 : index
    %c0_367 = arith.constant 0 : index
    %484 = vector.load %arg2[%c0_365, %c166, %c0_366, %c0_367] : memref<1x184x16x32xbf16, #tpu.memory_space<vmem>>, vector<1x1x16x32xbf16>
    %485 = vector.shape_cast %484 : vector<1x1x16x32xbf16> to vector<16x32xbf16>
    %486 = arith.extf %485 : vector<16x32xbf16> to vector<16x32xf32>
    %487 = arith.addf %483, %486 : vector<16x32xf32>
    %488 = arith.addf %122, %245 : vector<16x32xf32>
    %489 = arith.addf %368, %487 : vector<16x32xf32>
    %490 = arith.addf %488, %489 : vector<16x32xf32>
    %cst = arith.constant 8.000000e+00 : f32
    %491 = vector.broadcast %cst : f32 to vector<16x32xf32>
    %492 = arith.mulf %491, %490 : vector<16x32xf32>
    %cst_368 = arith.constant 1.000000e+00 : f32
    %493 = vector.broadcast %cst_368 : f32 to vector<16x32xf32>
    %494 = arith.addf %493, %492 : vector<16x32xf32>
    %c0_369 = arith.constant 0 : index
    %c0_370 = arith.constant 0 : index
    %c0_371 = arith.constant 0 : index
    %c0_372 = arith.constant 0 : index
    %495 = vector.load %arg3[%c0_369, %c0_370, %c0_371, %c0_372] : memref<1x3x32x64xf32, #tpu.memory_space<vmem>>, vector<1x1x32x64xf32>
    %496 = vector.shape_cast %495 : vector<1x1x32x64xf32> to vector<32x64xf32>
    %c0_373 = arith.constant 0 : index
    %c1_374 = arith.constant 1 : index
    %c0_375 = arith.constant 0 : index
    %c0_376 = arith.constant 0 : index
    %497 = vector.load %arg3[%c0_373, %c1_374, %c0_375, %c0_376] : memref<1x3x32x64xf32, #tpu.memory_space<vmem>>, vector<1x1x32x64xf32>
    %498 = vector.shape_cast %497 : vector<1x1x32x64xf32> to vector<32x64xf32>
    %499 = arith.addf %496, %498 : vector<32x64xf32>
    %c0_377 = arith.constant 0 : index
    %c2_378 = arith.constant 2 : index
    %c0_379 = arith.constant 0 : index
    %c0_380 = arith.constant 0 : index
    %500 = vector.load %arg3[%c0_377, %c2_378, %c0_379, %c0_380] : memref<1x3x32x64xf32, #tpu.memory_space<vmem>>, vector<1x1x32x64xf32>
    %501 = vector.shape_cast %500 : vector<1x1x32x64xf32> to vector<32x64xf32>
    %502 = arith.addf %499, %501 : vector<32x64xf32>
    %c0_381 = arith.constant 0 : index
    %c0_382 = arith.constant 0 : index
    %503 = vector.load %arg4[%c0_381, %c0_382] : memref<16x32xf32, #tpu.memory_space<vmem>>, vector<16x32xf32>
    %cst_383 = arith.constant dense<0.000000e+00> : vector<16x64xf32>
    %504 = tpu.matmul %503, %502, %cst_383 {dimension_numbers = #tpu.dot_dimension_numbers<[1], [0], [0], [1], [0, 0, 1, 1], [], []>} : vector<16x32xf32>, vector<32x64xf32>, vector<16x64xf32> -> vector<16x64xf32>
    %c0_384 = arith.constant 0 : index
    %c0_385 = arith.constant 0 : index
    %505 = vector.load %arg5[%c0_384, %c0_385] : memref<64x32xf32, #tpu.memory_space<vmem>>, vector<64x32xf32>
    %cst_386 = arith.constant dense<0.000000e+00> : vector<16x32xf32>
    %506 = tpu.matmul %504, %505, %cst_386 {dimension_numbers = #tpu.dot_dimension_numbers<[1], [0], [0], [1], [0, 0, 1, 1], [], []>} : vector<16x64xf32>, vector<64x32xf32>, vector<16x32xf32> -> vector<16x32xf32>
    %507 = vector.shape_cast %494 : vector<16x32xf32> to vector<1x16x32xf32>
    %cst_387 = arith.constant dense<0.000000e+00> : vector<1xf32>
    %508 = vector.multi_reduction <add>, %507, %cst_387 [1, 2] : vector<1x16x32xf32> to vector<1xf32>
    %509 = vector.shape_cast %508 : vector<1xf32> to vector<1x1x1xf32>
    %510 = vector.extract %509[0, 0, 0] : f32 from vector<1x1x1xf32>
    %511 = vector.broadcast %510 : f32 to vector<8x128xf32>
    %c0_388 = arith.constant 0 : index
    %c0_389 = arith.constant 0 : index
    %c0_390 = arith.constant 0 : index
    %c0_391 = arith.constant 0 : index
    %512 = vector.load %arg6[%c0_388, %c0_389, %c0_390, %c0_391] : memref<1x2x8x128xf32, #tpu.memory_space<vmem>>, vector<1x1x8x128xf32>
    %513 = vector.shape_cast %512 : vector<1x1x8x128xf32> to vector<8x128xf32>
    %514 = vector.shape_cast %511 : vector<8x128xf32> to vector<1x1x8x128xf32>
    tpu.vector_store %arg6[%c0_388, %c0_389, %c0_390, %c0_391], %514 {strides = array<i32>} : memref<1x2x8x128xf32, #tpu.memory_space<vmem>>, vector<1x1x8x128xf32>,
    %515 = arith.mulf %494, %506 : vector<16x32xf32>
    %516 = vector.shape_cast %515 : vector<16x32xf32> to vector<1x16x32xf32>
    %cst_392 = arith.constant dense<0.000000e+00> : vector<1xf32>
    %517 = vector.multi_reduction <add>, %516, %cst_392 [1, 2] : vector<1x16x32xf32> to vector<1xf32>
    %518 = vector.shape_cast %517 : vector<1xf32> to vector<1x1x1xf32>
    %519 = vector.extract %518[0, 0, 0] : f32 from vector<1x1x1xf32>
    %520 = vector.broadcast %519 : f32 to vector<8x128xf32>
    %c0_393 = arith.constant 0 : index
    %c1_394 = arith.constant 1 : index
    %c0_395 = arith.constant 0 : index
    %c0_396 = arith.constant 0 : index
    %521 = vector.load %arg6[%c0_393, %c1_394, %c0_395, %c0_396] : memref<1x2x8x128xf32, #tpu.memory_space<vmem>>, vector<1x1x8x128xf32>
    %522 = vector.shape_cast %521 : vector<1x1x8x128xf32> to vector<8x128xf32>
    %523 = vector.shape_cast %520 : vector<8x128xf32> to vector<1x1x8x128xf32>
    tpu.vector_store %arg6[%c0_393, %c1_394, %c0_395, %c0_396], %523 {strides = array<i32>} : memref<1x2x8x128xf32, #tpu.memory_space<vmem>>, vector<1x1x8x128xf32>,
    return
  }
  func.func @transform_0(%arg0: i32, %arg1: i32) -> (i32, i32, i32, i32) {
    %c0_i32 = arith.constant 0 : i32
    %c0_i32_0 = arith.constant 0 : i32
    %c0_i32_1 = arith.constant 0 : i32
    return %arg0, %c0_i32, %arg1, %c0_i32_0 : i32, i32, i32, i32
  }
  func.func @transform_1(%arg0: i32, %arg1: i32) -> (i32, i32, i32, i32) {
    %c0_i32 = arith.constant 0 : i32
    %c0_i32_0 = arith.constant 0 : i32
    %c0_i32_1 = arith.constant 0 : i32
    return %arg0, %c0_i32, %arg1, %c0_i32_0 : i32, i32, i32, i32
  }
  func.func @transform_2(%arg0: i32, %arg1: i32) -> (i32, i32) {
    %c0_i32 = arith.constant 0 : i32
    %c0_i32_0 = arith.constant 0 : i32
    %c0_i32_1 = arith.constant 0 : i32
    return %c0_i32, %c0_i32_0 : i32, i32
  }
  func.func @transform_3(%arg0: i32, %arg1: i32) -> (i32, i32) {
    %c0_i32 = arith.constant 0 : i32
    %c0_i32_0 = arith.constant 0 : i32
    %c0_i32_1 = arith.constant 0 : i32
    return %c0_i32, %c0_i32_0 : i32, i32
  }
  func.func @transform_4(%arg0: i32, %arg1: i32) -> (i32, i32, i32, i32) {
    %c2_i32 = arith.constant 2 : i32
    %0 = arith.muli %arg0, %c2_i32 : i32
    %1 = arith.addi %0, %arg1 : i32
    %c0_i32 = arith.constant 0 : i32
    %c0_i32_0 = arith.constant 0 : i32
    %c0_i32_1 = arith.constant 0 : i32
    %c0_i32_2 = arith.constant 0 : i32
    return %1, %c0_i32, %c0_i32_0, %c0_i32_1 : i32, i32, i32, i32
  }
}

</mosaic_0001>

<llo_original>
// kernel: object_aware_loss.1
$region0: #{object_aware_loss.1}
  #allocation0 [shape = 'u32[]', space=smem, size = 0x4, offset = 0x4, fixed_abs, tag = 'smem constant byte address 0x4 - core index']
  #allocation1 [shape = 'u32[144,128]{1,0:T(1,128)}', space=vmem, size = 0x12000, scoped, tag = 'internal scratch']
  %s0 = inlined_call_operand.vmem [shape: bf16[2,184,32,32], index: 0, kind: input, shape index: {}]
  %s1 = inlined_call_operand.vmem [shape: f32[2,3,64,64], index: 1, kind: input, shape index: {}]
  %s2 = inlined_call_operand.vmem [shape: f32[16,32], index: 2, kind: input, shape index: {}]
  %s3 = inlined_call_operand.vmem [shape: f32[64,32], index: 3, kind: input, shape index: {}]
  %s4 = inlined_call_operand.vmem [shape: f32[4,2,8,128], index: 4, kind: output, shape index: {}]
  %s5 = sld [smem:[#allocation0]]
  $region128: #{object_aware_loss.1} parent=0
    _
  %s7 = ssub.s32 1, %s5
  %s8 = scalar_select 0, %s7, %s5
  $region1: #{object_aware_loss.1} parent=0
    #allocation2 [shape = 'u8[1507328]{0}', space=vmem, size = 0x170000, scoped, tag = 'input window, operand 0']
    #allocation3 [shape = 'u8[98304]{0}', space=vmem, size = 0x18000, scoped, tag = 'input window, operand 1']
    loop: start=0, step=1, limit=6
    $region2: #{object_aware_loss.1} parent=1 // loop_pre_header
      _
    $region3: #{object_aware_loss.1} parent=1 // loop_header
      %s10 = sphi 0, %s14
      %p11 = scmp.ge.s32.totalorder %s10, 6
      %s17 = sphi 0, %s29
      %s18 = sphi 0, %s25
      %s19 = sphi 0, %s17
      %s20 = sphi 0, %s18
      %s21 = sphi 0, %s19
      %s22 = sphi 0, %s20
      %s34 = sphi 0, %s36
      %s37 = sphi 0, %s34
      %s38 = sphi 0, %s37
      %s54 = sphi 0, %s38
      %s62 = sphi 0, %s64
      %s65 = sphi 0, %s62
      %s66 = sphi 0, %s65
      %s82 = sphi 0, %s66
      %s86 = sphi 0, %s86
      %s88 = sphi 0, %s86
      %s89 = sphi 0, %s88
      %s103 = sphi 0, %s89
      %s107 = sphi 0, %s107
      %s109 = sphi 0, %s107
      %s110 = sphi 0, %s109
      %s124 = sphi 0, %s110
      %s134 = sphi 0, %s136
      %s137 = sphi 0, %s134
      %s138 = sphi 0, %s137
      %s154 = sphi 0, %s138
    $region4: #{object_aware_loss.1} parent=1 // loop_header_branch
      %13 = sbr.rel (%p11) target = $region8
    $region5: #{object_aware_loss.1} parent=1 // loop_body
      %s15 = ssub.s32 %s10, 1
      %s16 = ssub.s32 %s10, 2
      %s23 = sadd.s32 1, %s18
      %p24 = scmp.ge.s32.totalorder %s23, 2
      %s25 = scalar_select %p24, 0, %s23
      %s26 = sadd.s32 1, %s17
      %s27 = scalar_select %p24, %s26, %s17
      %p28 = scmp.ge.s32.totalorder %s27, 2
      %s29 = scalar_select %p28, 0, %s27
      %s30 = ssub.s32 %s17, %s29
      %s31 = ssub.s32 %s18, %s25
      %s32 = sor.u32 %s30, %s31
      %p33 = scmp.eq.s32.totalorder %s32, 0
      %s35 = sadd.s32 %s34, 1
      %s36 = scalar_select %p33, %s34, %s35
      %p39 = pneg %p33
      %p40 = scmp.eq.s32.totalorder %s10, 3
      %p41 = por %p39, %p40
      %p42 = scmp.ne.s32.totalorder %s34, %s37
      %p43 = scmp.eq.s32.totalorder %s10, 0
      %p44 = por %p42, %p43
      %p45 = scmp.ne.s32.totalorder %s34, %s37
      %p46 = scmp.eq.s32.totalorder %s15, 3
      %p47 = por %p45, %p46
      %p48 = scmp.ne.s32.totalorder %s37, %s38
      %p49 = scmp.eq.s32.totalorder %s15, 0
      %p50 = por %p48, %p49
      %p51 = scmp.ne.s32.totalorder %s37, %s38
      %p52 = scmp.eq.s32.totalorder %s16, 3
      %p53 = por %p51, %p52
      %p55 = scmp.ne.s32.totalorder %s38, %s54
      %p56 = scmp.eq.s32.totalorder %s16, 0
      %p57 = por %p55, %p56
      %s58 = ssub.s32 %s17, %s29
      %s59 = ssub.s32 %s18, %s25
      %s60 = sor.u32 %s58, %s59
      %p61 = scmp.eq.s32.totalorder %s60, 0
      %s63 = sadd.s32 %s62, 1
      %s64 = scalar_select %p61, %s62, %s63
      %p67 = pneg %p61
      %p68 = scmp.eq.s32.totalorder %s10, 3
      %p69 = por %p67, %p68
      %p70 = scmp.ne.s32.totalorder %s62, %s65
      %p71 = scmp.eq.s32.totalorder %s10, 0
      %p72 = por %p70, %p71
      %p73 = scmp.ne.s32.totalorder %s62, %s65
      %p74 = scmp.eq.s32.totalorder %s15, 3
      %p75 = por %p73, %p74
      %p76 = scmp.ne.s32.totalorder %s65, %s66
      %p77 = scmp.eq.s32.totalorder %s15, 0
      %p78 = por %p76, %p77
      %p79 = scmp.ne.s32.totalorder %s65, %s66
      %p80 = scmp.eq.s32.totalorder %s16, 3
      %p81 = por %p79, %p80
      %p83 = scmp.ne.s32.totalorder %s66, %s82
      %p84 = scmp.eq.s32.totalorder %s16, 0
      %p85 = por %p83, %p84
      %s87 = sadd.s32 %s86, 1
      %p90 = scmp.eq.s32.totalorder %s10, 3
      %p91 = scmp.ne.s32.totalorder %s86, %s88
      %p92 = scmp.eq.s32.totalorder %s10, 0
      %p93 = por %p91, %p92
      %p94 = scmp.ne.s32.totalorder %s86, %s88
      %p95 = scmp.eq.s32.totalorder %s15, 3
      %p96 = por %p94, %p95
      %p97 = scmp.ne.s32.totalorder %s88, %s89
      %p98 = scmp.eq.s32.totalorder %s15, 0
      %p99 = por %p97, %p98
      %p100 = scmp.ne.s32.totalorder %s88, %s89
      %p101 = scmp.eq.s32.totalorder %s16, 3
      %p102 = por %p100, %p101
      %p104 = scmp.ne.s32.totalorder %s89, %s103
      %p105 = scmp.eq.s32.totalorder %s16, 0
      %p106 = por %p104, %p105
      %s108 = sadd.s32 %s107, 1
      %p111 = scmp.eq.s32.totalorder %s10, 3
      %p112 = scmp.ne.s32.totalorder %s107, %s109
      %p113 = scmp.eq.s32.totalorder %s10, 0
      %p114 = por %p112, %p113
      %p115 = scmp.ne.s32.totalorder %s107, %s109
      %p116 = scmp.eq.s32.totalorder %s15, 3
      %p117 = por %p115, %p116
      %p118 = scmp.ne.s32.totalorder %s109, %s110
      %p119 = scmp.eq.s32.totalorder %s15, 0
      %p120 = por %p118, %p119
      %p121 = scmp.ne.s32.totalorder %s109, %s110
      %p122 = scmp.eq.s32.totalorder %s16, 3
      %p123 = por %p121, %p122
      %p125 = scmp.ne.s32.totalorder %s110, %s124
      %p126 = scmp.eq.s32.totalorder %s16, 0
      %p127 = por %p125, %p126
      %s128 = smul.u32 %s17, 2
      %s129 = sadd.s32 %s128, %s18
      %s130 = smul.u32 %s29, 2
      %s131 = sadd.s32 %s130, %s25
      %s132 = ssub.s32 %s129, %s131
      %p133 = scmp.eq.s32.totalorder %s132, 0
      %s135 = sadd.s32 %s134, 1
      %s136 = scalar_select %p133, %s134, %s135
      %p139 = pneg %p133
      %p140 = scmp.eq.s32.totalorder %s10, 3
      %p141 = por %p139, %p140
      %p142 = scmp.ne.s32.totalorder %s134, %s137
      %p143 = scmp.eq.s32.totalorder %s10, 0
      %p144 = por %p142, %p143
      %p145 = scmp.ne.s32.totalorder %s134, %s137
      %p146 = scmp.eq.s32.totalorder %s15, 3
      %p147 = por %p145, %p146
      %p148 = scmp.ne.s32.totalorder %s137, %s138
      %p149 = scmp.eq.s32.totalorder %s15, 0
      %p150 = por %p148, %p149
      %p151 = scmp.ne.s32.totalorder %s137, %s138
      %p152 = scmp.eq.s32.totalorder %s16, 3
      %p153 = por %p151, %p152
      %p155 = scmp.ne.s32.totalorder %s138, %s154
      %p156 = scmp.eq.s32.totalorder %s16, 0
      %p157 = por %p155, %p156
      %p158 = scmp.le.s32.totalorder 1, %s10
      %p159 = scmp.lt.s32.totalorder %s10, 5
      %p160 = pnand %p158, %p159
      %p161 = pneg %p160
      // Predicated region
      $region9: #{object_aware_loss.1} parent=5 // pred_check
        _
      $region10: #{object_aware_loss.1} parent=5 // pred_check_branch
        %163 = sbr.rel (%p160) target = $region12
      $region11: #{object_aware_loss.1} parent=5 // pred_region
        %s164 = ssub.s32 %s10, 1
        // Predicated region
        $region13: #{object_aware_loss.1} parent=11 // pred_check
          %p165 = pneg %p99
        $region14: #{object_aware_loss.1} parent=11 // pred_check_branch
          %167 = sbr.rel (%p165) target = $region16
        $region15: #{object_aware_loss.1} parent=11 // pred_region
          _
        $region16: #{object_aware_loss.1} parent=11 // pred_fallthru
          _
        // Predicated region
        $region17: #{object_aware_loss.1} parent=11 // pred_check
          %p168 = pneg %p120
        $region18: #{object_aware_loss.1} parent=11 // pred_check_branch
          %170 = sbr.rel (%p168) target = $region20
        $region19: #{object_aware_loss.1} parent=11 // pred_region
          _
        $region20: #{object_aware_loss.1} parent=11 // pred_fallthru
          _
      $region12: #{object_aware_loss.1} parent=5 // pred_fallthru
        _
      %p171 = scmp.lt.s32.totalorder %s10, 4
      // Predicated region
      $region21: #{object_aware_loss.1} parent=5 // pred_check
        %p172 = pneg %p171
      $region22: #{object_aware_loss.1} parent=5 // pred_check_branch
        %174 = sbr.rel (%p172) target = $region24
      $region23: #{object_aware_loss.1} parent=5 // pred_region
        // Predicated region
        $region25: #{object_aware_loss.1} parent=23 // pred_check
          %p175 = pneg %p44
        $region26: #{object_aware_loss.1} parent=23 // pred_check_branch
          %177 = sbr.rel (%p175) target = $region28
        $region27: #{object_aware_loss.1} parent=23 // pred_region
          %s178 = sand.u32 %s34, 1
          %s179 = sand.u32 %s34, 1
          %s180 = smul.addr %s179, 1472
          %s181 = scalar_lea.vmem [#allocation2], %s180
          %s182 = smul.u32 2, %s18
          %s183 = smul.addr %s17, 736
          %s184 = sadd.s32 %s182, %s183
          %s185 = smul.addr %s184, 4
          %s186 = scalar_lea.vmem %s0, %s185
          // Predicated region
          $region29: #{object_aware_loss.1} parent=27 // pred_check
            _
          $region30: #{object_aware_loss.1} parent=27 // pred_check_branch
            %188 = sbr.rel (0) target = $region32
          $region31: #{object_aware_loss.1} parent=27 // pred_region
            // Predicated region
            $region33: #{object_aware_loss.1} parent=31 // pred_check
              _
            $region34: #{object_aware_loss.1} parent=31 // pred_check_branch
              %190 = sbr.rel target = $region36
            $region35: #{object_aware_loss.1} parent=31 // pred_region
              // Predicated region
              $region48: #{object_aware_loss.1} parent=35 // pred_check
                _
              $region49: #{object_aware_loss.1} parent=35 // pred_check_branch
                %939 = sbr.rel (0) target = $region51
              $region50: #{object_aware_loss.1} parent=35 // pred_region
                loop: start=0, step=1, limit=1
                $region52: #{object_aware_loss.1} parent=50 // loop_pre_header
                  _
                $region53: #{object_aware_loss.1} parent=50 // loop_header
                  %s941 = sphi 0, %s945
                  %p942 = scmp.ge.s32.totalorder %s941, 1
                  %s946 = sphi %s186, %s186
                  %s947 = sphi %s181, %s181
                $region54: #{object_aware_loss.1} parent=50 // loop_header_branch
                  %944 = sbr.rel (%p942) target = $region58
                $region55: #{object_aware_loss.1} parent=50 // loop_body
                  _
                $region56: #{object_aware_loss.1} parent=50 // loop_footer
                  %s945 = sadd.s32 1, %s941
                $region57: #{object_aware_loss.1} parent=50 // loop_footer_branch
                  %940 = sbr.rel target = $region53
                $region58: #{object_aware_loss.1} parent=50 // loop_exit
                  _
                loop: start=0, step=1, limit=1
                $region59: #{object_aware_loss.1} parent=50 // loop_pre_header
                  _
                $region60: #{object_aware_loss.1} parent=50 // loop_header
                  %s950 = sphi 0, %s954
                  %p951 = scmp.ge.s32.totalorder %s950, 1
                  %s955 = sphi %s186, %s186
                  %s956 = sphi %s181, %s181
                $region61: #{object_aware_loss.1} parent=50 // loop_header_branch
                  %953 = sbr.rel (%p951) target = $region65
                $region62: #{object_aware_loss.1} parent=50 // loop_body
                  %v957 = vld [vmem:[%s955] sm:$0xf]
                  %958 = vst [vmem:[%s956] sm:$0xf] %v957
                  %v959 = vld [vmem:[%s955 + $0x4] sm:$0xf]
                  %960 = vst [vmem:[%s956 + $0x4] sm:$0xf] %v959
                  %v961 = vld [vmem:[%s955 + $0x10] sm:$0xf]
                  %962 = vst [vmem:[%s956 + $0x8] sm:$0xf] %v961
                  %v963 = vld [vmem:[%s955 + $0x14] sm:$0xf]
                  %964 = vst [vmem:[%s956 + $0xc] sm:$0xf] %v963
                  %v965 = vld [vmem:[%s955 + $0x20] sm:$0xf]
                  %966 = vst [vmem:[%s956 + $0x10] sm:$0xf] %v965
                  %v967 = vld [vmem:[%s955 + $0x24] sm:$0xf]
                  %968 = vst [vmem:[%s956 + $0x14] sm:$0xf] %v967
                  %v969 = vld [vmem:[%s955 + $0x30] sm:$0xf]
                  %970 = vst [vmem:[%s956 + $0x18] sm:$0xf] %v969
                  %v971 = vld [vmem:[%s955 + $0x34] sm:$0xf]
                  %972 = vst [vmem:[%s956 + $0x1c] sm:$0xf] %v971
                  %v973 = vld [vmem:[%s955 + $0x40] sm:$0xf]
                  %974 = vst [vmem:[%s956 + $0x20] sm:$0xf] %v973
                  %v975 = vld [vmem:[%s955 + $0x44] sm:$0xf]
                  %976 = vst [vmem:[%s956 + $0x24] sm:$0xf] %v975
                  %v977 = vld [vmem:[%s955 + $0x50] sm:$0xf]
                  %978 = vst [vmem:[%s956 + $0x28] sm:$0xf] %v977
                  %v979 = vld [vmem:[%s955 + $0x54] sm:$0xf]
                  %980 = vst [vmem:[%s956 + $0x2c] sm:$0xf] %v979
                  %v981 = vld [vmem:[%s955 + $0x60] sm:$0xf]
                  %982 = vst [vmem:[%s956 + $0x30] sm:$0xf] %v981
                  %v983 = vld [vmem:[%s955 + $0x64] sm:$0xf]
                  %984 = vst [vmem:[%s956 + $0x34] sm:$0xf] %v983
                  %v985 = vld [vmem:[%s955 + $0x70] sm:$0xf]
                  %986 = vst [vmem:[%s956 + $0x38] sm:$0xf] %v985
                  %v987 = vld [vmem:[%s955 + $0x74] sm:$0xf]
                  %988 = vst [vmem:[%s956 + $0x3c] sm:$0xf] %v987
                  %v989 = vld [vmem:[%s955 + $0x80] sm:$0xf]
                  %990 = vst [vmem:[%s956 + $0x40] sm:$0xf] %v989
                  %v991 = vld [vmem:[%s955 + $0x84] sm:$0xf]
                  %992 = vst [vmem:[%s956 + $0x44] sm:$0xf] %v991
                  %v993 = vld [vmem:[%s955 + $0x90] sm:$0xf]
                  %994 = vst [vmem:[%s956 + $0x48] sm:$0xf] %v993
                  %v995 = vld [vmem:[%s955 + $0x94] sm:$0xf]
                  %996 = vst [vmem:[%s956 + $0x4c] sm:$0xf] %v995
                  %v997 = vld [vmem:[%s955 + $0xa0] sm:$0xf]
                  %998 = vst [vmem:[%s956 + $0x50] sm:$0xf] %v997
                  %v999 = vld [vmem:[%s955 + $0xa4] sm:$0xf]
                  %1000 = vst [vmem:[%s956 + $0x54] sm:$0xf] %v999
                  %v1001 = vld [vmem:[%s955 + $0xb0] sm:$0xf]
                  %1002 = vst [vmem:[%s956 + $0x58] sm:$0xf] %v1001
                  %v1003 = vld [vmem:[%s955 + $0xb4] sm:$0xf]
                  %1004 = vst [vmem:[%s956 + $0x5c] sm:$0xf] %v1003
                  %v1005 = vld [vmem:[%s955 + $0xc0] sm:$0xf]
                  %1006 = vst [vmem:[%s956 + $0x60] sm:$0xf] %v1005
                  %v1007 = vld [vmem:[%s955 + $0xc4] sm:$0xf]
                  %1008 = vst [vmem:[%s956 + $0x64] sm:$0xf] %v1007
                  %v1009 = vld [vmem:[%s955 + $0xd0] sm:$0xf]
                  %1010 = vst [vmem:[%s956 + $0x68] sm:$0xf] %v1009
                  %v1011 = vld [vmem:[%s955 + $0xd4] sm:$0xf]
                  %1012 = vst [vmem:[%s956 + $0x6c] sm:$0xf] %v1011
                  %v1013 = vld [vmem:[%s955 + $0xe0] sm:$0xf]
                  %1014 = vst [vmem:[%s956 + $0x70] sm:$0xf] %v1013
                  %v1015 = vld [vmem:[%s955 + $0xe4] sm:$0xf]
                  %1016 = vst [vmem:[%s956 + $0x74] sm:$0xf] %v1015
                  %v1017 = vld [vmem:[%s955 + $0xf0] sm:$0xf]
                  %1018 = vst [vmem:[%s956 + $0x78] sm:$0xf] %v1017
                  %v1019 = vld [vmem:[%s955 + $0xf4] sm:$0xf]
                  %1020 = vst [vmem:[%s956 + $0x7c] sm:$0xf] %v1019
                  %v1021 = vld [vmem:[%s955 + $0x100] sm:$0xf]
                  %1022 = vst [vmem:[%s956 + $0x80] sm:$0xf] %v1021
                  %v1023 = vld [vmem:[%s955 + $0x104] sm:$0xf]
                  %1024 = vst [vmem:[%s956 + $0x84] sm:$0xf] %v1023
                  %v1025 = vld [vmem:[%s955 + $0x110] sm:$0xf]
                  %1026 = vst [vmem:[%s956 + $0x88] sm:$0xf] %v1025
                  %v1027 = vld [vmem:[%s955 + $0x114] sm:$0xf]
                  %1028 = vst [vmem:[%s956 + $0x8c] sm:$0xf] %v1027
                  %v1029 = vld [vmem:[%s955 + $0x120] sm:$0xf]
                  %1030 = vst [vmem:[%s956 + $0x90] sm:$0xf] %v1029
                  %v1031 = vld [vmem:[%s955 + $0x124] sm:$0xf]
                  %1032 = vst [vmem:[%s956 + $0x94] sm:$0xf] %v1031
                  %v1033 = vld [vmem:[%s955 + $0x130] sm:$0xf]
                  %1034 = vst [vmem:[%s956 + $0x98] sm:$0xf] %v1033
                  %v1035 = vld [vmem:[%s955 + $0x134] sm:$0xf]
                  %1036 = vst [vmem:[%s956 + $0x9c] sm:$0xf] %v1035
                  %v1037 = vld [vmem:[%s955 + $0x140] sm:$0xf]
                  %1038 = vst [vmem:[%s956 + $0xa0] sm:$0xf] %v1037
                  %v1039 = vld [vmem:[%s955 + $0x144] sm:$0xf]
                  %1040 = vst [vmem:[%s956 + $0xa4] sm:$0xf] %v1039
                  %v1041 = vld [vmem:[%s955 + $0x150] sm:$0xf]
                  %1042 = vst [vmem:[%s956 + $0xa8] sm:$0xf] %v1041
                  %v1043 = vld [vmem:[%s955 + $0x154] sm:$0xf]
                  %1044 = vst [vmem:[%s956 + $0xac] sm:$0xf] %v1043
                  %v1045 = vld [vmem:[%s955 + $0x160] sm:$0xf]
                  %1046 = vst [vmem:[%s956 + $0xb0] sm:$0xf] %v1045
                  %v1047 = vld [vmem:[%s955 + $0x164] sm:$0xf]
                  %1048 = vst [vmem:[%s956 + $0xb4] sm:$0xf] %v1047
                  %v1049 = vld [vmem:[%s955 + $0x170] sm:$0xf]
                  %1050 = vst [vmem:[%s956 + $0xb8] sm:$0xf] %v1049
                  %v1051 = vld [vmem:[%s955 + $0x174] sm:$0xf]
                  %1052 = vst [vmem:[%s956 + $0xbc] sm:$0xf] %v1051
                  %v1053 = vld [vmem:[%s955 + $0x180] sm:$0xf]
                  %1054 = vst [vmem:[%s956 + $0xc0] sm:$0xf] %v1053
                  %v1055 = vld [vmem:[%s955 + $0x184] sm:$0xf]
                  %1056 = vst [vmem:[%s956 + $0xc4] sm:$0xf] %v1055
                  %v1057 = vld [vmem:[%s955 + $0x190] sm:$0xf]
                  %1058 = vst [vmem:[%s956 + $0xc8] sm:$0xf] %v1057
                  %v1059 = vld [vmem:[%s955 + $0x194] sm:$0xf]
                  %1060 = vst [vmem:[%s956 + $0xcc] sm:$0xf] %v1059
                  %v1061 = vld [vmem:[%s955 + $0x1a0] sm:$0xf]
                  %1062 = vst [vmem:[%s956 + $0xd0] sm:$0xf] %v1061
                  %v1063 = vld [vmem:[%s955 + $0x1a4] sm:$0xf]
                  %1064 = vst [vmem:[%s956 + $0xd4] sm:$0xf] %v1063
                  %v1065 = vld [vmem:[%s955 + $0x1b0] sm:$0xf]
                  %1066 = vst [vmem:[%s956 + $0xd8] sm:$0xf] %v1065
                  %v1067 = vld [vmem:[%s955 + $0x1b4] sm:$0xf]
                  %1068 = vst [vmem:[%s956 + $0xdc] sm:$0xf] %v1067
                  %v1069 = vld [vmem:[%s955 + $0x1c0] sm:$0xf]
                  %1070 = vst [vmem:[%s956 + $0xe0] sm:$0xf] %v1069
                  %v1071 = vld [vmem:[%s955 + $0x1c4] sm:$0xf]
                  %1072 = vst [vmem:[%s956 + $0xe4] sm:$0xf] %v1071
                  %v1073 = vld [vmem:[%s955 + $0x1d0] sm:$0xf]
                  %1074 = vst [vmem:[%s956 + $0xe8] sm:$0xf] %v1073
                  %v1075 = vld [vmem:[%s955 + $0x1d4] sm:$0xf]
                  %1076 = vst [vmem:[%s956 + $0xec] sm:$0xf] %v1075
                  %v1077 = vld [vmem:[%s955 + $0x1e0] sm:$0xf]
                  %1078 = vst [vmem:[%s956 + $0xf0] sm:$0xf] %v1077
                  %v1079 = vld [vmem:[%s955 + $0x1e4] sm:$0xf]
                  %1080 = vst [vmem:[%s956 + $0xf4] sm:$0xf] %v1079
                  %v1081 = vld [vmem:[%s955 + $0x1f0] sm:$0xf]
                  %1082 = vst [vmem:[%s956 + $0xf8] sm:$0xf] %v1081
                  %v1083 = vld [vmem:[%s955 + $0x1f4] sm:$0xf]
                  %1084 = vst [vmem:[%s956 + $0xfc] sm:$0xf] %v1083
                  %v1085 = vld [vmem:[%s955 + $0x200] sm:$0xf]
                  %1086 = vst [vmem:[%s956 + $0x100] sm:$0xf] %v1085
                  %v1087 = vld [vmem:[%s955 + $0x204] sm:$0xf]
                  %1088 = vst [vmem:[%s956 + $0x104] sm:$0xf] %v1087
                  %v1089 = vld [vmem:[%s955 + $0x210] sm:$0xf]
                  %1090 = vst [vmem:[%s956 + $0x108] sm:$0xf] %v1089
                  %v1091 = vld [vmem:[%s955 + $0x214] sm:$0xf]
                  %1092 = vst [vmem:[%s956 + $0x10c] sm:$0xf] %v1091
                  %v1093 = vld [vmem:[%s955 + $0x220] sm:$0xf]
                  %1094 = vst [vmem:[%s956 + $0x110] sm:$0xf] %v1093
                  %v1095 = vld [vmem:[%s955 + $0x224] sm:$0xf]
                  %1096 = vst [vmem:[%s956 + $0x114] sm:$0xf] %v1095
                  %v1097 = vld [vmem:[%s955 + $0x230] sm:$0xf]
                  %1098 = vst [vmem:[%s956 + $0x118] sm:$0xf] %v1097
                  %v1099 = vld [vmem:[%s955 + $0x234] sm:$0xf]
                  %1100 = vst [vmem:[%s956 + $0x11c] sm:$0xf] %v1099
                  %v1101 = vld [vmem:[%s955 + $0x240] sm:$0xf]
                  %1102 = vst [vmem:[%s956 + $0x120] sm:$0xf] %v1101
                  %v1103 = vld [vmem:[%s955 + $0x244] sm:$0xf]
                  %1104 = vst [vmem:[%s956 + $0x124] sm:$0xf] %v1103
                  %v1105 = vld [vmem:[%s955 + $0x250] sm:$0xf]
                  %1106 = vst [vmem:[%s956 + $0x128] sm:$0xf] %v1105
                  %v1107 = vld [vmem:[%s955 + $0x254] sm:$0xf]
                  %1108 = vst [vmem:[%s956 + $0x12c] sm:$0xf] %v1107
                  %v1109 = vld [vmem:[%s955 + $0x260] sm:$0xf]
                  %1110 = vst [vmem:[%s956 + $0x130] sm:$0xf] %v1109
                  %v1111 = vld [vmem:[%s955 + $0x264] sm:$0xf]
                  %1112 = vst [vmem:[%s956 + $0x134] sm:$0xf] %v1111
                  %v1113 = vld [vmem:[%s955 + $0x270] sm:$0xf]
                  %1114 = vst [vmem:[%s956 + $0x138] sm:$0xf] %v1113
                  %v1115 = vld [vmem:[%s955 + $0x274] sm:$0xf]
                  %1116 = vst [vmem:[%s956 + $0x13c] sm:$0xf] %v1115
                  %v1117 = vld [vmem:[%s955 + $0x280] sm:$0xf]
                  %1118 = vst [vmem:[%s956 + $0x140] sm:$0xf] %v1117
                  %v1119 = vld [vmem:[%s955 + $0x284] sm:$0xf]
                  %1120 = vst [vmem:[%s956 + $0x144] sm:$0xf] %v1119
                  %v1121 = vld [vmem:[%s955 + $0x290] sm:$0xf]
                  %1122 = vst [vmem:[%s956 + $0x148] sm:$0xf] %v1121
                  %v1123 = vld [vmem:[%s955 + $0x294] sm:$0xf]
                  %1124 = vst [vmem:[%s956 + $0x14c] sm:$0xf] %v1123
                  %v1125 = vld [vmem:[%s955 + $0x2a0] sm:$0xf]
                  %1126 = vst [vmem:[%s956 + $0x150] sm:$0xf] %v1125
                  %v1127 = vld [vmem:[%s955 + $0x2a4] sm:$0xf]
                  %1128 = vst [vmem:[%s956 + $0x154] sm:$0xf] %v1127
                  %v1129 = vld [vmem:[%s955 + $0x2b0] sm:$0xf]
                  %1130 = vst [vmem:[%s956 + $0x158] sm:$0xf] %v1129
                  %v1131 = vld [vmem:[%s955 + $0x2b4] sm:$0xf]
                  %1132 = vst [vmem:[%s956 + $0x15c] sm:$0xf] %v1131
                  %v1133 = vld [vmem:[%s955 + $0x2c0] sm:$0xf]
                  %1134 = vst [vmem:[%s956 + $0x160] sm:$0xf] %v1133
                  %v1135 = vld [vmem:[%s955 + $0x2c4] sm:$0xf]
                  %1136 = vst [vmem:[%s956 + $0x164] sm:$0xf] %v1135
                  %v1137 = vld [vmem:[%s955 + $0x2d0] sm:$0xf]
                  %1138 = vst [vmem:[%s956 + $0x168] sm:$0xf] %v1137
                  %v1139 = vld [vmem:[%s955 + $0x2d4] sm:$0xf]
                  %1140 = vst [vmem:[%s956 + $0x16c] sm:$0xf] %v1139
                  %v1141 = vld [vmem:[%s955 + $0x2e0] sm:$0xf]
                  %1142 = vst [vmem:[%s956 + $0x170] sm:$0xf] %v1141
                  %v1143 = vld [vmem:[%s955 + $0x2e4] sm:$0xf]
                  %1144 = vst [vmem:[%s956 + $0x174] sm:$0xf] %v1143
                  %v1145 = vld [vmem:[%s955 + $0x2f0] sm:$0xf]
                  %1146 = vst [vmem:[%s956 + $0x178] sm:$0xf] %v1145
                  %v1147 = vld [vmem:[%s955 + $0x2f4] sm:$0xf]
                  %1148 = vst [vmem:[%s956 + $0x17c] sm:$0xf] %v1147
                  %v1149 = vld [vmem:[%s955 + $0x300] sm:$0xf]
                  %1150 = vst [vmem:[%s956 + $0x180] sm:$0xf] %v1149
                  %v1151 = vld [vmem:[%s955 + $0x304] sm:$0xf]
                  %1152 = vst [vmem:[%s956 + $0x184] sm:$0xf] %v1151
                  %v1153 = vld [vmem:[%s955 + $0x310] sm:$0xf]
                  %1154 = vst [vmem:[%s956 + $0x188] sm:$0xf] %v1153
                  %v1155 = vld [vmem:[%s955 + $0x314] sm:$0xf]
                  %1156 = vst [vmem:[%s956 + $0x18c] sm:$0xf] %v1155
                  %v1157 = vld [vmem:[%s955 + $0x320] sm:$0xf]
                  %1158 = vst [vmem:[%s956 + $0x190] sm:$0xf] %v1157
                  %v1159 = vld [vmem:[%s955 + $0x324] sm:$0xf]
                  %1160 = vst [vmem:[%s956 + $0x194] sm:$0xf] %v1159
                  %v1161 = vld [vmem:[%s955 + $0x330] sm:$0xf]
                  %1162 = vst [vmem:[%s956 + $0x198] sm:$0xf] %v1161
                  %v1163 = vld [vmem:[%s955 + $0x334] sm:$0xf]
                  %1164 = vst [vmem:[%s956 + $0x19c] sm:$0xf] %v1163
                  %v1165 = vld [vmem:[%s955 + $0x340] sm:$0xf]
                  %1166 = vst [vmem:[%s956 + $0x1a0] sm:$0xf] %v1165
                  %v1167 = vld [vmem:[%s955 + $0x344] sm:$0xf]
                  %1168 = vst [vmem:[%s956 + $0x1a4] sm:$0xf] %v1167
                  %v1169 = vld [vmem:[%s955 + $0x350] sm:$0xf]
                  %1170 = vst [vmem:[%s956 + $0x1a8] sm:$0xf] %v1169
                  %v1171 = vld [vmem:[%s955 + $0x354] sm:$0xf]
                  %1172 = vst [vmem:[%s956 + $0x1ac] sm:$0xf] %v1171
                  %v1173 = vld [vmem:[%s955 + $0x360] sm:$0xf]
                  %1174 = vst [vmem:[%s956 + $0x1b0] sm:$0xf] %v1173
                  %v1175 = vld [vmem:[%s955 + $0x364] sm:$0xf]
                  %1176 = vst [vmem:[%s956 + $0x1b4] sm:$0xf] %v1175
                  %v1177 = vld [vmem:[%s955 + $0x370] sm:$0xf]
                  %1178 = vst [vmem:[%s956 + $0x1b8] sm:$0xf] %v1177
                  %v1179 = vld [vmem:[%s955 + $0x374] sm:$0xf]
                  %1180 = vst [vmem:[%s956 + $0x1bc] sm:$0xf] %v1179
                  %v1181 = vld [vmem:[%s955 + $0x380] sm:$0xf]
                  %1182 = vst [vmem:[%s956 + $0x1c0] sm:$0xf] %v1181
                  %v1183 = vld [vmem:[%s955 + $0x384] sm:$0xf]
                  %1184 = vst [vmem:[%s956 + $0x1c4] sm:$0xf] %v1183
                  %v1185 = vld [vmem:[%s955 + $0x390] sm:$0xf]
                  %1186 = vst [vmem:[%s956 + $0x1c8] sm:$0xf] %v1185
                  %v1187 = vld [vmem:[%s955 + $0x394] sm:$0xf]
                  %1188 = vst [vmem:[%s956 + $0x1cc] sm:$0xf] %v1187
                  %v1189 = vld [vmem:[%s955 + $0x3a0] sm:$0xf]
                  %1190 = vst [vmem:[%s956 + $0x1d0] sm:$0xf] %v1189
                  %v1191 = vld [vmem:[%s955 + $0x3a4] sm:$0xf]
                  %1192 = vst [vmem:[%s956 + $0x1d4] sm:$0xf] %v1191
                  %v1193 = vld [vmem:[%s955 + $0x3b0] sm:$0xf]
                  %1194 = vst [vmem:[%s956 + $0x1d8] sm:$0xf] %v1193
                  %v1195 = vld [vmem:[%s955 + $0x3b4] sm:$0xf]
                  %1196 = vst [vmem:[%s956 + $0x1dc] sm:$0xf] %v1195
                  %v1197 = vld [vmem:[%s955 + $0x3c0] sm:$0xf]
                  %1198 = vst [vmem:[%s956 + $0x1e0] sm:$0xf] %v1197
                  %v1199 = vld [vmem:[%s955 + $0x3c4] sm:$0xf]
                  %1200 = vst [vmem:[%s956 + $0x1e4] sm:$0xf] %v1199
                  %v1201 = vld [vmem:[%s955 + $0x3d0] sm:$0xf]
                  %1202 = vst [vmem:[%s956 + $0x1e8] sm:$0xf] %v1201
                  %v1203 = vld [vmem:[%s955 + $0x3d4] sm:$0xf]
                  %1204 = vst [vmem:[%s956 + $0x1ec] sm:$0xf] %v1203
                  %v1205 = vld [vmem:[%s955 + $0x3e0] sm:$0xf]
                  %1206 = vst [vmem:[%s956 + $0x1f0] sm:$0xf] %v1205
                  %v1207 = vld [vmem:[%s955 + $0x3e4] sm:$0xf]
                  %1208 = vst [vmem:[%s956 + $0x1f4] sm:$0xf] %v1207
                  %v1209 = vld [vmem:[%s955 + $0x3f0] sm:$0xf]
                  %1210 = vst [vmem:[%s956 + $0x1f8] sm:$0xf] %v1209
                  %v1211 = vld [vmem:[%s955 + $0x3f4] sm:$0xf]
                  %1212 = vst [vmem:[%s956 + $0x1fc] sm:$0xf] %v1211
                  %v1213 = vld [vmem:[%s955 + $0x400] sm:$0xf]
                  %1214 = vst [vmem:[%s956 + $0x200] sm:$0xf] %v1213
                  %v1215 = vld [vmem:[%s955 + $0x404] sm:$0xf]
                  %1216 = vst [vmem:[%s956 + $0x204] sm:$0xf] %v1215
                  %v1217 = vld [vmem:[%s955 + $0x410] sm:$0xf]
                  %1218 = vst [vmem:[%s956 + $0x208] sm:$0xf] %v1217
                  %v1219 = vld [vmem:[%s955 + $0x414] sm:$0xf]
                  %1220 = vst [vmem:[%s956 + $0x20c] sm:$0xf] %v1219
                  %v1221 = vld [vmem:[%s955 + $0x420] sm:$0xf]
                  %1222 = vst [vmem:[%s956 + $0x210] sm:$0xf] %v1221
                  %v1223 = vld [vmem:[%s955 + $0x424] sm:$0xf]
                  %1224 = vst [vmem:[%s956 + $0x214] sm:$0xf] %v1223
                  %v1225 = vld [vmem:[%s955 + $0x430] sm:$0xf]
                  %1226 = vst [vmem:[%s956 + $0x218] sm:$0xf] %v1225
                  %v1227 = vld [vmem:[%s955 + $0x434] sm:$0xf]
                  %1228 = vst [vmem:[%s956 + $0x21c] sm:$0xf] %v1227
                  %v1229 = vld [vmem:[%s955 + $0x440] sm:$0xf]
                  %1230 = vst [vmem:[%s956 + $0x220] sm:$0xf] %v1229
                  %v1231 = vld [vmem:[%s955 + $0x444] sm:$0xf]
                  %1232 = vst [vmem:[%s956 + $0x224] sm:$0xf] %v1231
                  %v1233 = vld [vmem:[%s955 + $0x450] sm:$0xf]
                  %1234 = vst [vmem:[%s956 + $0x228] sm:$0xf] %v1233
                  %v1235 = vld [vmem:[%s955 + $0x454] sm:$0xf]
                  %1236 = vst [vmem:[%s956 + $0x22c] sm:$0xf] %v1235
                  %v1237 = vld [vmem:[%s955 + $0x460] sm:$0xf]
                  %1238 = vst [vmem:[%s956 + $0x230] sm:$0xf] %v1237
                  %v1239 = vld [vmem:[%s955 + $0x464] sm:$0xf]
                  %1240 = vst [vmem:[%s956 + $0x234] sm:$0xf] %v1239
                  %v1241 = vld [vmem:[%s955 + $0x470] sm:$0xf]
                  %1242 = vst [vmem:[%s956 + $0x238] sm:$0xf] %v1241
                  %v1243 = vld [vmem:[%s955 + $0x474] sm:$0xf]
                  %1244 = vst [vmem:[%s956 + $0x23c] sm:$0xf] %v1243
                  %v1245 = vld [vmem:[%s955 + $0x480] sm:$0xf]
                  %1246 = vst [vmem:[%s956 + $0x240] sm:$0xf] %v1245
                  %v1247 = vld [vmem:[%s955 + $0x484] sm:$0xf]
                  %1248 = vst [vmem:[%s956 + $0x244] sm:$0xf] %v1247
                  %v1249 = vld [vmem:[%s955 + $0x490] sm:$0xf]
                  %1250 = vst [vmem:[%s956 + $0x248] sm:$0xf] %v1249
                  %v1251 = vld [vmem:[%s955 + $0x494] sm:$0xf]
                  %1252 = vst [vmem:[%s956 + $0x24c] sm:$0xf] %v1251
                  %v1253 = vld [vmem:[%s955 + $0x4a0] sm:$0xf]
                  %1254 = vst [vmem:[%s956 + $0x250] sm:$0xf] %v1253
                  %v1255 = vld [vmem:[%s955 + $0x4a4] sm:$0xf]
                  %1256 = vst [vmem:[%s956 + $0x254] sm:$0xf] %v1255
                  %v1257 = vld [vmem:[%s955 + $0x4b0] sm:$0xf]
                  %1258 = vst [vmem:[%s956 + $0x258] sm:$0xf] %v1257
                  %v1259 = vld [vmem:[%s955 + $0x4b4] sm:$0xf]
                  %1260 = vst [vmem:[%s956 + $0x25c] sm:$0xf] %v1259
                  %v1261 = vld [vmem:[%s955 + $0x4c0] sm:$0xf]
                  %1262 = vst [vmem:[%s956 + $0x260] sm:$0xf] %v1261
                  %v1263 = vld [vmem:[%s955 + $0x4c4] sm:$0xf]
                  %1264 = vst [vmem:[%s956 + $0x264] sm:$0xf] %v1263
                  %v1265 = vld [vmem:[%s955 + $0x4d0] sm:$0xf]
                  %1266 = vst [vmem:[%s956 + $0x268] sm:$0xf] %v1265
                  %v1267 = vld [vmem:[%s955 + $0x4d4] sm:$0xf]
                  %1268 = vst [vmem:[%s956 + $0x26c] sm:$0xf] %v1267
                  %v1269 = vld [vmem:[%s955 + $0x4e0] sm:$0xf]
                  %1270 = vst [vmem:[%s956 + $0x270] sm:$0xf] %v1269
                  %v1271 = vld [vmem:[%s955 + $0x4e4] sm:$0xf]
                  %1272 = vst [vmem:[%s956 + $0x274] sm:$0xf] %v1271
                  %v1273 = vld [vmem:[%s955 + $0x4f0] sm:$0xf]
                  %1274 = vst [vmem:[%s956 + $0x278] sm:$0xf] %v1273
                  %v1275 = vld [vmem:[%s955 + $0x4f4] sm:$0xf]
                  %1276 = vst [vmem:[%s956 + $0x27c] sm:$0xf] %v1275
                  %v1277 = vld [vmem:[%s955 + $0x500] sm:$0xf]
                  %1278 = vst [vmem:[%s956 + $0x280] sm:$0xf] %v1277
                  %v1279 = vld [vmem:[%s955 + $0x504] sm:$0xf]
                  %1280 = vst [vmem:[%s956 + $0x284] sm:$0xf] %v1279
                  %v1281 = vld [vmem:[%s955 + $0x510] sm:$0xf]
                  %1282 = vst [vmem:[%s956 + $0x288] sm:$0xf] %v1281
                  %v1283 = vld [vmem:[%s955 + $0x514] sm:$0xf]
                  %1284 = vst [vmem:[%s956 + $0x28c] sm:$0xf] %v1283
                  %v1285 = vld [vmem:[%s955 + $0x520] sm:$0xf]
                  %1286 = vst [vmem:[%s956 + $0x290] sm:$0xf] %v1285
                  %v1287 = vld [vmem:[%s955 + $0x524] sm:$0xf]
                  %1288 = vst [vmem:[%s956 + $0x294] sm:$0xf] %v1287
                  %v1289 = vld [vmem:[%s955 + $0x530] sm:$0xf]
                  %1290 = vst [vmem:[%s956 + $0x298] sm:$0xf] %v1289
                  %v1291 = vld [vmem:[%s955 + $0x534] sm:$0xf]
                  %1292 = vst [vmem:[%s956 + $0x29c] sm:$0xf] %v1291
                  %v1293 = vld [vmem:[%s955 + $0x540] sm:$0xf]
                  %1294 = vst [vmem:[%s956 + $0x2a0] sm:$0xf] %v1293
                  %v1295 = vld [vmem:[%s955 + $0x544] sm:$0xf]
                  %1296 = vst [vmem:[%s956 + $0x2a4] sm:$0xf] %v1295
                  %v1297 = vld [vmem:[%s955 + $0x550] sm:$0xf]
                  %1298 = vst [vmem:[%s956 + $0x2a8] sm:$0xf] %v1297
                  %v1299 = vld [vmem:[%s955 + $0x554] sm:$0xf]
                  %1300 = vst [vmem:[%s956 + $0x2ac] sm:$0xf] %v1299
                  %v1301 = vld [vmem:[%s955 + $0x560] sm:$0xf]
                  %1302 = vst [vmem:[%s956 + $0x2b0] sm:$0xf] %v1301
                  %v1303 = vld [vmem:[%s955 + $0x564] sm:$0xf]
                  %1304 = vst [vmem:[%s956 + $0x2b4] sm:$0xf] %v1303
                  %v1305 = vld [vmem:[%s955 + $0x570] sm:$0xf]
                  %1306 = vst [vmem:[%s956 + $0x2b8] sm:$0xf] %v1305
                  %v1307 = vld [vmem:[%s955 + $0x574] sm:$0xf]
                  %1308 = vst [vmem:[%s956 + $0x2bc] sm:$0xf] %v1307
                  %v1309 = vld [vmem:[%s955 + $0x580] sm:$0xf]
                  %1310 = vst [vmem:[%s956 + $0x2c0] sm:$0xf] %v1309
                  %v1311 = vld [vmem:[%s955 + $0x584] sm:$0xf]
                  %1312 = vst [vmem:[%s956 + $0x2c4] sm:$0xf] %v1311
                  %v1313 = vld [vmem:[%s955 + $0x590] sm:$0xf]
                  %1314 = vst [vmem:[%s956 + $0x2c8] sm:$0xf] %v1313
                  %v1315 = vld [vmem:[%s955 + $0x594] sm:$0xf]
                  %1316 = vst [vmem:[%s956 + $0x2cc] sm:$0xf] %v1315
                  %v1317 = vld [vmem:[%s955 + $0x5a0] sm:$0xf]
                  %1318 = vst [vmem:[%s956 + $0x2d0] sm:$0xf] %v1317
                  %v1319 = vld [vmem:[%s955 + $0x5a4] sm:$0xf]
                  %1320 = vst [vmem:[%s956 + $0x2d4] sm:$0xf] %v1319
                  %v1321 = vld [vmem:[%s955 + $0x5b0] sm:$0xf]
                  %1322 = vst [vmem:[%s956 + $0x2d8] sm:$0xf] %v1321
                  %v1323 = vld [vmem:[%s955 + $0x5b4] sm:$0xf]
                  %1324 = vst [vmem:[%s956 + $0x2dc] sm:$0xf] %v1323
                  %v1325 = vld [vmem:[%s955 + $0x5c0] sm:$0xf]
                  %1326 = vst [vmem:[%s956 + $0x2e0] sm:$0xf] %v1325
                  %v1327 = vld [vmem:[%s955 + $0x5c4] sm:$0xf]
                  %1328 = vst [vmem:[%s956 + $0x2e4] sm:$0xf] %v1327
                  %v1329 = vld [vmem:[%s955 + $0x5d0] sm:$0xf]
                  %1330 = vst [vmem:[%s956 + $0x2e8] sm:$0xf] %v1329
                  %v1331 = vld [vmem:[%s955 + $0x5d4] sm:$0xf]
                  %1332 = vst [vmem:[%s956 + $0x2ec] sm:$0xf] %v1331
                  %v1333 = vld [vmem:[%s955 + $0x5e0] sm:$0xf]
                  %1334 = vst [vmem:[%s956 + $0x2f0] sm:$0xf] %v1333
                  %v1335 = vld [vmem:[%s955 + $0x5e4] sm:$0xf]
                  %1336 = vst [vmem:[%s956 + $0x2f4] sm:$0xf] %v1335
                  %v1337 = vld [vmem:[%s955 + $0x5f0] sm:$0xf]
                  %1338 = vst [vmem:[%s956 + $0x2f8] sm:$0xf] %v1337
                  %v1339 = vld [vmem:[%s955 + $0x5f4] sm:$0xf]
                  %1340 = vst [vmem:[%s956 + $0x2fc] sm:$0xf] %v1339
                  %v1341 = vld [vmem:[%s955 + $0x600] sm:$0xf]
                  %1342 = vst [vmem:[%s956 + $0x300] sm:$0xf] %v1341
                  %v1343 = vld [vmem:[%s955 + $0x604] sm:$0xf]
                  %1344 = vst [vmem:[%s956 + $0x304] sm:$0xf] %v1343
                  %v1345 = vld [vmem:[%s955 + $0x610] sm:$0xf]
                  %1346 = vst [vmem:[%s956 + $0x308] sm:$0xf] %v1345
                  %v1347 = vld [vmem:[%s955 + $0x614] sm:$0xf]
                  %1348 = vst [vmem:[%s956 + $0x30c] sm:$0xf] %v1347
                  %v1349 = vld [vmem:[%s955 + $0x620] sm:$0xf]
                  %1350 = vst [vmem:[%s956 + $0x310] sm:$0xf] %v1349
                  %v1351 = vld [vmem:[%s955 + $0x624] sm:$0xf]
                  %1352 = vst [vmem:[%s956 + $0x314] sm:$0xf] %v1351
                  %v1353 = vld [vmem:[%s955 + $0x630] sm:$0xf]
                  %1354 = vst [vmem:[%s956 + $0x318] sm:$0xf] %v1353
                  %v1355 = vld [vmem:[%s955 + $0x634] sm:$0xf]
                  %1356 = vst [vmem:[%s956 + $0x31c] sm:$0xf] %v1355
                  %v1357 = vld [vmem:[%s955 + $0x640] sm:$0xf]
                  %1358 = vst [vmem:[%s956 + $0x320] sm:$0xf] %v1357
                  %v1359 = vld [vmem:[%s955 + $0x644] sm:$0xf]
                  %1360 = vst [vmem:[%s956 + $0x324] sm:$0xf] %v1359
                  %v1361 = vld [vmem:[%s955 + $0x650] sm:$0xf]
                  %1362 = vst [vmem:[%s956 + $0x328] sm:$0xf] %v1361
                  %v1363 = vld [vmem:[%s955 + $0x654] sm:$0xf]
                  %1364 = vst [vmem:[%s956 + $0x32c] sm:$0xf] %v1363
                  %v1365 = vld [vmem:[%s955 + $0x660] sm:$0xf]
                  %1366 = vst [vmem:[%s956 + $0x330] sm:$0xf] %v1365
                  %v1367 = vld [vmem:[%s955 + $0x664] sm:$0xf]
                  %1368 = vst [vmem:[%s956 + $0x334] sm:$0xf] %v1367
                  %v1369 = vld [vmem:[%s955 + $0x670] sm:$0xf]
                  %1370 = vst [vmem:[%s956 + $0x338] sm:$0xf] %v1369
                  %v1371 = vld [vmem:[%s955 + $0x674] sm:$0xf]
                  %1372 = vst [vmem:[%s956 + $0x33c] sm:$0xf] %v1371
                  %v1373 = vld [vmem:[%s955 + $0x680] sm:$0xf]
                  %1374 = vst [vmem:[%s956 + $0x340] sm:$0xf] %v1373
                  %v1375 = vld [vmem:[%s955 + $0x684] sm:$0xf]
                  %1376 = vst [vmem:[%s956 + $0x344] sm:$0xf] %v1375
                  %v1377 = vld [vmem:[%s955 + $0x690] sm:$0xf]
                  %1378 = vst [vmem:[%s956 + $0x348] sm:$0xf] %v1377
                  %v1379 = vld [vmem:[%s955 + $0x694] sm:$0xf]
                  %1380 = vst [vmem:[%s956 + $0x34c] sm:$0xf] %v1379
                  %v1381 = vld [vmem:[%s955 + $0x6a0] sm:$0xf]
                  %1382 = vst [vmem:[%s956 + $0x350] sm:$0xf] %v1381
                  %v1383 = vld [vmem:[%s955 + $0x6a4] sm:$0xf]
                  %1384 = vst [vmem:[%s956 + $0x354] sm:$0xf] %v1383
                  %v1385 = vld [vmem:[%s955 + $0x6b0] sm:$0xf]
                  %1386 = vst [vmem:[%s956 + $0x358] sm:$0xf] %v1385
                  %v1387 = vld [vmem:[%s955 + $0x6b4] sm:$0xf]
                  %1388 = vst [vmem:[%s956 + $0x35c] sm:$0xf] %v1387
                  %v1389 = vld [vmem:[%s955 + $0x6c0] sm:$0xf]
                  %1390 = vst [vmem:[%s956 + $0x360] sm:$0xf] %v1389
                  %v1391 = vld [vmem:[%s955 + $0x6c4] sm:$0xf]
                  %1392 = vst [vmem:[%s956 + $0x364] sm:$0xf] %v1391
                  %v1393 = vld [vmem:[%s955 + $0x6d0] sm:$0xf]
                  %1394 = vst [vmem:[%s956 + $0x368] sm:$0xf] %v1393
                  %v1395 = vld [vmem:[%s955 + $0x6d4] sm:$0xf]
                  %1396 = vst [vmem:[%s956 + $0x36c] sm:$0xf] %v1395
                  %v1397 = vld [vmem:[%s955 + $0x6e0] sm:$0xf]
                  %1398 = vst [vmem:[%s956 + $0x370] sm:$0xf] %v1397
                  %v1399 = vld [vmem:[%s955 + $0x6e4] sm:$0xf]
                  %1400 = vst [vmem:[%s956 + $0x374] sm:$0xf] %v1399
                  %v1401 = vld [vmem:[%s955 + $0x6f0] sm:$0xf]
                  %1402 = vst [vmem:[%s956 + $0x378] sm:$0xf] %v1401
                  %v1403 = vld [vmem:[%s955 + $0x6f4] sm:$0xf]
                  %1404 = vst [vmem:[%s956 + $0x37c] sm:$0xf] %v1403
                  %v1405 = vld [vmem:[%s955 + $0x700] sm:$0xf]
                  %1406 = vst [vmem:[%s956 + $0x380] sm:$0xf] %v1405
                  %v1407 = vld [vmem:[%s955 + $0x704] sm:$0xf]
                  %1408 = vst [vmem:[%s956 + $0x384] sm:$0xf] %v1407
                  %v1409 = vld [vmem:[%s955 + $0x710] sm:$0xf]
                  %1410 = vst [vmem:[%s956 + $0x388] sm:$0xf] %v1409
                  %v1411 = vld [vmem:[%s955 + $0x714] sm:$0xf]
                  %1412 = vst [vmem:[%s956 + $0x38c] sm:$0xf] %v1411
                  %v1413 = vld [vmem:[%s955 + $0x720] sm:$0xf]
                  %1414 = vst [vmem:[%s956 + $0x390] sm:$0xf] %v1413
                  %v1415 = vld [vmem:[%s955 + $0x724] sm:$0xf]
                  %1416 = vst [vmem:[%s956 + $0x394] sm:$0xf] %v1415
                  %v1417 = vld [vmem:[%s955 + $0x730] sm:$0xf]
                  %1418 = vst [vmem:[%s956 + $0x398] sm:$0xf] %v1417
                  %v1419 = vld [vmem:[%s955 + $0x734] sm:$0xf]
                  %1420 = vst [vmem:[%s956 + $0x39c] sm:$0xf] %v1419
                  %v1421 = vld [vmem:[%s955 + $0x740] sm:$0xf]
                  %1422 = vst [vmem:[%s956 + $0x3a0] sm:$0xf] %v1421
                  %v1423 = vld [vmem:[%s955 + $0x744] sm:$0xf]
                  %1424 = vst [vmem:[%s956 + $0x3a4] sm:$0xf] %v1423
                  %v1425 = vld [vmem:[%s955 + $0x750] sm:$0xf]
                  %1426 = vst [vmem:[%s956 + $0x3a8] sm:$0xf] %v1425
                  %v1427 = vld [vmem:[%s955 + $0x754] sm:$0xf]
                  %1428 = vst [vmem:[%s956 + $0x3ac] sm:$0xf] %v1427
                  %v1429 = vld [vmem:[%s955 + $0x760] sm:$0xf]
                  %1430 = vst [vmem:[%s956 + $0x3b0] sm:$0xf] %v1429
                  %v1431 = vld [vmem:[%s955 + $0x764] sm:$0xf]
                  %1432 = vst [vmem:[%s956 + $0x3b4] sm:$0xf] %v1431
                  %v1433 = vld [vmem:[%s955 + $0x770] sm:$0xf]
                  %1434 = vst [vmem:[%s956 + $0x3b8] sm:$0xf] %v1433
                  %v1435 = vld [vmem:[%s955 + $0x774] sm:$0xf]
                  %1436 = vst [vmem:[%s956 + $0x3bc] sm:$0xf] %v1435
                  %v1437 = vld [vmem:[%s955 + $0x780] sm:$0xf]
                  %1438 = vst [vmem:[%s956 + $0x3c0] sm:$0xf] %v1437
                  %v1439 = vld [vmem:[%s955 + $0x784] sm:$0xf]
                  %1440 = vst [vmem:[%s956 + $0x3c4] sm:$0xf] %v1439
                  %v1441 = vld [vmem:[%s955 + $0x790] sm:$0xf]
                  %1442 = vst [vmem:[%s956 + $0x3c8] sm:$0xf] %v1441
                  %v1443 = vld [vmem:[%s955 + $0x794] sm:$0xf]
                  %1444 = vst [vmem:[%s956 + $0x3cc] sm:$0xf] %v1443
                  %v1445 = vld [vmem:[%s955 + $0x7a0] sm:$0xf]
                  %1446 = vst [vmem:[%s956 + $0x3d0] sm:$0xf] %v1445
                  %v1447 = vld [vmem:[%s955 + $0x7a4] sm:$0xf]
                  %1448 = vst [vmem:[%s956 + $0x3d4] sm:$0xf] %v1447
                  %v1449 = vld [vmem:[%s955 + $0x7b0] sm:$0xf]
                  %1450 = vst [vmem:[%s956 + $0x3d8] sm:$0xf] %v1449
                  %v1451 = vld [vmem:[%s955 + $0x7b4] sm:$0xf]
                  %1452 = vst [vmem:[%s956 + $0x3dc] sm:$0xf] %v1451
                  %v1453 = vld [vmem:[%s955 + $0x7c0] sm:$0xf]
                  %1454 = vst [vmem:[%s956 + $0x3e0] sm:$0xf] %v1453
                  %v1455 = vld [vmem:[%s955 + $0x7c4] sm:$0xf]
                  %1456 = vst [vmem:[%s956 + $0x3e4] sm:$0xf] %v1455
                  %v1457 = vld [vmem:[%s955 + $0x7d0] sm:$0xf]
                  %1458 = vst [vmem:[%s956 + $0x3e8] sm:$0xf] %v1457
                  %v1459 = vld [vmem:[%s955 + $0x7d4] sm:$0xf]
                  %1460 = vst [vmem:[%s956 + $0x3ec] sm:$0xf] %v1459
                  %v1461 = vld [vmem:[%s955 + $0x7e0] sm:$0xf]
                  %1462 = vst [vmem:[%s956 + $0x3f0] sm:$0xf] %v1461
                  %v1463 = vld [vmem:[%s955 + $0x7e4] sm:$0xf]
                  %1464 = vst [vmem:[%s956 + $0x3f4] sm:$0xf] %v1463
                  %v1465 = vld [vmem:[%s955 + $0x7f0] sm:$0xf]
                  %1466 = vst [vmem:[%s956 + $0x3f8] sm:$0xf] %v1465
                  %v1467 = vld [vmem:[%s955 + $0x7f4] sm:$0xf]
                  %1468 = vst [vmem:[%s956 + $0x3fc] sm:$0xf] %v1467
                  %v1469 = vld [vmem:[%s955 + $0x800] sm:$0xf]
                  %1470 = vst [vmem:[%s956 + $0x400] sm:$0xf] %v1469
                  %v1471 = vld [vmem:[%s955 + $0x804] sm:$0xf]
                  %1472 = vst [vmem:[%s956 + $0x404] sm:$0xf] %v1471
                  %v1473 = vld [vmem:[%s955 + $0x810] sm:$0xf]
                  %1474 = vst [vmem:[%s956 + $0x408] sm:$0xf] %v1473
                  %v1475 = vld [vmem:[%s955 + $0x814] sm:$0xf]
                  %1476 = vst [vmem:[%s956 + $0x40c] sm:$0xf] %v1475
                  %v1477 = vld [vmem:[%s955 + $0x820] sm:$0xf]
                  %1478 = vst [vmem:[%s956 + $0x410] sm:$0xf] %v1477
                  %v1479 = vld [vmem:[%s955 + $0x824] sm:$0xf]
                  %1480 = vst [vmem:[%s956 + $0x414] sm:$0xf] %v1479
                  %v1481 = vld [vmem:[%s955 + $0x830] sm:$0xf]
                  %1482 = vst [vmem:[%s956 + $0x418] sm:$0xf] %v1481
                  %v1483 = vld [vmem:[%s955 + $0x834] sm:$0xf]
                  %1484 = vst [vmem:[%s956 + $0x41c] sm:$0xf] %v1483
                  %v1485 = vld [vmem:[%s955 + $0x840] sm:$0xf]
                  %1486 = vst [vmem:[%s956 + $0x420] sm:$0xf] %v1485
                  %v1487 = vld [vmem:[%s955 + $0x844] sm:$0xf]
                  %1488 = vst [vmem:[%s956 + $0x424] sm:$0xf] %v1487
                  %v1489 = vld [vmem:[%s955 + $0x850] sm:$0xf]
                  %1490 = vst [vmem:[%s956 + $0x428] sm:$0xf] %v1489
                  %v1491 = vld [vmem:[%s955 + $0x854] sm:$0xf]
                  %1492 = vst [vmem:[%s956 + $0x42c] sm:$0xf] %v1491
                  %v1493 = vld [vmem:[%s955 + $0x860] sm:$0xf]
                  %1494 = vst [vmem:[%s956 + $0x430] sm:$0xf] %v1493
                  %v1495 = vld [vmem:[%s955 + $0x864] sm:$0xf]
                  %1496 = vst [vmem:[%s956 + $0x434] sm:$0xf] %v1495
                  %v1497 = vld [vmem:[%s955 + $0x870] sm:$0xf]
                  %1498 = vst [vmem:[%s956 + $0x438] sm:$0xf] %v1497
                  %v1499 = vld [vmem:[%s955 + $0x874] sm:$0xf]
                  %1500 = vst [vmem:[%s956 + $0x43c] sm:$0xf] %v1499
                  %v1501 = vld [vmem:[%s955 + $0x880] sm:$0xf]
                  %1502 = vst [vmem:[%s956 + $0x440] sm:$0xf] %v1501
                  %v1503 = vld [vmem:[%s955 + $0x884] sm:$0xf]
                  %1504 = vst [vmem:[%s956 + $0x444] sm:$0xf] %v1503
                  %v1505 = vld [vmem:[%s955 + $0x890] sm:$0xf]
                  %1506 = vst [vmem:[%s956 + $0x448] sm:$0xf] %v1505
                  %v1507 = vld [vmem:[%s955 + $0x894] sm:$0xf]
                  %1508 = vst [vmem:[%s956 + $0x44c] sm:$0xf] %v1507
                  %v1509 = vld [vmem:[%s955 + $0x8a0] sm:$0xf]
                  %1510 = vst [vmem:[%s956 + $0x450] sm:$0xf] %v1509
                  %v1511 = vld [vmem:[%s955 + $0x8a4] sm:$0xf]
                  %1512 = vst [vmem:[%s956 + $0x454] sm:$0xf] %v1511
                  %v1513 = vld [vmem:[%s955 + $0x8b0] sm:$0xf]
                  %1514 = vst [vmem:[%s956 + $0x458] sm:$0xf] %v1513
                  %v1515 = vld [vmem:[%s955 + $0x8b4] sm:$0xf]
                  %1516 = vst [vmem:[%s956 + $0x45c] sm:$0xf] %v1515
                  %v1517 = vld [vmem:[%s955 + $0x8c0] sm:$0xf]
                  %1518 = vst [vmem:[%s956 + $0x460] sm:$0xf] %v1517
                  %v1519 = vld [vmem:[%s955 + $0x8c4] sm:$0xf]
                  %1520 = vst [vmem:[%s956 + $0x464] sm:$0xf] %v1519
                  %v1521 = vld [vmem:[%s955 + $0x8d0] sm:$0xf]
                  %1522 = vst [vmem:[%s956 + $0x468] sm:$0xf] %v1521
                  %v1523 = vld [vmem:[%s955 + $0x8d4] sm:$0xf]
                  %1524 = vst [vmem:[%s956 + $0x46c] sm:$0xf] %v1523
                  %v1525 = vld [vmem:[%s955 + $0x8e0] sm:$0xf]
                  %1526 = vst [vmem:[%s956 + $0x470] sm:$0xf] %v1525
                  %v1527 = vld [vmem:[%s955 + $0x8e4] sm:$0xf]
                  %1528 = vst [vmem:[%s956 + $0x474] sm:$0xf] %v1527
                  %v1529 = vld [vmem:[%s955 + $0x8f0] sm:$0xf]
                  %1530 = vst [vmem:[%s956 + $0x478] sm:$0xf] %v1529
                  %v1531 = vld [vmem:[%s955 + $0x8f4] sm:$0xf]
                  %1532 = vst [vmem:[%s956 + $0x47c] sm:$0xf] %v1531
                  %v1533 = vld [vmem:[%s955 + $0x900] sm:$0xf]
                  %1534 = vst [vmem:[%s956 + $0x480] sm:$0xf] %v1533
                  %v1535 = vld [vmem:[%s955 + $0x904] sm:$0xf]
                  %1536 = vst [vmem:[%s956 + $0x484] sm:$0xf] %v1535
                  %v1537 = vld [vmem:[%s955 + $0x910] sm:$0xf]
                  %1538 = vst [vmem:[%s956 + $0x488] sm:$0xf] %v1537
                  %v1539 = vld [vmem:[%s955 + $0x914] sm:$0xf]
                  %1540 = vst [vmem:[%s956 + $0x48c] sm:$0xf] %v1539
                  %v1541 = vld [vmem:[%s955 + $0x920] sm:$0xf]
                  %1542 = vst [vmem:[%s956 + $0x490] sm:$0xf] %v1541
                  %v1543 = vld [vmem:[%s955 + $0x924] sm:$0xf]
                  %1544 = vst [vmem:[%s956 + $0x494] sm:$0xf] %v1543
                  %v1545 = vld [vmem:[%s955 + $0x930] sm:$0xf]
                  %1546 = vst [vmem:[%s956 + $0x498] sm:$0xf] %v1545
                  %v1547 = vld [vmem:[%s955 + $0x934] sm:$0xf]
                  %1548 = vst [vmem:[%s956 + $0x49c] sm:$0xf] %v1547
                  %v1549 = vld [vmem:[%s955 + $0x940] sm:$0xf]
                  %1550 = vst [vmem:[%s956 + $0x4a0] sm:$0xf] %v1549
                  %v1551 = vld [vmem:[%s955 + $0x944] sm:$0xf]
                  %1552 = vst [vmem:[%s956 + $0x4a4] sm:$0xf] %v1551
                  %v1553 = vld [vmem:[%s955 + $0x950] sm:$0xf]
                  %1554 = vst [vmem:[%s956 + $0x4a8] sm:$0xf] %v1553
                  %v1555 = vld [vmem:[%s955 + $0x954] sm:$0xf]
                  %1556 = vst [vmem:[%s956 + $0x4ac] sm:$0xf] %v1555
                  %v1557 = vld [vmem:[%s955 + $0x960] sm:$0xf]
                  %1558 = vst [vmem:[%s956 + $0x4b0] sm:$0xf] %v1557
                  %v1559 = vld [vmem:[%s955 + $0x964] sm:$0xf]
                  %1560 = vst [vmem:[%s956 + $0x4b4] sm:$0xf] %v1559
                  %v1561 = vld [vmem:[%s955 + $0x970] sm:$0xf]
                  %1562 = vst [vmem:[%s956 + $0x4b8] sm:$0xf] %v1561
                  %v1563 = vld [vmem:[%s955 + $0x974] sm:$0xf]
                  %1564 = vst [vmem:[%s956 + $0x4bc] sm:$0xf] %v1563
                  %v1565 = vld [vmem:[%s955 + $0x980] sm:$0xf]
                  %1566 = vst [vmem:[%s956 + $0x4c0] sm:$0xf] %v1565
                  %v1567 = vld [vmem:[%s955 + $0x984] sm:$0xf]
                  %1568 = vst [vmem:[%s956 + $0x4c4] sm:$0xf] %v1567
                  %v1569 = vld [vmem:[%s955 + $0x990] sm:$0xf]
                  %1570 = vst [vmem:[%s956 + $0x4c8] sm:$0xf] %v1569
                  %v1571 = vld [vmem:[%s955 + $0x994] sm:$0xf]
                  %1572 = vst [vmem:[%s956 + $0x4cc] sm:$0xf] %v1571
                  %v1573 = vld [vmem:[%s955 + $0x9a0] sm:$0xf]
                  %1574 = vst [vmem:[%s956 + $0x4d0] sm:$0xf] %v1573
                  %v1575 = vld [vmem:[%s955 + $0x9a4] sm:$0xf]
                  %1576 = vst [vmem:[%s956 + $0x4d4] sm:$0xf] %v1575
                  %v1577 = vld [vmem:[%s955 + $0x9b0] sm:$0xf]
                  %1578 = vst [vmem:[%s956 + $0x4d8] sm:$0xf] %v1577
                  %v1579 = vld [vmem:[%s955 + $0x9b4] sm:$0xf]
                  %1580 = vst [vmem:[%s956 + $0x4dc] sm:$0xf] %v1579
                  %v1581 = vld [vmem:[%s955 + $0x9c0] sm:$0xf]
                  %1582 = vst [vmem:[%s956 + $0x4e0] sm:$0xf] %v1581
                  %v1583 = vld [vmem:[%s955 + $0x9c4] sm:$0xf]
                  %1584 = vst [vmem:[%s956 + $0x4e4] sm:$0xf] %v1583
                  %v1585 = vld [vmem:[%s955 + $0x9d0] sm:$0xf]
                  %1586 = vst [vmem:[%s956 + $0x4e8] sm:$0xf] %v1585
                  %v1587 = vld [vmem:[%s955 + $0x9d4] sm:$0xf]
                  %1588 = vst [vmem:[%s956 + $0x4ec] sm:$0xf] %v1587
                  %v1589 = vld [vmem:[%s955 + $0x9e0] sm:$0xf]
                  %1590 = vst [vmem:[%s956 + $0x4f0] sm:$0xf] %v1589
                  %v1591 = vld [vmem:[%s955 + $0x9e4] sm:$0xf]
                  %1592 = vst [vmem:[%s956 + $0x4f4] sm:$0xf] %v1591
                  %v1593 = vld [vmem:[%s955 + $0x9f0] sm:$0xf]
                  %1594 = vst [vmem:[%s956 + $0x4f8] sm:$0xf] %v1593
                  %v1595 = vld [vmem:[%s955 + $0x9f4] sm:$0xf]
                  %1596 = vst [vmem:[%s956 + $0x4fc] sm:$0xf] %v1595
                  %v1597 = vld [vmem:[%s955 + $0xa00] sm:$0xf]
                  %1598 = vst [vmem:[%s956 + $0x500] sm:$0xf] %v1597
                  %v1599 = vld [vmem:[%s955 + $0xa04] sm:$0xf]
                  %1600 = vst [vmem:[%s956 + $0x504] sm:$0xf] %v1599
                  %v1601 = vld [vmem:[%s955 + $0xa10] sm:$0xf]
                  %1602 = vst [vmem:[%s956 + $0x508] sm:$0xf] %v1601
                  %v1603 = vld [vmem:[%s955 + $0xa14] sm:$0xf]
                  %1604 = vst [vmem:[%s956 + $0x50c] sm:$0xf] %v1603
                  %v1605 = vld [vmem:[%s955 + $0xa20] sm:$0xf]
                  %1606 = vst [vmem:[%s956 + $0x510] sm:$0xf] %v1605
                  %v1607 = vld [vmem:[%s955 + $0xa24] sm:$0xf]
                  %1608 = vst [vmem:[%s956 + $0x514] sm:$0xf] %v1607
                  %v1609 = vld [vmem:[%s955 + $0xa30] sm:$0xf]
                  %1610 = vst [vmem:[%s956 + $0x518] sm:$0xf] %v1609
                  %v1611 = vld [vmem:[%s955 + $0xa34] sm:$0xf]
                  %1612 = vst [vmem:[%s956 + $0x51c] sm:$0xf] %v1611
                  %v1613 = vld [vmem:[%s955 + $0xa40] sm:$0xf]
                  %1614 = vst [vmem:[%s956 + $0x520] sm:$0xf] %v1613
                  %v1615 = vld [vmem:[%s955 + $0xa44] sm:$0xf]
                  %1616 = vst [vmem:[%s956 + $0x524] sm:$0xf] %v1615
                  %v1617 = vld [vmem:[%s955 + $0xa50] sm:$0xf]
                  %1618 = vst [vmem:[%s956 + $0x528] sm:$0xf] %v1617
                  %v1619 = vld [vmem:[%s955 + $0xa54] sm:$0xf]
                  %1620 = vst [vmem:[%s956 + $0x52c] sm:$0xf] %v1619
                  %v1621 = vld [vmem:[%s955 + $0xa60] sm:$0xf]
                  %1622 = vst [vmem:[%s956 + $0x530] sm:$0xf] %v1621
                  %v1623 = vld [vmem:[%s955 + $0xa64] sm:$0xf]
                  %1624 = vst [vmem:[%s956 + $0x534] sm:$0xf] %v1623
                  %v1625 = vld [vmem:[%s955 + $0xa70] sm:$0xf]
                  %1626 = vst [vmem:[%s956 + $0x538] sm:$0xf] %v1625
                  %v1627 = vld [vmem:[%s955 + $0xa74] sm:$0xf]
                  %1628 = vst [vmem:[%s956 + $0x53c] sm:$0xf] %v1627
                  %v1629 = vld [vmem:[%s955 + $0xa80] sm:$0xf]
                  %1630 = vst [vmem:[%s956 + $0x540] sm:$0xf] %v1629
                  %v1631 = vld [vmem:[%s955 + $0xa84] sm:$0xf]
                  %1632 = vst [vmem:[%s956 + $0x544] sm:$0xf] %v1631
                  %v1633 = vld [vmem:[%s955 + $0xa90] sm:$0xf]
                  %1634 = vst [vmem:[%s956 + $0x548] sm:$0xf] %v1633
                  %v1635 = vld [vmem:[%s955 + $0xa94] sm:$0xf]
                  %1636 = vst [vmem:[%s956 + $0x54c] sm:$0xf] %v1635
                  %v1637 = vld [vmem:[%s955 + $0xaa0] sm:$0xf]
                  %1638 = vst [vmem:[%s956 + $0x550] sm:$0xf] %v1637
                  %v1639 = vld [vmem:[%s955 + $0xaa4] sm:$0xf]
                  %1640 = vst [vmem:[%s956 + $0x554] sm:$0xf] %v1639
                  %v1641 = vld [vmem:[%s955 + $0xab0] sm:$0xf]
                  %1642 = vst [vmem:[%s956 + $0x558] sm:$0xf] %v1641
                  %v1643 = vld [vmem:[%s955 + $0xab4] sm:$0xf]
                  %1644 = vst [vmem:[%s956 + $0x55c] sm:$0xf] %v1643
                  %v1645 = vld [vmem:[%s955 + $0xac0] sm:$0xf]
                  %1646 = vst [vmem:[%s956 + $0x560] sm:$0xf] %v1645
                  %v1647 = vld [vmem:[%s955 + $0xac4] sm:$0xf]
                  %1648 = vst [vmem:[%s956 + $0x564] sm:$0xf] %v1647
                  %v1649 = vld [vmem:[%s955 + $0xad0] sm:$0xf]
                  %1650 = vst [vmem:[%s956 + $0x568] sm:$0xf] %v1649
                  %v1651 = vld [vmem:[%s955 + $0xad4] sm:$0xf]
                  %1652 = vst [vmem:[%s956 + $0x56c] sm:$0xf] %v1651
                  %v1653 = vld [vmem:[%s955 + $0xae0] sm:$0xf]
                  %1654 = vst [vmem:[%s956 + $0x570] sm:$0xf] %v1653
                  %v1655 = vld [vmem:[%s955 + $0xae4] sm:$0xf]
                  %1656 = vst [vmem:[%s956 + $0x574] sm:$0xf] %v1655
                  %v1657 = vld [vmem:[%s955 + $0xaf0] sm:$0xf]
                  %1658 = vst [vmem:[%s956 + $0x578] sm:$0xf] %v1657
                  %v1659 = vld [vmem:[%s955 + $0xaf4] sm:$0xf]
                  %1660 = vst [vmem:[%s956 + $0x57c] sm:$0xf] %v1659
                  %v1661 = vld [vmem:[%s955 + $0xb00] sm:$0xf]
                  %1662 = vst [vmem:[%s956 + $0x580] sm:$0xf] %v1661
                  %v1663 = vld [vmem:[%s955 + $0xb04] sm:$0xf]
                  %1664 = vst [vmem:[%s956 + $0x584] sm:$0xf] %v1663
                  %v1665 = vld [vmem:[%s955 + $0xb10] sm:$0xf]
                  %1666 = vst [vmem:[%s956 + $0x588] sm:$0xf] %v1665
                  %v1667 = vld [vmem:[%s955 + $0xb14] sm:$0xf]
                  %1668 = vst [vmem:[%s956 + $0x58c] sm:$0xf] %v1667
                  %v1669 = vld [vmem:[%s955 + $0xb20] sm:$0xf]
                  %1670 = vst [vmem:[%s956 + $0x590] sm:$0xf] %v1669
                  %v1671 = vld [vmem:[%s955 + $0xb24] sm:$0xf]
                  %1672 = vst [vmem:[%s956 + $0x594] sm:$0xf] %v1671
                  %v1673 = vld [vmem:[%s955 + $0xb30] sm:$0xf]
                  %1674 = vst [vmem:[%s956 + $0x598] sm:$0xf] %v1673
                  %v1675 = vld [vmem:[%s955 + $0xb34] sm:$0xf]
                  %1676 = vst [vmem:[%s956 + $0x59c] sm:$0xf] %v1675
                  %v1677 = vld [vmem:[%s955 + $0xb40] sm:$0xf]
                  %1678 = vst [vmem:[%s956 + $0x5a0] sm:$0xf] %v1677
                  %v1679 = vld [vmem:[%s955 + $0xb44] sm:$0xf]
                  %1680 = vst [vmem:[%s956 + $0x5a4] sm:$0xf] %v1679
                  %v1681 = vld [vmem:[%s955 + $0xb50] sm:$0xf]
                  %1682 = vst [vmem:[%s956 + $0x5a8] sm:$0xf] %v1681
                  %v1683 = vld [vmem:[%s955 + $0xb54] sm:$0xf]
                  %1684 = vst [vmem:[%s956 + $0x5ac] sm:$0xf] %v1683
                  %v1685 = vld [vmem:[%s955 + $0xb60] sm:$0xf]
                  %1686 = vst [vmem:[%s956 + $0x5b0] sm:$0xf] %v1685
                  %v1687 = vld [vmem:[%s955 + $0xb64] sm:$0xf]
                  %1688 = vst [vmem:[%s956 + $0x5b4] sm:$0xf] %v1687
                  %v1689 = vld [vmem:[%s955 + $0xb70] sm:$0xf]
                  %1690 = vst [vmem:[%s956 + $0x5b8] sm:$0xf] %v1689
                  %v1691 = vld [vmem:[%s955 + $0xb74] sm:$0xf]
                  %1692 = vst [vmem:[%s956 + $0x5bc] sm:$0xf] %v1691
                $region63: #{object_aware_loss.1} parent=50 // loop_footer
                  %s954 = sadd.s32 1, %s950
                $region64: #{object_aware_loss.1} parent=50 // loop_footer_branch
                  %949 = sbr.rel target = $region60
                $region65: #{object_aware_loss.1} parent=50 // loop_exit
                  _
              $region51: #{object_aware_loss.1} parent=35 // pred_fallthru
                _
            $region36: #{object_aware_loss.1} parent=31 // pred_fallthru
              _
            // Predicated region
            $region37: #{object_aware_loss.1} parent=31 // pred_check
              _
            $region38: #{object_aware_loss.1} parent=31 // pred_check_branch
              %192 = sbr.rel (0) target = $region40
            $region39: #{object_aware_loss.1} parent=31 // pred_region
              loop: start=0, step=1, limit=1
              $region41: #{object_aware_loss.1} parent=39 // loop_pre_header
                _
              $region42: #{object_aware_loss.1} parent=39 // loop_header
                %s195 = sphi 0, %s199
                %p196 = scmp.ge.s32.totalorder %s195, 1
                %s200 = sphi %s186, %s186
                %s201 = sphi %s181, %s181
              $region43: #{object_aware_loss.1} parent=39 // loop_header_branch
                %198 = sbr.rel (%p196) target = $region47
              $region44: #{object_aware_loss.1} parent=39 // loop_body
                %v202 = vld [vmem:[%s200] sm:$0xf]
                %203 = vst [vmem:[%s201] sm:$0xf] %v202
                %v204 = vld [vmem:[%s200 + $0x4] sm:$0xf]
                %205 = vst [vmem:[%s201 + $0x4] sm:$0xf] %v204
                %v206 = vld [vmem:[%s200 + $0x10] sm:$0xf]
                %207 = vst [vmem:[%s201 + $0x8] sm:$0xf] %v206
                %v208 = vld [vmem:[%s200 + $0x14] sm:$0xf]
                %209 = vst [vmem:[%s201 + $0xc] sm:$0xf] %v208
                %v210 = vld [vmem:[%s200 + $0x20] sm:$0xf]
                %211 = vst [vmem:[%s201 + $0x10] sm:$0xf] %v210
                %v212 = vld [vmem:[%s200 + $0x24] sm:$0xf]
                %213 = vst [vmem:[%s201 + $0x14] sm:$0xf] %v212
                %v214 = vld [vmem:[%s200 + $0x30] sm:$0xf]
                %215 = vst [vmem:[%s201 + $0x18] sm:$0xf] %v214
                %v216 = vld [vmem:[%s200 + $0x34] sm:$0xf]
                %217 = vst [vmem:[%s201 + $0x1c] sm:$0xf] %v216
                %v218 = vld [vmem:[%s200 + $0x40] sm:$0xf]
                %219 = vst [vmem:[%s201 + $0x20] sm:$0xf] %v218
                %v220 = vld [vmem:[%s200 + $0x44] sm:$0xf]
                %221 = vst [vmem:[%s201 + $0x24] sm:$0xf] %v220
                %v222 = vld [vmem:[%s200 + $0x50] sm:$0xf]
                %223 = vst [vmem:[%s201 + $0x28] sm:$0xf] %v222
                %v224 = vld [vmem:[%s200 + $0x54] sm:$0xf]
                %225 = vst [vmem:[%s201 + $0x2c] sm:$0xf] %v224
                %v226 = vld [vmem:[%s200 + $0x60] sm:$0xf]
                %227 = vst [vmem:[%s201 + $0x30] sm:$0xf] %v226
                %v228 = vld [vmem:[%s200 + $0x64] sm:$0xf]
                %229 = vst [vmem:[%s201 + $0x34] sm:$0xf] %v228
                %v230 = vld [vmem:[%s200 + $0x70] sm:$0xf]
                %231 = vst [vmem:[%s201 + $0x38] sm:$0xf] %v230
                %v232 = vld [vmem:[%s200 + $0x74] sm:$0xf]
                %233 = vst [vmem:[%s201 + $0x3c] sm:$0xf] %v232
                %v234 = vld [vmem:[%s200 + $0x80] sm:$0xf]
                %235 = vst [vmem:[%s201 + $0x40] sm:$0xf] %v234
                %v236 = vld [vmem:[%s200 + $0x84] sm:$0xf]
                %237 = vst [vmem:[%s201 + $0x44] sm:$0xf] %v236
                %v238 = vld [vmem:[%s200 + $0x90] sm:$0xf]
                %239 = vst [vmem:[%s201 + $0x48] sm:$0xf] %v238
                %v240 = vld [vmem:[%s200 + $0x94] sm:$0xf]
                %241 = vst [vmem:[%s201 + $0x4c] sm:$0xf] %v240
                %v242 = vld [vmem:[%s200 + $0xa0] sm:$0xf]
                %243 = vst [vmem:[%s201 + $0x50] sm:$0xf] %v242
                %v244 = vld [vmem:[%s200 + $0xa4] sm:$0xf]
                %245 = vst [vmem:[%s201 + $0x54] sm:$0xf] %v244
                %v246 = vld [vmem:[%s200 + $0xb0] sm:$0xf]
                %247 = vst [vmem:[%s201 + $0x58] sm:$0xf] %v246
                %v248 = vld [vmem:[%s200 + $0xb4] sm:$0xf]
                %249 = vst [vmem:[%s201 + $0x5c] sm:$0xf] %v248
                %v250 = vld [vmem:[%s200 + $0xc0] sm:$0xf]
                %251 = vst [vmem:[%s201 + $0x60] sm:$0xf] %v250
                %v252 = vld [vmem:[%s200 + $0xc4] sm:$0xf]
                %253 = vst [vmem:[%s201 + $0x64] sm:$0xf] %v252
                %v254 = vld [vmem:[%s200 + $0xd0] sm:$0xf]
                %255 = vst [vmem:[%s201 + $0x68] sm:$0xf] %v254
                %v256 = vld [vmem:[%s200 + $0xd4] sm:$0xf]
                %257 = vst [vmem:[%s201 + $0x6c] sm:$0xf] %v256
                %v258 = vld [vmem:[%s200 + $0xe0] sm:$0xf]
                %259 = vst [vmem:[%s201 + $0x70] sm:$0xf] %v258
                %v260 = vld [vmem:[%s200 + $0xe4] sm:$0xf]
                %261 = vst [vmem:[%s201 + $0x74] sm:$0xf] %v260
                %v262 = vld [vmem:[%s200 + $0xf0] sm:$0xf]
                %263 = vst [vmem:[%s201 + $0x78] sm:$0xf] %v262
                %v264 = vld [vmem:[%s200 + $0xf4] sm:$0xf]
                %265 = vst [vmem:[%s201 + $0x7c] sm:$0xf] %v264
                %v266 = vld [vmem:[%s200 + $0x100] sm:$0xf]
                %267 = vst [vmem:[%s201 + $0x80] sm:$0xf] %v266
                %v268 = vld [vmem:[%s200 + $0x104] sm:$0xf]
                %269 = vst [vmem:[%s201 + $0x84] sm:$0xf] %v268
                %v270 = vld [vmem:[%s200 + $0x110] sm:$0xf]
                %271 = vst [vmem:[%s201 + $0x88] sm:$0xf] %v270
                %v272 = vld [vmem:[%s200 + $0x114] sm:$0xf]
                %273 = vst [vmem:[%s201 + $0x8c] sm:$0xf] %v272
                %v274 = vld [vmem:[%s200 + $0x120] sm:$0xf]
                %275 = vst [vmem:[%s201 + $0x90] sm:$0xf] %v274
                %v276 = vld [vmem:[%s200 + $0x124] sm:$0xf]
                %277 = vst [vmem:[%s201 + $0x94] sm:$0xf] %v276
                %v278 = vld [vmem:[%s200 + $0x130] sm:$0xf]
                %279 = vst [vmem:[%s201 + $0x98] sm:$0xf] %v278
                %v280 = vld [vmem:[%s200 + $0x134] sm:$0xf]
                %281 = vst [vmem:[%s201 + $0x9c] sm:$0xf] %v280
                %v282 = vld [vmem:[%s200 + $0x140] sm:$0xf]
                %283 = vst [vmem:[%s201 + $0xa0] sm:$0xf] %v282
                %v284 = vld [vmem:[%s200 + $0x144] sm:$0xf]
                %285 = vst [vmem:[%s201 + $0xa4] sm:$0xf] %v284
                %v286 = vld [vmem:[%s200 + $0x150] sm:$0xf]
                %287 = vst [vmem:[%s201 + $0xa8] sm:$0xf] %v286
                %v288 = vld [vmem:[%s200 + $0x154] sm:$0xf]
                %289 = vst [vmem:[%s201 + $0xac] sm:$0xf] %v288
                %v290 = vld [vmem:[%s200 + $0x160] sm:$0xf]
                %291 = vst [vmem:[%s201 + $0xb0] sm:$0xf] %v290
                %v292 = vld [vmem:[%s200 + $0x164] sm:$0xf]
                %293 = vst [vmem:[%s201 + $0xb4] sm:$0xf] %v292
                %v294 = vld [vmem:[%s200 + $0x170] sm:$0xf]
                %295 = vst [vmem:[%s201 + $0xb8] sm:$0xf] %v294
                %v296 = vld [vmem:[%s200 + $0x174] sm:$0xf]
                %297 = vst [vmem:[%s201 + $0xbc] sm:$0xf] %v296
                %v298 = vld [vmem:[%s200 + $0x180] sm:$0xf]
                %299 = vst [vmem:[%s201 + $0xc0] sm:$0xf] %v298
                %v300 = vld [vmem:[%s200 + $0x184] sm:$0xf]
                %301 = vst [vmem:[%s201 + $0xc4] sm:$0xf] %v300
                %v302 = vld [vmem:[%s200 + $0x190] sm:$0xf]
                %303 = vst [vmem:[%s201 + $0xc8] sm:$0xf] %v302
                %v304 = vld [vmem:[%s200 + $0x194] sm:$0xf]
                %305 = vst [vmem:[%s201 + $0xcc] sm:$0xf] %v304
                %v306 = vld [vmem:[%s200 + $0x1a0] sm:$0xf]
                %307 = vst [vmem:[%s201 + $0xd0] sm:$0xf] %v306
                %v308 = vld [vmem:[%s200 + $0x1a4] sm:$0xf]
                %309 = vst [vmem:[%s201 + $0xd4] sm:$0xf] %v308
                %v310 = vld [vmem:[%s200 + $0x1b0] sm:$0xf]
                %311 = vst [vmem:[%s201 + $0xd8] sm:$0xf] %v310
                %v312 = vld [vmem:[%s200 + $0x1b4] sm:$0xf]
                %313 = vst [vmem:[%s201 + $0xdc] sm:$0xf] %v312
                %v314 = vld [vmem:[%s200 + $0x1c0] sm:$0xf]
                %315 = vst [vmem:[%s201 + $0xe0] sm:$0xf] %v314
                %v316 = vld [vmem:[%s200 + $0x1c4] sm:$0xf]
                %317 = vst [vmem:[%s201 + $0xe4] sm:$0xf] %v316
                %v318 = vld [vmem:[%s200 + $0x1d0] sm:$0xf]
                %319 = vst [vmem:[%s201 + $0xe8] sm:$0xf] %v318
                %v320 = vld [vmem:[%s200 + $0x1d4] sm:$0xf]
                %321 = vst [vmem:[%s201 + $0xec] sm:$0xf] %v320
                %v322 = vld [vmem:[%s200 + $0x1e0] sm:$0xf]
                %323 = vst [vmem:[%s201 + $0xf0] sm:$0xf] %v322
                %v324 = vld [vmem:[%s200 + $0x1e4] sm:$0xf]
                %325 = vst [vmem:[%s201 + $0xf4] sm:$0xf] %v324
                %v326 = vld [vmem:[%s200 + $0x1f0] sm:$0xf]
                %327 = vst [vmem:[%s201 + $0xf8] sm:$0xf] %v326
                %v328 = vld [vmem:[%s200 + $0x1f4] sm:$0xf]
                %329 = vst [vmem:[%s201 + $0xfc] sm:$0xf] %v328
                %v330 = vld [vmem:[%s200 + $0x200] sm:$0xf]
                %331 = vst [vmem:[%s201 + $0x100] sm:$0xf] %v330
                %v332 = vld [vmem:[%s200 + $0x204] sm:$0xf]
                %333 = vst [vmem:[%s201 + $0x104] sm:$0xf] %v332
                %v334 = vld [vmem:[%s200 + $0x210] sm:$0xf]
                %335 = vst [vmem:[%s201 + $0x108] sm:$0xf] %v334
                %v336 = vld [vmem:[%s200 + $0x214] sm:$0xf]
                %337 = vst [vmem:[%s201 + $0x10c] sm:$0xf] %v336
                %v338 = vld [vmem:[%s200 + $0x220] sm:$0xf]
                %339 = vst [vmem:[%s201 + $0x110] sm:$0xf] %v338
                %v340 = vld [vmem:[%s200 + $0x224] sm:$0xf]
                %341 = vst [vmem:[%s201 + $0x114] sm:$0xf] %v340
                %v342 = vld [vmem:[%s200 + $0x230] sm:$0xf]
                %343 = vst [vmem:[%s201 + $0x118] sm:$0xf] %v342
                %v344 = vld [vmem:[%s200 + $0x234] sm:$0xf]
                %345 = vst [vmem:[%s201 + $0x11c] sm:$0xf] %v344
                %v346 = vld [vmem:[%s200 + $0x240] sm:$0xf]
                %347 = vst [vmem:[%s201 + $0x120] sm:$0xf] %v346
                %v348 = vld [vmem:[%s200 + $0x244] sm:$0xf]
                %349 = vst [vmem:[%s201 + $0x124] sm:$0xf] %v348
                %v350 = vld [vmem:[%s200 + $0x250] sm:$0xf]
                %351 = vst [vmem:[%s201 + $0x128] sm:$0xf] %v350
                %v352 = vld [vmem:[%s200 + $0x254] sm:$0xf]
                %353 = vst [vmem:[%s201 + $0x12c] sm:$0xf] %v352
                %v354 = vld [vmem:[%s200 + $0x260] sm:$0xf]
                %355 = vst [vmem:[%s201 + $0x130] sm:$0xf] %v354
                %v356 = vld [vmem:[%s200 + $0x264] sm:$0xf]
                %357 = vst [vmem:[%s201 + $0x134] sm:$0xf] %v356
                %v358 = vld [vmem:[%s200 + $0x270] sm:$0xf]
                %359 = vst [vmem:[%s201 + $0x138] sm:$0xf] %v358
                %v360 = vld [vmem:[%s200 + $0x274] sm:$0xf]
                %361 = vst [vmem:[%s201 + $0x13c] sm:$0xf] %v360
                %v362 = vld [vmem:[%s200 + $0x280] sm:$0xf]
                %363 = vst [vmem:[%s201 + $0x140] sm:$0xf] %v362
                %v364 = vld [vmem:[%s200 + $0x284] sm:$0xf]
                %365 = vst [vmem:[%s201 + $0x144] sm:$0xf] %v364
                %v366 = vld [vmem:[%s200 + $0x290] sm:$0xf]
                %367 = vst [vmem:[%s201 + $0x148] sm:$0xf] %v366
                %v368 = vld [vmem:[%s200 + $0x294] sm:$0xf]
                %369 = vst [vmem:[%s201 + $0x14c] sm:$0xf] %v368
                %v370 = vld [vmem:[%s200 + $0x2a0] sm:$0xf]
                %371 = vst [vmem:[%s201 + $0x150] sm:$0xf] %v370
                %v372 = vld [vmem:[%s200 + $0x2a4] sm:$0xf]
                %373 = vst [vmem:[%s201 + $0x154] sm:$0xf] %v372
                %v374 = vld [vmem:[%s200 + $0x2b0] sm:$0xf]
                %375 = vst [vmem:[%s201 + $0x158] sm:$0xf] %v374
                %v376 = vld [vmem:[%s200 + $0x2b4] sm:$0xf]
                %377 = vst [vmem:[%s201 + $0x15c] sm:$0xf] %v376
                %v378 = vld [vmem:[%s200 + $0x2c0] sm:$0xf]
                %379 = vst [vmem:[%s201 + $0x160] sm:$0xf] %v378
                %v380 = vld [vmem:[%s200 + $0x2c4] sm:$0xf]
                %381 = vst [vmem:[%s201 + $0x164] sm:$0xf] %v380
                %v382 = vld [vmem:[%s200 + $0x2d0] sm:$0xf]
                %383 = vst [vmem:[%s201 + $0x168] sm:$0xf] %v382
                %v384 = vld [vmem:[%s200 + $0x2d4] sm:$0xf]
                %385 = vst [vmem:[%s201 + $0x16c] sm:$0xf] %v384
                %v386 = vld [vmem:[%s200 + $0x2e0] sm:$0xf]
                %387 = vst [vmem:[%s201 + $0x170] sm:$0xf] %v386
                %v388 = vld [vmem:[%s200 + $0x2e4] sm:$0xf]
                %389 = vst [vmem:[%s201 + $0x174] sm:$0xf] %v388
                %v390 = vld [vmem:[%s200 + $0x2f0] sm:$0xf]
                %391 = vst [vmem:[%s201 + $0x178] sm:$0xf] %v390
                %v392 = vld [vmem:[%s200 + $0x2f4] sm:$0xf]
                %393 = vst [vmem:[%s201 + $0x17c] sm:$0xf] %v392
                %v394 = vld [vmem:[%s200 + $0x300] sm:$0xf]
                %395 = vst [vmem:[%s201 + $0x180] sm:$0xf] %v394
                %v396 = vld [vmem:[%s200 + $0x304] sm:$0xf]
                %397 = vst [vmem:[%s201 + $0x184] sm:$0xf] %v396
                %v398 = vld [vmem:[%s200 + $0x310] sm:$0xf]
                %399 = vst [vmem:[%s201 + $0x188] sm:$0xf] %v398
                %v400 = vld [vmem:[%s200 + $0x314] sm:$0xf]
                %401 = vst [vmem:[%s201 + $0x18c] sm:$0xf] %v400
                %v402 = vld [vmem:[%s200 + $0x320] sm:$0xf]
                %403 = vst [vmem:[%s201 + $0x190] sm:$0xf] %v402
                %v404 = vld [vmem:[%s200 + $0x324] sm:$0xf]
                %405 = vst [vmem:[%s201 + $0x194] sm:$0xf] %v404
                %v406 = vld [vmem:[%s200 + $0x330] sm:$0xf]
                %407 = vst [vmem:[%s201 + $0x198] sm:$0xf] %v406
                %v408 = vld [vmem:[%s200 + $0x334] sm:$0xf]
                %409 = vst [vmem:[%s201 + $0x19c] sm:$0xf] %v408
                %v410 = vld [vmem:[%s200 + $0x340] sm:$0xf]
                %411 = vst [vmem:[%s201 + $0x1a0] sm:$0xf] %v410
                %v412 = vld [vmem:[%s200 + $0x344] sm:$0xf]
                %413 = vst [vmem:[%s201 + $0x1a4] sm:$0xf] %v412
                %v414 = vld [vmem:[%s200 + $0x350] sm:$0xf]
                %415 = vst [vmem:[%s201 + $0x1a8] sm:$0xf] %v414
                %v416 = vld [vmem:[%s200 + $0x354] sm:$0xf]
                %417 = vst [vmem:[%s201 + $0x1ac] sm:$0xf] %v416
                %v418 = vld [vmem:[%s200 + $0x360] sm:$0xf]
                %419 = vst [vmem:[%s201 + $0x1b0] sm:$0xf] %v418
                %v420 = vld [vmem:[%s200 + $0x364] sm:$0xf]
                %421 = vst [vmem:[%s201 + $0x1b4] sm:$0xf] %v420
                %v422 = vld [vmem:[%s200 + $0x370] sm:$0xf]
                %423 = vst [vmem:[%s201 + $0x1b8] sm:$0xf] %v422
                %v424 = vld [vmem:[%s200 + $0x374] sm:$0xf]
                %425 = vst [vmem:[%s201 + $0x1bc] sm:$0xf] %v424
                %v426 = vld [vmem:[%s200 + $0x380] sm:$0xf]
                %427 = vst [vmem:[%s201 + $0x1c0] sm:$0xf] %v426
                %v428 = vld [vmem:[%s200 + $0x384] sm:$0xf]
                %429 = vst [vmem:[%s201 + $0x1c4] sm:$0xf] %v428
                %v430 = vld [vmem:[%s200 + $0x390] sm:$0xf]
                %431 = vst [vmem:[%s201 + $0x1c8] sm:$0xf] %v430
                %v432 = vld [vmem:[%s200 + $0x394] sm:$0xf]
                %433 = vst [vmem:[%s201 + $0x1cc] sm:$0xf] %v432
                %v434 = vld [vmem:[%s200 + $0x3a0] sm:$0xf]
                %435 = vst [vmem:[%s201 + $0x1d0] sm:$0xf] %v434
                %v436 = vld [vmem:[%s200 + $0x3a4] sm:$0xf]
                %437 = vst [vmem:[%s201 + $0x1d4] sm:$0xf] %v436
                %v438 = vld [vmem:[%s200 + $0x3b0] sm:$0xf]
                %439 = vst [vmem:[%s201 + $0x1d8] sm:$0xf] %v438
                %v440 = vld [vmem:[%s200 + $0x3b4] sm:$0xf]
                %441 = vst [vmem:[%s201 + $0x1dc] sm:$0xf] %v440
                %v442 = vld [vmem:[%s200 + $0x3c0] sm:$0xf]
                %443 = vst [vmem:[%s201 + $0x1e0] sm:$0xf] %v442
                %v444 = vld [vmem:[%s200 + $0x3c4] sm:$0xf]
                %445 = vst [vmem:[%s201 + $0x1e4] sm:$0xf] %v444
                %v446 = vld [vmem:[%s200 + $0x3d0] sm:$0xf]
                %447 = vst [vmem:[%s201 + $0x1e8] sm:$0xf] %v446
                %v448 = vld [vmem:[%s200 + $0x3d4] sm:$0xf]
                %449 = vst [vmem:[%s201 + $0x1ec] sm:$0xf] %v448
                %v450 = vld [vmem:[%s200 + $0x3e0] sm:$0xf]
                %451 = vst [vmem:[%s201 + $0x1f0] sm:$0xf] %v450
                %v452 = vld [vmem:[%s200 + $0x3e4] sm:$0xf]
                %453 = vst [vmem:[%s201 + $0x1f4] sm:$0xf] %v452
                %v454 = vld [vmem:[%s200 + $0x3f0] sm:$0xf]
                %455 = vst [vmem:[%s201 + $0x1f8] sm:$0xf] %v454
                %v456 = vld [vmem:[%s200 + $0x3f4] sm:$0xf]
                %457 = vst [vmem:[%s201 + $0x1fc] sm:$0xf] %v456
                %v458 = vld [vmem:[%s200 + $0x400] sm:$0xf]
                %459 = vst [vmem:[%s201 + $0x200] sm:$0xf] %v458
                %v460 = vld [vmem:[%s200 + $0x404] sm:$0xf]
                %461 = vst [vmem:[%s201 + $0x204] sm:$0xf] %v460
                %v462 = vld [vmem:[%s200 + $0x410] sm:$0xf]
                %463 = vst [vmem:[%s201 + $0x208] sm:$0xf] %v462
                %v464 = vld [vmem:[%s200 + $0x414] sm:$0xf]
                %465 = vst [vmem:[%s201 + $0x20c] sm:$0xf] %v464
                %v466 = vld [vmem:[%s200 + $0x420] sm:$0xf]
                %467 = vst [vmem:[%s201 + $0x210] sm:$0xf] %v466
                %v468 = vld [vmem:[%s200 + $0x424] sm:$0xf]
                %469 = vst [vmem:[%s201 + $0x214] sm:$0xf] %v468
                %v470 = vld [vmem:[%s200 + $0x430] sm:$0xf]
                %471 = vst [vmem:[%s201 + $0x218] sm:$0xf] %v470
                %v472 = vld [vmem:[%s200 + $0x434] sm:$0xf]
                %473 = vst [vmem:[%s201 + $0x21c] sm:$0xf] %v472
                %v474 = vld [vmem:[%s200 + $0x440] sm:$0xf]
                %475 = vst [vmem:[%s201 + $0x220] sm:$0xf] %v474
                %v476 = vld [vmem:[%s200 + $0x444] sm:$0xf]
                %477 = vst [vmem:[%s201 + $0x224] sm:$0xf] %v476
                %v478 = vld [vmem:[%s200 + $0x450] sm:$0xf]
                %479 = vst [vmem:[%s201 + $0x228] sm:$0xf] %v478
                %v480 = vld [vmem:[%s200 + $0x454] sm:$0xf]
                %481 = vst [vmem:[%s201 + $0x22c] sm:$0xf] %v480
                %v482 = vld [vmem:[%s200 + $0x460] sm:$0xf]
                %483 = vst [vmem:[%s201 + $0x230] sm:$0xf] %v482
                %v484 = vld [vmem:[%s200 + $0x464] sm:$0xf]
                %485 = vst [vmem:[%s201 + $0x234] sm:$0xf] %v484
                %v486 = vld [vmem:[%s200 + $0x470] sm:$0xf]
                %487 = vst [vmem:[%s201 + $0x238] sm:$0xf] %v486
                %v488 = vld [vmem:[%s200 + $0x474] sm:$0xf]
                %489 = vst [vmem:[%s201 + $0x23c] sm:$0xf] %v488
                %v490 = vld [vmem:[%s200 + $0x480] sm:$0xf]
                %491 = vst [vmem:[%s201 + $0x240] sm:$0xf] %v490
                %v492 = vld [vmem:[%s200 + $0x484] sm:$0xf]
                %493 = vst [vmem:[%s201 + $0x244] sm:$0xf] %v492
                %v494 = vld [vmem:[%s200 + $0x490] sm:$0xf]
                %495 = vst [vmem:[%s201 + $0x248] sm:$0xf] %v494
                %v496 = vld [vmem:[%s200 + $0x494] sm:$0xf]
                %497 = vst [vmem:[%s201 + $0x24c] sm:$0xf] %v496
                %v498 = vld [vmem:[%s200 + $0x4a0] sm:$0xf]
                %499 = vst [vmem:[%s201 + $0x250] sm:$0xf] %v498
                %v500 = vld [vmem:[%s200 + $0x4a4] sm:$0xf]
                %501 = vst [vmem:[%s201 + $0x254] sm:$0xf] %v500
                %v502 = vld [vmem:[%s200 + $0x4b0] sm:$0xf]
                %503 = vst [vmem:[%s201 + $0x258] sm:$0xf] %v502
                %v504 = vld [vmem:[%s200 + $0x4b4] sm:$0xf]
                %505 = vst [vmem:[%s201 + $0x25c] sm:$0xf] %v504
                %v506 = vld [vmem:[%s200 + $0x4c0] sm:$0xf]
                %507 = vst [vmem:[%s201 + $0x260] sm:$0xf] %v506
                %v508 = vld [vmem:[%s200 + $0x4c4] sm:$0xf]
                %509 = vst [vmem:[%s201 + $0x264] sm:$0xf] %v508
                %v510 = vld [vmem:[%s200 + $0x4d0] sm:$0xf]
                %511 = vst [vmem:[%s201 + $0x268] sm:$0xf] %v510
                %v512 = vld [vmem:[%s200 + $0x4d4] sm:$0xf]
                %513 = vst [vmem:[%s201 + $0x26c] sm:$0xf] %v512
                %v514 = vld [vmem:[%s200 + $0x4e0] sm:$0xf]
                %515 = vst [vmem:[%s201 + $0x270] sm:$0xf] %v514
                %v516 = vld [vmem:[%s200 + $0x4e4] sm:$0xf]
                %517 = vst [vmem:[%s201 + $0x274] sm:$0xf] %v516
                %v518 = vld [vmem:[%s200 + $0x4f0] sm:$0xf]
                %519 = vst [vmem:[%s201 + $0x278] sm:$0xf] %v518
                %v520 = vld [vmem:[%s200 + $0x4f4] sm:$0xf]
                %521 = vst [vmem:[%s201 + $0x27c] sm:$0xf] %v520
                %v522 = vld [vmem:[%s200 + $0x500] sm:$0xf]
                %523 = vst [vmem:[%s201 + $0x280] sm:$0xf] %v522
                %v524 = vld [vmem:[%s200 + $0x504] sm:$0xf]
                %525 = vst [vmem:[%s201 + $0x284] sm:$0xf] %v524
                %v526 = vld [vmem:[%s200 + $0x510] sm:$0xf]
                %527 = vst [vmem:[%s201 + $0x288] sm:$0xf] %v526
                %v528 = vld [vmem:[%s200 + $0x514] sm:$0xf]
                %529 = vst [vmem:[%s201 + $0x28c] sm:$0xf] %v528
                %v530 = vld [vmem:[%s200 + $0x520] sm:$0xf]
                %531 = vst [vmem:[%s201 + $0x290] sm:$0xf] %v530
                %v532 = vld [vmem:[%s200 + $0x524] sm:$0xf]
                %533 = vst [vmem:[%s201 + $0x294] sm:$0xf] %v532
                %v534 = vld [vmem:[%s200 + $0x530] sm:$0xf]
                %535 = vst [vmem:[%s201 + $0x298] sm:$0xf] %v534
                %v536 = vld [vmem:[%s200 + $0x534] sm:$0xf]
                %537 = vst [vmem:[%s201 + $0x29c] sm:$0xf] %v536
                %v538 = vld [vmem:[%s200 + $0x540] sm:$0xf]
                %539 = vst [vmem:[%s201 + $0x2a0] sm:$0xf] %v538
                %v540 = vld [vmem:[%s200 + $0x544] sm:$0xf]
                %541 = vst [vmem:[%s201 + $0x2a4] sm:$0xf] %v540
                %v542 = vld [vmem:[%s200 + $0x550] sm:$0xf]
                %543 = vst [vmem:[%s201 + $0x2a8] sm:$0xf] %v542
                %v544 = vld [vmem:[%s200 + $0x554] sm:$0xf]
                %545 = vst [vmem:[%s201 + $0x2ac] sm:$0xf] %v544
                %v546 = vld [vmem:[%s200 + $0x560] sm:$0xf]
                %547 = vst [vmem:[%s201 + $0x2b0] sm:$0xf] %v546
                %v548 = vld [vmem:[%s200 + $0x564] sm:$0xf]
                %549 = vst [vmem:[%s201 + $0x2b4] sm:$0xf] %v548
                %v550 = vld [vmem:[%s200 + $0x570] sm:$0xf]
                %551 = vst [vmem:[%s201 + $0x2b8] sm:$0xf] %v550
                %v552 = vld [vmem:[%s200 + $0x574] sm:$0xf]
                %553 = vst [vmem:[%s201 + $0x2bc] sm:$0xf] %v552
                %v554 = vld [vmem:[%s200 + $0x580] sm:$0xf]
                %555 = vst [vmem:[%s201 + $0x2c0] sm:$0xf] %v554
                %v556 = vld [vmem:[%s200 + $0x584] sm:$0xf]
                %557 = vst [vmem:[%s201 + $0x2c4] sm:$0xf] %v556
                %v558 = vld [vmem:[%s200 + $0x590] sm:$0xf]
                %559 = vst [vmem:[%s201 + $0x2c8] sm:$0xf] %v558
                %v560 = vld [vmem:[%s200 + $0x594] sm:$0xf]
                %561 = vst [vmem:[%s201 + $0x2cc] sm:$0xf] %v560
                %v562 = vld [vmem:[%s200 + $0x5a0] sm:$0xf]
                %563 = vst [vmem:[%s201 + $0x2d0] sm:$0xf] %v562
                %v564 = vld [vmem:[%s200 + $0x5a4] sm:$0xf]
                %565 = vst [vmem:[%s201 + $0x2d4] sm:$0xf] %v564
                %v566 = vld [vmem:[%s200 + $0x5b0] sm:$0xf]
                %567 = vst [vmem:[%s201 + $0x2d8] sm:$0xf] %v566
                %v568 = vld [vmem:[%s200 + $0x5b4] sm:$0xf]
                %569 = vst [vmem:[%s201 + $0x2dc] sm:$0xf] %v568
                %v570 = vld [vmem:[%s200 + $0x5c0] sm:$0xf]
                %571 = vst [vmem:[%s201 + $0x2e0] sm:$0xf] %v570
                %v572 = vld [vmem:[%s200 + $0x5c4] sm:$0xf]
                %573 = vst [vmem:[%s201 + $0x2e4] sm:$0xf] %v572
                %v574 = vld [vmem:[%s200 + $0x5d0] sm:$0xf]
                %575 = vst [vmem:[%s201 + $0x2e8] sm:$0xf] %v574
                %v576 = vld [vmem:[%s200 + $0x5d4] sm:$0xf]
                %577 = vst [vmem:[%s201 + $0x2ec] sm:$0xf] %v576
                %v578 = vld [vmem:[%s200 + $0x5e0] sm:$0xf]
                %579 = vst [vmem:[%s201 + $0x2f0] sm:$0xf] %v578
                %v580 = vld [vmem:[%s200 + $0x5e4] sm:$0xf]
                %581 = vst [vmem:[%s201 + $0x2f4] sm:$0xf] %v580
                %v582 = vld [vmem:[%s200 + $0x5f0] sm:$0xf]
                %583 = vst [vmem:[%s201 + $0x2f8] sm:$0xf] %v582
                %v584 = vld [vmem:[%s200 + $0x5f4] sm:$0xf]
                %585 = vst [vmem:[%s201 + $0x2fc] sm:$0xf] %v584
                %v586 = vld [vmem:[%s200 + $0x600] sm:$0xf]
                %587 = vst [vmem:[%s201 + $0x300] sm:$0xf] %v586
                %v588 = vld [vmem:[%s200 + $0x604] sm:$0xf]
                %589 = vst [vmem:[%s201 + $0x304] sm:$0xf] %v588
                %v590 = vld [vmem:[%s200 + $0x610] sm:$0xf]
                %591 = vst [vmem:[%s201 + $0x308] sm:$0xf] %v590
                %v592 = vld [vmem:[%s200 + $0x614] sm:$0xf]
                %593 = vst [vmem:[%s201 + $0x30c] sm:$0xf] %v592
                %v594 = vld [vmem:[%s200 + $0x620] sm:$0xf]
                %595 = vst [vmem:[%s201 + $0x310] sm:$0xf] %v594
                %v596 = vld [vmem:[%s200 + $0x624] sm:$0xf]
                %597 = vst [vmem:[%s201 + $0x314] sm:$0xf] %v596
                %v598 = vld [vmem:[%s200 + $0x630] sm:$0xf]
                %599 = vst [vmem:[%s201 + $0x318] sm:$0xf] %v598
                %v600 = vld [vmem:[%s200 + $0x634] sm:$0xf]
                %601 = vst [vmem:[%s201 + $0x31c] sm:$0xf] %v600
                %v602 = vld [vmem:[%s200 + $0x640] sm:$0xf]
                %603 = vst [vmem:[%s201 + $0x320] sm:$0xf] %v602
                %v604 = vld [vmem:[%s200 + $0x644] sm:$0xf]
                %605 = vst [vmem:[%s201 + $0x324] sm:$0xf] %v604
                %v606 = vld [vmem:[%s200 + $0x650] sm:$0xf]
                %607 = vst [vmem:[%s201 + $0x328] sm:$0xf] %v606
                %v608 = vld [vmem:[%s200 + $0x654] sm:$0xf]
                %609 = vst [vmem:[%s201 + $0x32c] sm:$0xf] %v608
                %v610 = vld [vmem:[%s200 + $0x660] sm:$0xf]
                %611 = vst [vmem:[%s201 + $0x330] sm:$0xf] %v610
                %v612 = vld [vmem:[%s200 + $0x664] sm:$0xf]
                %613 = vst [vmem:[%s201 + $0x334] sm:$0xf] %v612
                %v614 = vld [vmem:[%s200 + $0x670] sm:$0xf]
                %615 = vst [vmem:[%s201 + $0x338] sm:$0xf] %v614
                %v616 = vld [vmem:[%s200 + $0x674] sm:$0xf]
                %617 = vst [vmem:[%s201 + $0x33c] sm:$0xf] %v616
                %v618 = vld [vmem:[%s200 + $0x680] sm:$0xf]
                %619 = vst [vmem:[%s201 + $0x340] sm:$0xf] %v618
                %v620 = vld [vmem:[%s200 + $0x684] sm:$0xf]
                %621 = vst [vmem:[%s201 + $0x344] sm:$0xf] %v620
                %v622 = vld [vmem:[%s200 + $0x690] sm:$0xf]
                %623 = vst [vmem:[%s201 + $0x348] sm:$0xf] %v622
                %v624 = vld [vmem:[%s200 + $0x694] sm:$0xf]
                %625 = vst [vmem:[%s201 + $0x34c] sm:$0xf] %v624
                %v626 = vld [vmem:[%s200 + $0x6a0] sm:$0xf]
                %627 = vst [vmem:[%s201 + $0x350] sm:$0xf] %v626
                %v628 = vld [vmem:[%s200 + $0x6a4] sm:$0xf]
                %629 = vst [vmem:[%s201 + $0x354] sm:$0xf] %v628
                %v630 = vld [vmem:[%s200 + $0x6b0] sm:$0xf]
                %631 = vst [vmem:[%s201 + $0x358] sm:$0xf] %v630
                %v632 = vld [vmem:[%s200 + $0x6b4] sm:$0xf]
                %633 = vst [vmem:[%s201 + $0x35c] sm:$0xf] %v632
                %v634 = vld [vmem:[%s200 + $0x6c0] sm:$0xf]
                %635 = vst [vmem:[%s201 + $0x360] sm:$0xf] %v634
                %v636 = vld [vmem:[%s200 + $0x6c4] sm:$0xf]
                %637 = vst [vmem:[%s201 + $0x364] sm:$0xf] %v636
                %v638 = vld [vmem:[%s200 + $0x6d0] sm:$0xf]
                %639 = vst [vmem:[%s201 + $0x368] sm:$0xf] %v638
                %v640 = vld [vmem:[%s200 + $0x6d4] sm:$0xf]
                %641 = vst [vmem:[%s201 + $0x36c] sm:$0xf] %v640
                %v642 = vld [vmem:[%s200 + $0x6e0] sm:$0xf]
                %643 = vst [vmem:[%s201 + $0x370] sm:$0xf] %v642
                %v644 = vld [vmem:[%s200 + $0x6e4] sm:$0xf]
                %645 = vst [vmem:[%s201 + $0x374] sm:$0xf] %v644
                %v646 = vld [vmem:[%s200 + $0x6f0] sm:$0xf]
                %647 = vst [vmem:[%s201 + $0x378] sm:$0xf] %v646
                %v648 = vld [vmem:[%s200 + $0x6f4] sm:$0xf]
                %649 = vst [vmem:[%s201 + $0x37c] sm:$0xf] %v648
                %v650 = vld [vmem:[%s200 + $0x700] sm:$0xf]
                %651 = vst [vmem:[%s201 + $0x380] sm:$0xf] %v650
                %v652 = vld [vmem:[%s200 + $0x704] sm:$0xf]
                %653 = vst [vmem:[%s201 + $0x384] sm:$0xf] %v652
                %v654 = vld [vmem:[%s200 + $0x710] sm:$0xf]
                %655 = vst [vmem:[%s201 + $0x388] sm:$0xf] %v654
                %v656 = vld [vmem:[%s200 + $0x714] sm:$0xf]
                %657 = vst [vmem:[%s201 + $0x38c] sm:$0xf] %v656
                %v658 = vld [vmem:[%s200 + $0x720] sm:$0xf]
                %659 = vst [vmem:[%s201 + $0x390] sm:$0xf] %v658
                %v660 = vld [vmem:[%s200 + $0x724] sm:$0xf]
                %661 = vst [vmem:[%s201 + $0x394] sm:$0xf] %v660
                %v662 = vld [vmem:[%s200 + $0x730] sm:$0xf]
                %663 = vst [vmem:[%s201 + $0x398] sm:$0xf] %v662
                %v664 = vld [vmem:[%s200 + $0x734] sm:$0xf]
                %665 = vst [vmem:[%s201 + $0x39c] sm:$0xf] %v664
                %v666 = vld [vmem:[%s200 + $0x740] sm:$0xf]
                %667 = vst [vmem:[%s201 + $0x3a0] sm:$0xf] %v666
                %v668 = vld [vmem:[%s200 + $0x744] sm:$0xf]
                %669 = vst [vmem:[%s201 + $0x3a4] sm:$0xf] %v668
                %v670 = vld [vmem:[%s200 + $0x750] sm:$0xf]
                %671 = vst [vmem:[%s201 + $0x3a8] sm:$0xf] %v670
                %v672 = vld [vmem:[%s200 + $0x754] sm:$0xf]
                %673 = vst [vmem:[%s201 + $0x3ac] sm:$0xf] %v672
                %v674 = vld [vmem:[%s200 + $0x760] sm:$0xf]
                %675 = vst [vmem:[%s201 + $0x3b0] sm:$0xf] %v674
                %v676 = vld [vmem:[%s200 + $0x764] sm:$0xf]
                %677 = vst [vmem:[%s201 + $0x3b4] sm:$0xf] %v676
                %v678 = vld [vmem:[%s200 + $0x770] sm:$0xf]
                %679 = vst [vmem:[%s201 + $0x3b8] sm:$0xf] %v678
                %v680 = vld [vmem:[%s200 + $0x774] sm:$0xf]
                %681 = vst [vmem:[%s201 + $0x3bc] sm:$0xf] %v680
                %v682 = vld [vmem:[%s200 + $0x780] sm:$0xf]
                %683 = vst [vmem:[%s201 + $0x3c0] sm:$0xf] %v682
                %v684 = vld [vmem:[%s200 + $0x784] sm:$0xf]
                %685 = vst [vmem:[%s201 + $0x3c4] sm:$0xf] %v684
                %v686 = vld [vmem:[%s200 + $0x790] sm:$0xf]
                %687 = vst [vmem:[%s201 + $0x3c8] sm:$0xf] %v686
                %v688 = vld [vmem:[%s200 + $0x794] sm:$0xf]
                %689 = vst [vmem:[%s201 + $0x3cc] sm:$0xf] %v688
                %v690 = vld [vmem:[%s200 + $0x7a0] sm:$0xf]
                %691 = vst [vmem:[%s201 + $0x3d0] sm:$0xf] %v690
                %v692 = vld [vmem:[%s200 + $0x7a4] sm:$0xf]
                %693 = vst [vmem:[%s201 + $0x3d4] sm:$0xf] %v692
                %v694 = vld [vmem:[%s200 + $0x7b0] sm:$0xf]
                %695 = vst [vmem:[%s201 + $0x3d8] sm:$0xf] %v694
                %v696 = vld [vmem:[%s200 + $0x7b4] sm:$0xf]
                %697 = vst [vmem:[%s201 + $0x3dc] sm:$0xf] %v696
                %v698 = vld [vmem:[%s200 + $0x7c0] sm:$0xf]
                %699 = vst [vmem:[%s201 + $0x3e0] sm:$0xf] %v698
                %v700 = vld [vmem:[%s200 + $0x7c4] sm:$0xf]
                %701 = vst [vmem:[%s201 + $0x3e4] sm:$0xf] %v700
                %v702 = vld [vmem:[%s200 + $0x7d0] sm:$0xf]
                %703 = vst [vmem:[%s201 + $0x3e8] sm:$0xf] %v702
                %v704 = vld [vmem:[%s200 + $0x7d4] sm:$0xf]
                %705 = vst [vmem:[%s201 + $0x3ec] sm:$0xf] %v704
                %v706 = vld [vmem:[%s200 + $0x7e0] sm:$0xf]
                %707 = vst [vmem:[%s201 + $0x3f0] sm:$0xf] %v706
                %v708 = vld [vmem:[%s200 + $0x7e4] sm:$0xf]
                %709 = vst [vmem:[%s201 + $0x3f4] sm:$0xf] %v708
                %v710 = vld [vmem:[%s200 + $0x7f0] sm:$0xf]
                %711 = vst [vmem:[%s201 + $0x3f8] sm:$0xf] %v710
                %v712 = vld [vmem:[%s200 + $0x7f4] sm:$0xf]
                %713 = vst [vmem:[%s201 + $0x3fc] sm:$0xf] %v712
                %v714 = vld [vmem:[%s200 + $0x800] sm:$0xf]
                %715 = vst [vmem:[%s201 + $0x400] sm:$0xf] %v714
                %v716 = vld [vmem:[%s200 + $0x804] sm:$0xf]
                %717 = vst [vmem:[%s201 + $0x404] sm:$0xf] %v716
                %v718 = vld [vmem:[%s200 + $0x810] sm:$0xf]
                %719 = vst [vmem:[%s201 + $0x408] sm:$0xf] %v718
                %v720 = vld [vmem:[%s200 + $0x814] sm:$0xf]
                %721 = vst [vmem:[%s201 + $0x40c] sm:$0xf] %v720
                %v722 = vld [vmem:[%s200 + $0x820] sm:$0xf]
                %723 = vst [vmem:[%s201 + $0x410] sm:$0xf] %v722
                %v724 = vld [vmem:[%s200 + $0x824] sm:$0xf]
                %725 = vst [vmem:[%s201 + $0x414] sm:$0xf] %v724
                %v726 = vld [vmem:[%s200 + $0x830] sm:$0xf]
                %727 = vst [vmem:[%s201 + $0x418] sm:$0xf] %v726
                %v728 = vld [vmem:[%s200 + $0x834] sm:$0xf]
                %729 = vst [vmem:[%s201 + $0x41c] sm:$0xf] %v728
                %v730 = vld [vmem:[%s200 + $0x840] sm:$0xf]
                %731 = vst [vmem:[%s201 + $0x420] sm:$0xf] %v730
                %v732 = vld [vmem:[%s200 + $0x844] sm:$0xf]
                %733 = vst [vmem:[%s201 + $0x424] sm:$0xf] %v732
                %v734 = vld [vmem:[%s200 + $0x850] sm:$0xf]
                %735 = vst [vmem:[%s201 + $0x428] sm:$0xf] %v734
                %v736 = vld [vmem:[%s200 + $0x854] sm:$0xf]
                %737 = vst [vmem:[%s201 + $0x42c] sm:$0xf] %v736
                %v738 = vld [vmem:[%s200 + $0x860] sm:$0xf]
                %739 = vst [vmem:[%s201 + $0x430] sm:$0xf] %v738
                %v740 = vld [vmem:[%s200 + $0x864] sm:$0xf]
                %741 = vst [vmem:[%s201 + $0x434] sm:$0xf] %v740
                %v742 = vld [vmem:[%s200 + $0x870] sm:$0xf]
                %743 = vst [vmem:[%s201 + $0x438] sm:$0xf] %v742
                %v744 = vld [vmem:[%s200 + $0x874] sm:$0xf]
                %745 = vst [vmem:[%s201 + $0x43c] sm:$0xf] %v744
                %v746 = vld [vmem:[%s200 + $0x880] sm:$0xf]
                %747 = vst [vmem:[%s201 + $0x440] sm:$0xf] %v746
                %v748 = vld [vmem:[%s200 + $0x884] sm:$0xf]
                %749 = vst [vmem:[%s201 + $0x444] sm:$0xf] %v748
                %v750 = vld [vmem:[%s200 + $0x890] sm:$0xf]
                %751 = vst [vmem:[%s201 + $0x448] sm:$0xf] %v750
                %v752 = vld [vmem:[%s200 + $0x894] sm:$0xf]
                %753 = vst [vmem:[%s201 + $0x44c] sm:$0xf] %v752
                %v754 = vld [vmem:[%s200 + $0x8a0] sm:$0xf]
                %755 = vst [vmem:[%s201 + $0x450] sm:$0xf] %v754
                %v756 = vld [vmem:[%s200 + $0x8a4] sm:$0xf]
                %757 = vst [vmem:[%s201 + $0x454] sm:$0xf] %v756
                %v758 = vld [vmem:[%s200 + $0x8b0] sm:$0xf]
                %759 = vst [vmem:[%s201 + $0x458] sm:$0xf] %v758
                %v760 = vld [vmem:[%s200 + $0x8b4] sm:$0xf]
                %761 = vst [vmem:[%s201 + $0x45c] sm:$0xf] %v760
                %v762 = vld [vmem:[%s200 + $0x8c0] sm:$0xf]
                %763 = vst [vmem:[%s201 + $0x460] sm:$0xf] %v762
                %v764 = vld [vmem:[%s200 + $0x8c4] sm:$0xf]
                %765 = vst [vmem:[%s201 + $0x464] sm:$0xf] %v764
                %v766 = vld [vmem:[%s200 + $0x8d0] sm:$0xf]
                %767 = vst [vmem:[%s201 + $0x468] sm:$0xf] %v766
                %v768 = vld [vmem:[%s200 + $0x8d4] sm:$0xf]
                %769 = vst [vmem:[%s201 + $0x46c] sm:$0xf] %v768
                %v770 = vld [vmem:[%s200 + $0x8e0] sm:$0xf]
                %771 = vst [vmem:[%s201 + $0x470] sm:$0xf] %v770
                %v772 = vld [vmem:[%s200 + $0x8e4] sm:$0xf]
                %773 = vst [vmem:[%s201 + $0x474] sm:$0xf] %v772
                %v774 = vld [vmem:[%s200 + $0x8f0] sm:$0xf]
                %775 = vst [vmem:[%s201 + $0x478] sm:$0xf] %v774
                %v776 = vld [vmem:[%s200 + $0x8f4] sm:$0xf]
                %777 = vst [vmem:[%s201 + $0x47c] sm:$0xf] %v776
                %v778 = vld [vmem:[%s200 + $0x900] sm:$0xf]
                %779 = vst [vmem:[%s201 + $0x480] sm:$0xf] %v778
                %v780 = vld [vmem:[%s200 + $0x904] sm:$0xf]
                %781 = vst [vmem:[%s201 + $0x484] sm:$0xf] %v780
                %v782 = vld [vmem:[%s200 + $0x910] sm:$0xf]
                %783 = vst [vmem:[%s201 + $0x488] sm:$0xf] %v782
                %v784 = vld [vmem:[%s200 + $0x914] sm:$0xf]
                %785 = vst [vmem:[%s201 + $0x48c] sm:$0xf] %v784
                %v786 = vld [vmem:[%s200 + $0x920] sm:$0xf]
                %787 = vst [vmem:[%s201 + $0x490] sm:$0xf] %v786
                %v788 = vld [vmem:[%s200 + $0x924] sm:$0xf]
                %789 = vst [vmem:[%s201 + $0x494] sm:$0xf] %v788
                %v790 = vld [vmem:[%s200 + $0x930] sm:$0xf]
                %791 = vst [vmem:[%s201 + $0x498] sm:$0xf] %v790
                %v792 = vld [vmem:[%s200 + $0x934] sm:$0xf]
                %793 = vst [vmem:[%s201 + $0x49c] sm:$0xf] %v792
                %v794 = vld [vmem:[%s200 + $0x940] sm:$0xf]
                %795 = vst [vmem:[%s201 + $0x4a0] sm:$0xf] %v794
                %v796 = vld [vmem:[%s200 + $0x944] sm:$0xf]
                %797 = vst [vmem:[%s201 + $0x4a4] sm:$0xf] %v796
                %v798 = vld [vmem:[%s200 + $0x950] sm:$0xf]
                %799 = vst [vmem:[%s201 + $0x4a8] sm:$0xf] %v798
                %v800 = vld [vmem:[%s200 + $0x954] sm:$0xf]
                %801 = vst [vmem:[%s201 + $0x4ac] sm:$0xf] %v800
                %v802 = vld [vmem:[%s200 + $0x960] sm:$0xf]
                %803 = vst [vmem:[%s201 + $0x4b0] sm:$0xf] %v802
                %v804 = vld [vmem:[%s200 + $0x964] sm:$0xf]
                %805 = vst [vmem:[%s201 + $0x4b4] sm:$0xf] %v804
                %v806 = vld [vmem:[%s200 + $0x970] sm:$0xf]
                %807 = vst [vmem:[%s201 + $0x4b8] sm:$0xf] %v806
                %v808 = vld [vmem:[%s200 + $0x974] sm:$0xf]
                %809 = vst [vmem:[%s201 + $0x4bc] sm:$0xf] %v808
                %v810 = vld [vmem:[%s200 + $0x980] sm:$0xf]
                %811 = vst [vmem:[%s201 + $0x4c0] sm:$0xf] %v810
                %v812 = vld [vmem:[%s200 + $0x984] sm:$0xf]
                %813 = vst [vmem:[%s201 + $0x4c4] sm:$0xf] %v812
                %v814 = vld [vmem:[%s200 + $0x990] sm:$0xf]
                %815 = vst [vmem:[%s201 + $0x4c8] sm:$0xf] %v814
                %v816 = vld [vmem:[%s200 + $0x994] sm:$0xf]
                %817 = vst [vmem:[%s201 + $0x4cc] sm:$0xf] %v816
                %v818 = vld [vmem:[%s200 + $0x9a0] sm:$0xf]
                %819 = vst [vmem:[%s201 + $0x4d0] sm:$0xf] %v818
                %v820 = vld [vmem:[%s200 + $0x9a4] sm:$0xf]
                %821 = vst [vmem:[%s201 + $0x4d4] sm:$0xf] %v820
                %v822 = vld [vmem:[%s200 + $0x9b0] sm:$0xf]
                %823 = vst [vmem:[%s201 + $0x4d8] sm:$0xf] %v822
                %v824 = vld [vmem:[%s200 + $0x9b4] sm:$0xf]
                %825 = vst [vmem:[%s201 + $0x4dc] sm:$0xf] %v824
                %v826 = vld [vmem:[%s200 + $0x9c0] sm:$0xf]
                %827 = vst [vmem:[%s201 + $0x4e0] sm:$0xf] %v826
                %v828 = vld [vmem:[%s200 + $0x9c4] sm:$0xf]
                %829 = vst [vmem:[%s201 + $0x4e4] sm:$0xf] %v828
                %v830 = vld [vmem:[%s200 + $0x9d0] sm:$0xf]
                %831 = vst [vmem:[%s201 + $0x4e8] sm:$0xf] %v830
                %v832 = vld [vmem:[%s200 + $0x9d4] sm:$0xf]
                %833 = vst [vmem:[%s201 + $0x4ec] sm:$0xf] %v832
                %v834 = vld [vmem:[%s200 + $0x9e0] sm:$0xf]
                %835 = vst [vmem:[%s201 + $0x4f0] sm:$0xf] %v834
                %v836 = vld [vmem:[%s200 + $0x9e4] sm:$0xf]
                %837 = vst [vmem:[%s201 + $0x4f4] sm:$0xf] %v836
                %v838 = vld [vmem:[%s200 + $0x9f0] sm:$0xf]
                %839 = vst [vmem:[%s201 + $0x4f8] sm:$0xf] %v838
                %v840 = vld [vmem:[%s200 + $0x9f4] sm:$0xf]
                %841 = vst [vmem:[%s201 + $0x4fc] sm:$0xf] %v840
                %v842 = vld [vmem:[%s200 + $0xa00] sm:$0xf]
                %843 = vst [vmem:[%s201 + $0x500] sm:$0xf] %v842
                %v844 = vld [vmem:[%s200 + $0xa04] sm:$0xf]
                %845 = vst [vmem:[%s201 + $0x504] sm:$0xf] %v844
                %v846 = vld [vmem:[%s200 + $0xa10] sm:$0xf]
                %847 = vst [vmem:[%s201 + $0x508] sm:$0xf] %v846
                %v848 = vld [vmem:[%s200 + $0xa14] sm:$0xf]
                %849 = vst [vmem:[%s201 + $0x50c] sm:$0xf] %v848
                %v850 = vld [vmem:[%s200 + $0xa20] sm:$0xf]
                %851 = vst [vmem:[%s201 + $0x510] sm:$0xf] %v850
                %v852 = vld [vmem:[%s200 + $0xa24] sm:$0xf]
                %853 = vst [vmem:[%s201 + $0x514] sm:$0xf] %v852
                %v854 = vld [vmem:[%s200 + $0xa30] sm:$0xf]
                %855 = vst [vmem:[%s201 + $0x518] sm:$0xf] %v854
                %v856 = vld [vmem:[%s200 + $0xa34] sm:$0xf]
                %857 = vst [vmem:[%s201 + $0x51c] sm:$0xf] %v856
                %v858 = vld [vmem:[%s200 + $0xa40] sm:$0xf]
                %859 = vst [vmem:[%s201 + $0x520] sm:$0xf] %v858
                %v860 = vld [vmem:[%s200 + $0xa44] sm:$0xf]
                %861 = vst [vmem:[%s201 + $0x524] sm:$0xf] %v860
                %v862 = vld [vmem:[%s200 + $0xa50] sm:$0xf]
                %863 = vst [vmem:[%s201 + $0x528] sm:$0xf] %v862
                %v864 = vld [vmem:[%s200 + $0xa54] sm:$0xf]
                %865 = vst [vmem:[%s201 + $0x52c] sm:$0xf] %v864
                %v866 = vld [vmem:[%s200 + $0xa60] sm:$0xf]
                %867 = vst [vmem:[%s201 + $0x530] sm:$0xf] %v866
                %v868 = vld [vmem:[%s200 + $0xa64] sm:$0xf]
                %869 = vst [vmem:[%s201 + $0x534] sm:$0xf] %v868
                %v870 = vld [vmem:[%s200 + $0xa70] sm:$0xf]
                %871 = vst [vmem:[%s201 + $0x538] sm:$0xf] %v870
                %v872 = vld [vmem:[%s200 + $0xa74] sm:$0xf]
                %873 = vst [vmem:[%s201 + $0x53c] sm:$0xf] %v872
                %v874 = vld [vmem:[%s200 + $0xa80] sm:$0xf]
                %875 = vst [vmem:[%s201 + $0x540] sm:$0xf] %v874
                %v876 = vld [vmem:[%s200 + $0xa84] sm:$0xf]
                %877 = vst [vmem:[%s201 + $0x544] sm:$0xf] %v876
                %v878 = vld [vmem:[%s200 + $0xa90] sm:$0xf]
                %879 = vst [vmem:[%s201 + $0x548] sm:$0xf] %v878
                %v880 = vld [vmem:[%s200 + $0xa94] sm:$0xf]
                %881 = vst [vmem:[%s201 + $0x54c] sm:$0xf] %v880
                %v882 = vld [vmem:[%s200 + $0xaa0] sm:$0xf]
                %883 = vst [vmem:[%s201 + $0x550] sm:$0xf] %v882
                %v884 = vld [vmem:[%s200 + $0xaa4] sm:$0xf]
                %885 = vst [vmem:[%s201 + $0x554] sm:$0xf] %v884
                %v886 = vld [vmem:[%s200 + $0xab0] sm:$0xf]
                %887 = vst [vmem:[%s201 + $0x558] sm:$0xf] %v886
                %v888 = vld [vmem:[%s200 + $0xab4] sm:$0xf]
                %889 = vst [vmem:[%s201 + $0x55c] sm:$0xf] %v888
                %v890 = vld [vmem:[%s200 + $0xac0] sm:$0xf]
                %891 = vst [vmem:[%s201 + $0x560] sm:$0xf] %v890
                %v892 = vld [vmem:[%s200 + $0xac4] sm:$0xf]
                %893 = vst [vmem:[%s201 + $0x564] sm:$0xf] %v892
                %v894 = vld [vmem:[%s200 + $0xad0] sm:$0xf]
                %895 = vst [vmem:[%s201 + $0x568] sm:$0xf] %v894
                %v896 = vld [vmem:[%s200 + $0xad4] sm:$0xf]
                %897 = vst [vmem:[%s201 + $0x56c] sm:$0xf] %v896
                %v898 = vld [vmem:[%s200 + $0xae0] sm:$0xf]
                %899 = vst [vmem:[%s201 + $0x570] sm:$0xf] %v898
                %v900 = vld [vmem:[%s200 + $0xae4] sm:$0xf]
                %901 = vst [vmem:[%s201 + $0x574] sm:$0xf] %v900
                %v902 = vld [vmem:[%s200 + $0xaf0] sm:$0xf]
                %903 = vst [vmem:[%s201 + $0x578] sm:$0xf] %v902
                %v904 = vld [vmem:[%s200 + $0xaf4] sm:$0xf]
                %905 = vst [vmem:[%s201 + $0x57c] sm:$0xf] %v904
                %v906 = vld [vmem:[%s200 + $0xb00] sm:$0xf]
                %907 = vst [vmem:[%s201 + $0x580] sm:$0xf] %v906
                %v908 = vld [vmem:[%s200 + $0xb04] sm:$0xf]
                %909 = vst [vmem:[%s201 + $0x584] sm:$0xf] %v908
                %v910 = vld [vmem:[%s200 + $0xb10] sm:$0xf]
                %911 = vst [vmem:[%s201 + $0x588] sm:$0xf] %v910
                %v912 = vld [vmem:[%s200 + $0xb14] sm:$0xf]
                %913 = vst [vmem:[%s201 + $0x58c] sm:$0xf] %v912
                %v914 = vld [vmem:[%s200 + $0xb20] sm:$0xf]
                %915 = vst [vmem:[%s201 + $0x590] sm:$0xf] %v914
                %v916 = vld [vmem:[%s200 + $0xb24] sm:$0xf]
                %917 = vst [vmem:[%s201 + $0x594] sm:$0xf] %v916
                %v918 = vld [vmem:[%s200 + $0xb30] sm:$0xf]
                %919 = vst [vmem:[%s201 + $0x598] sm:$0xf] %v918
                %v920 = vld [vmem:[%s200 + $0xb34] sm:$0xf]
                %921 = vst [vmem:[%s201 + $0x59c] sm:$0xf] %v920
                %v922 = vld [vmem:[%s200 + $0xb40] sm:$0xf]
                %923 = vst [vmem:[%s201 + $0x5a0] sm:$0xf] %v922
                %v924 = vld [vmem:[%s200 + $0xb44] sm:$0xf]
                %925 = vst [vmem:[%s201 + $0x5a4] sm:$0xf] %v924
                %v926 = vld [vmem:[%s200 + $0xb50] sm:$0xf]
                %927 = vst [vmem:[%s201 + $0x5a8] sm:$0xf] %v926
                %v928 = vld [vmem:[%s200 + $0xb54] sm:$0xf]
                %929 = vst [vmem:[%s201 + $0x5ac] sm:$0xf] %v928
                %v930 = vld [vmem:[%s200 + $0xb60] sm:$0xf]
                %931 = vst [vmem:[%s201 + $0x5b0] sm:$0xf] %v930
                %v932 = vld [vmem:[%s200 + $0xb64] sm:$0xf]
                %933 = vst [vmem:[%s201 + $0x5b4] sm:$0xf] %v932
                %v934 = vld [vmem:[%s200 + $0xb70] sm:$0xf]
                %935 = vst [vmem:[%s201 + $0x5b8] sm:$0xf] %v934
                %v936 = vld [vmem:[%s200 + $0xb74] sm:$0xf]
                %937 = vst [vmem:[%s201 + $0x5bc] sm:$0xf] %v936
              $region45: #{object_aware_loss.1} parent=39 // loop_footer
                %s199 = sadd.s32 1, %s195
              $region46: #{object_aware_loss.1} parent=39 // loop_footer_branch
                %194 = sbr.rel target = $region42
              $region47: #{object_aware_loss.1} parent=39 // loop_exit
                _
            $region40: #{object_aware_loss.1} parent=31 // pred_fallthru
              _
          $region32: #{object_aware_loss.1} parent=27 // pred_fallthru
            _
          %1693 = vnop
        $region28: #{object_aware_loss.1} parent=23 // pred_fallthru
          _
        // Predicated region
        $region66: #{object_aware_loss.1} parent=23 // pred_check
          %p1694 = pneg %p72
        $region67: #{object_aware_loss.1} parent=23 // pred_check_branch
          %1696 = sbr.rel (%p1694) target = $region69
        $region68: #{object_aware_loss.1} parent=23 // pred_region
          %s1697 = sand.u32 %s62, 1
          %s1698 = sand.u32 %s62, 1
          %s1699 = smul.addr %s1698, 96
          %s1700 = scalar_lea.vmem [#allocation3], %s1699
          %s1701 = smul.u32 4, %s18
          %s1702 = smul.addr %s17, 24
          %s1703 = sadd.s32 %s1701, %s1702
          %s1704 = smul.addr %s1703, 8
          %s1705 = scalar_lea.vmem %s1, %s1704
          // Predicated region
          $region70: #{object_aware_loss.1} parent=68 // pred_check
            _
          $region71: #{object_aware_loss.1} parent=68 // pred_check_branch
            %1707 = sbr.rel (0) target = $region73
          $region72: #{object_aware_loss.1} parent=68 // pred_region
            // Predicated region
            $region74: #{object_aware_loss.1} parent=72 // pred_check
              _
            $region75: #{object_aware_loss.1} parent=72 // pred_check_branch
              %1709 = sbr.rel (0) target = $region77
            $region76: #{object_aware_loss.1} parent=72 // pred_region
              // Predicated region
              $region89: #{object_aware_loss.1} parent=76 // pred_check
                _
              $region90: #{object_aware_loss.1} parent=76 // pred_check_branch
                %1746 = sbr.rel (0) target = $region92
              $region91: #{object_aware_loss.1} parent=76 // pred_region
                loop: start=0, step=1, limit=1
                $region93: #{object_aware_loss.1} parent=91 // loop_pre_header
                  _
                $region94: #{object_aware_loss.1} parent=91 // loop_header
                  %s1748 = sphi 0, %s1752
                  %p1749 = scmp.ge.s32.totalorder %s1748, 1
                  %s1753 = sphi %s1705, %s1705
                  %s1754 = sphi %s1700, %s1700
                $region95: #{object_aware_loss.1} parent=91 // loop_header_branch
                  %1751 = sbr.rel (%p1749) target = $region99
                $region96: #{object_aware_loss.1} parent=91 // loop_body
                  %v1755 = vld [vmem:[%s1753] sm:$0xff]
                  %1756 = vst [vmem:[%s1754] sm:$0xff] %v1755
                  %v1757 = vld [vmem:[%s1753 + $0x8] sm:$0xff]
                  %1758 = vst [vmem:[%s1754 + $0x8] sm:$0xff] %v1757
                  %v1759 = vld [vmem:[%s1753 + $0x10] sm:$0xff]
                  %1760 = vst [vmem:[%s1754 + $0x10] sm:$0xff] %v1759
                  %v1761 = vld [vmem:[%s1753 + $0x18] sm:$0xff]
                  %1762 = vst [vmem:[%s1754 + $0x18] sm:$0xff] %v1761
                  %v1763 = vld [vmem:[%s1753 + $0x40] sm:$0xff]
                  %1764 = vst [vmem:[%s1754 + $0x20] sm:$0xff] %v1763
                  %v1765 = vld [vmem:[%s1753 + $0x48] sm:$0xff]
                  %1766 = vst [vmem:[%s1754 + $0x28] sm:$0xff] %v1765
                  %v1767 = vld [vmem:[%s1753 + $0x50] sm:$0xff]
                  %1768 = vst [vmem:[%s1754 + $0x30] sm:$0xff] %v1767
                  %v1769 = vld [vmem:[%s1753 + $0x58] sm:$0xff]
                  %1770 = vst [vmem:[%s1754 + $0x38] sm:$0xff] %v1769
                  %v1771 = vld [vmem:[%s1753 + $0x80] sm:$0xff]
                  %1772 = vst [vmem:[%s1754 + $0x40] sm:$0xff] %v1771
                  %v1773 = vld [vmem:[%s1753 + $0x88] sm:$0xff]
                  %1774 = vst [vmem:[%s1754 + $0x48] sm:$0xff] %v1773
                  %v1775 = vld [vmem:[%s1753 + $0x90] sm:$0xff]
                  %1776 = vst [vmem:[%s1754 + $0x50] sm:$0xff] %v1775
                  %v1777 = vld [vmem:[%s1753 + $0x98] sm:$0xff]
                  %1778 = vst [vmem:[%s1754 + $0x58] sm:$0xff] %v1777
                $region97: #{object_aware_loss.1} parent=91 // loop_footer
                  %s1752 = sadd.s32 1, %s1748
                $region98: #{object_aware_loss.1} parent=91 // loop_footer_branch
                  %1747 = sbr.rel target = $region94
                $region99: #{object_aware_loss.1} parent=91 // loop_exit
                  _
              $region92: #{object_aware_loss.1} parent=76 // pred_fallthru
                _
              // Predicated region
              $region100: #{object_aware_loss.1} parent=76 // pred_check
                _
              $region101: #{object_aware_loss.1} parent=76 // pred_check_branch
                %1780 = sbr.rel target = $region103
              $region102: #{object_aware_loss.1} parent=76 // pred_region
                _
              $region103: #{object_aware_loss.1} parent=76 // pred_fallthru
                _
            $region77: #{object_aware_loss.1} parent=72 // pred_fallthru
              _
            // Predicated region
            $region78: #{object_aware_loss.1} parent=72 // pred_check
              _
            $region79: #{object_aware_loss.1} parent=72 // pred_check_branch
              %1711 = sbr.rel target = $region81
            $region80: #{object_aware_loss.1} parent=72 // pred_region
              loop: start=0, step=1, limit=1
              $region82: #{object_aware_loss.1} parent=80 // loop_pre_header
                _
              $region83: #{object_aware_loss.1} parent=80 // loop_header
                %s1714 = sphi 0, %s1718
                %p1715 = scmp.ge.s32.totalorder %s1714, 1
                %s1719 = sphi %s1705, %s1705
                %s1720 = sphi %s1700, %s1700
              $region84: #{object_aware_loss.1} parent=80 // loop_header_branch
                %1717 = sbr.rel (%p1715) target = $region88
              $region85: #{object_aware_loss.1} parent=80 // loop_body
                %v1721 = vld [vmem:[%s1719] sm:$0xff]
                %1722 = vst [vmem:[%s1720] sm:$0xff] %v1721
                %v1723 = vld [vmem:[%s1719 + $0x8] sm:$0xff]
                %1724 = vst [vmem:[%s1720 + $0x8] sm:$0xff] %v1723
                %v1725 = vld [vmem:[%s1719 + $0x10] sm:$0xff]
                %1726 = vst [vmem:[%s1720 + $0x10] sm:$0xff] %v1725
                %v1727 = vld [vmem:[%s1719 + $0x18] sm:$0xff]
                %1728 = vst [vmem:[%s1720 + $0x18] sm:$0xff] %v1727
                %v1729 = vld [vmem:[%s1719 + $0x40] sm:$0xff]
                %1730 = vst [vmem:[%s1720 + $0x20] sm:$0xff] %v1729
                %v1731 = vld [vmem:[%s1719 + $0x48] sm:$0xff]
                %1732 = vst [vmem:[%s1720 + $0x28] sm:$0xff] %v1731
                %v1733 = vld [vmem:[%s1719 + $0x50] sm:$0xff]
                %1734 = vst [vmem:[%s1720 + $0x30] sm:$0xff] %v1733
                %v1735 = vld [vmem:[%s1719 + $0x58] sm:$0xff]
                %1736 = vst [vmem:[%s1720 + $0x38] sm:$0xff] %v1735
                %v1737 = vld [vmem:[%s1719 + $0x80] sm:$0xff]
                %1738 = vst [vmem:[%s1720 + $0x40] sm:$0xff] %v1737
                %v1739 = vld [vmem:[%s1719 + $0x88] sm:$0xff]
                %1740 = vst [vmem:[%s1720 + $0x48] sm:$0xff] %v1739
                %v1741 = vld [vmem:[%s1719 + $0x90] sm:$0xff]
                %1742 = vst [vmem:[%s1720 + $0x50] sm:$0xff] %v1741
                %v1743 = vld [vmem:[%s1719 + $0x98] sm:$0xff]
                %1744 = vst [vmem:[%s1720 + $0x58] sm:$0xff] %v1743
              $region86: #{object_aware_loss.1} parent=80 // loop_footer
                %s1718 = sadd.s32 1, %s1714
              $region87: #{object_aware_loss.1} parent=80 // loop_footer_branch
                %1713 = sbr.rel target = $region83
              $region88: #{object_aware_loss.1} parent=80 // loop_exit
                _
            $region81: #{object_aware_loss.1} parent=72 // pred_fallthru
              _
          $region73: #{object_aware_loss.1} parent=68 // pred_fallthru
            _
          %1781 = vnop
        $region69: #{object_aware_loss.1} parent=23 // pred_fallthru
          _
      $region24: #{object_aware_loss.1} parent=5 // pred_fallthru
        _
      %p1782 = scmp.le.s32.totalorder 1, %s10
      %p1783 = scmp.lt.s32.totalorder %s10, 5
      %p1784 = pnand %p1782, %p1783
      %p1785 = pneg %p1784
      // Predicated region
      $region104: #{object_aware_loss.1} parent=5 // pred_check
        _
      $region105: #{object_aware_loss.1} parent=5 // pred_check_branch
        %1787 = sbr.rel (%p1784) target = $region107
      $region106: #{object_aware_loss.1} parent=5 // pred_region
        %s1788 = ssub.s32 %s10, 1
        %s1789 = sand.u32 %s37, 1
        %s1790 = sand.u32 %s37, 1
        %s1791 = smul.addr %s1790, 1472
        %s1792 = scalar_lea.vmem [#allocation2], %s1791
        // Predicated region
        $region108: #{object_aware_loss.1} parent=106 // pred_check
          %p1793 = pneg %p50
        $region109: #{object_aware_loss.1} parent=106 // pred_check_branch
          %1795 = sbr.rel (%p1793) target = $region111
        $region110: #{object_aware_loss.1} parent=106 // pred_region
          _
        $region111: #{object_aware_loss.1} parent=106 // pred_fallthru
          _
        %s1796 = sand.u32 %s65, 1
        %s1797 = sand.u32 %s65, 1
        %s1798 = smul.addr %s1797, 96
        %s1799 = scalar_lea.vmem [#allocation3], %s1798
        // Predicated region
        $region112: #{object_aware_loss.1} parent=106 // pred_check
          %p1800 = pneg %p78
        $region113: #{object_aware_loss.1} parent=106 // pred_check_branch
          %1802 = sbr.rel (%p1800) target = $region115
        $region114: #{object_aware_loss.1} parent=106 // pred_region
          _
        $region115: #{object_aware_loss.1} parent=106 // pred_fallthru
          _
        %s1803 = sand.u32 %s37, 1
        %s1804 = sand.u32 %s37, 1
        %s1805 = smul.addr %s1804, 1472
        %s1806 = scalar_lea.vmem [#allocation2], %s1805
        %p1807 = pneg %p50
        %p1808 = pneg %p47
        %s1809 = sand.u32 %s65, 1
        %s1810 = sand.u32 %s65, 1
        %s1811 = smul.addr %s1810, 96
        %s1812 = scalar_lea.vmem [#allocation3], %s1811
        %p1813 = pneg %p78
        %p1814 = pneg %p75
        %p1815 = pneg %p99
        %p1816 = pneg %p96
        %p1817 = pneg %p120
        %p1818 = pneg %p117
        %p1819 = pneg %p150
        %p1820 = pneg %p147
        %s1821 = smul.u32 %s19, 2
        %s1822 = sadd.s32 %s1821, %s20
        %p1823 = scmp.lt.s32.totalorder %s1822, 3
        %s1824 = scalar_select %p1823, %s1822, 3
        %s1825 = smul.addr %s1824, 2
        %s1826 = smul.addr %s1825, 8
        %s1827 = scalar_lea.vmem %s4, %s1826
        %s1828 = smul.u32 2, %s20
        %s1829 = smul.u32 4, %s20
        %s1830 = smul.u32 %s19, 2
        %s1831 = sadd.s32 %s1830, %s20
        %p1832 = scmp.lt.s32.totalorder %s1831, 3
        %s1833 = scalar_select %p1832, %s1831, 3
        %s1834 = smul.addr %s1833, 2
        %s1835 = smul.addr %s1834, 8
        %s1836 = scalar_lea.vmem %s4, %s1835
        %s1837 = smul.u32 %s19, 2
        %s1838 = sadd.s32 %s1837, %s20
        %s1839 = scalar_lea.vmem %s1792, 8 [#allocation2]
        %v1840 = vld [vmem:[%s1839] sm:$0xf]
        %v1841 = vld [vmem:[%s1839 + $0x4] sm:$0xf]
        %v1842 = vunpack.c.l.bf16 %v1840
        %v1843 = vunpack.c.l.bf16 %v1841
        %s1844 = scalar_lea.vmem %s1792, 40 [#allocation2]
        %v1845 = vld [vmem:[%s1844] sm:$0xf]
        %v1846 = vld [vmem:[%s1844 + $0x4] sm:$0xf]
        %v1847 = vunpack.c.l.bf16 %v1845
        %v1848 = vunpack.c.l.bf16 %v1846
        %v1849 = vadd.f32 %v1842, %v1847
        %v1850 = vadd.f32 %v1843, %v1848
        %s1851 = scalar_lea.vmem %s1792, 72 [#allocation2]
        %v1852 = vld [vmem:[%s1851] sm:$0xf]
        %v1853 = vld [vmem:[%s1851 + $0x4] sm:$0xf]
        %v1854 = vunpack.c.l.bf16 %v1852
        %v1855 = vunpack.c.l.bf16 %v1853
        %v1856 = vadd.f32 %v1849, %v1854
        %v1857 = vadd.f32 %v1850, %v1855
        %s1858 = scalar_lea.vmem %s1792, 104 [#allocation2]
        %v1859 = vld [vmem:[%s1858] sm:$0xf]
        %v1860 = vld [vmem:[%s1858 + $0x4] sm:$0xf]
        %v1861 = vunpack.c.l.bf16 %v1859
        %v1862 = vunpack.c.l.bf16 %v1860
        %v1863 = vadd.f32 %v1856, %v1861
        %v1864 = vadd.f32 %v1857, %v1862
        %s1865 = scalar_lea.vmem %s1792, 136 [#allocation2]
        %v1866 = vld [vmem:[%s1865] sm:$0xf]
        %v1867 = vld [vmem:[%s1865 + $0x4] sm:$0xf]
        %v1868 = vunpack.c.l.bf16 %v1866
        %v1869 = vunpack.c.l.bf16 %v1867
        %v1870 = vadd.f32 %v1863, %v1868
        %v1871 = vadd.f32 %v1864, %v1869
        %s1872 = scalar_lea.vmem %s1792, 168 [#allocation2]
        %v1873 = vld [vmem:[%s1872] sm:$0xf]
        %v1874 = vld [vmem:[%s1872 + $0x4] sm:$0xf]
        %v1875 = vunpack.c.l.bf16 %v1873
        %v1876 = vunpack.c.l.bf16 %v1874
        %v1877 = vadd.f32 %v1870, %v1875
        %v1878 = vadd.f32 %v1871, %v1876
        %s1879 = scalar_lea.vmem %s1792, 200 [#allocation2]
        %v1880 = vld [vmem:[%s1879] sm:$0xf]
        %v1881 = vld [vmem:[%s1879 + $0x4] sm:$0xf]
        %v1882 = vunpack.c.l.bf16 %v1880
        %v1883 = vunpack.c.l.bf16 %v1881
        %v1884 = vadd.f32 %v1877, %v1882
        %v1885 = vadd.f32 %v1878, %v1883
        %s1886 = scalar_lea.vmem %s1792, 232 [#allocation2]
        %v1887 = vld [vmem:[%s1886] sm:$0xf]
        %v1888 = vld [vmem:[%s1886 + $0x4] sm:$0xf]
        %v1889 = vunpack.c.l.bf16 %v1887
        %v1890 = vunpack.c.l.bf16 %v1888
        %v1891 = vadd.f32 %v1884, %v1889
        %v1892 = vadd.f32 %v1885, %v1890
        %s1893 = scalar_lea.vmem %s1792, 264 [#allocation2]
        %v1894 = vld [vmem:[%s1893] sm:$0xf]
        %v1895 = vld [vmem:[%s1893 + $0x4] sm:$0xf]
        %v1896 = vunpack.c.l.bf16 %v1894
        %v1897 = vunpack.c.l.bf16 %v1895
        %v1898 = vadd.f32 %v1891, %v1896
        %v1899 = vadd.f32 %v1892, %v1897
        %s1900 = scalar_lea.vmem %s1792, 296 [#allocation2]
        %v1901 = vld [vmem:[%s1900] sm:$0xf]
        %v1902 = vld [vmem:[%s1900 + $0x4] sm:$0xf]
        %v1903 = vunpack.c.l.bf16 %v1901
        %v1904 = vunpack.c.l.bf16 %v1902
        %v1905 = vadd.f32 %v1898, %v1903
        %v1906 = vadd.f32 %v1899, %v1904
        %s1907 = scalar_lea.vmem %s1792, 328 [#allocation2]
        %v1908 = vld [vmem:[%s1907] sm:$0xf]
        %v1909 = vld [vmem:[%s1907 + $0x4] sm:$0xf]
        %v1910 = vunpack.c.l.bf16 %v1908
        %v1911 = vunpack.c.l.bf16 %v1909
        %v1912 = vadd.f32 %v1905, %v1910
        %v1913 = vadd.f32 %v1906, %v1911
        %s1914 = scalar_lea.vmem %s1792, 360 [#allocation2]
        %v1915 = vld [vmem:[%s1914] sm:$0xf]
        %v1916 = vld [vmem:[%s1914 + $0x4] sm:$0xf]
        %v1917 = vunpack.c.l.bf16 %v1915
        %v1918 = vunpack.c.l.bf16 %v1916
        %v1919 = vadd.f32 %v1912, %v1917
        %v1920 = vadd.f32 %v1913, %v1918
        %s1921 = scalar_lea.vmem %s1792, 392 [#allocation2]
        %v1922 = vld [vmem:[%s1921] sm:$0xf]
        %v1923 = vld [vmem:[%s1921 + $0x4] sm:$0xf]
        %v1924 = vunpack.c.l.bf16 %v1922
        %v1925 = vunpack.c.l.bf16 %v1923
        %v1926 = vadd.f32 %v1919, %v1924
        %v1927 = vadd.f32 %v1920, %v1925
        %s1928 = scalar_lea.vmem %s1792, 424 [#allocation2]
        %v1929 = vld [vmem:[%s1928] sm:$0xf]
        %v1930 = vld [vmem:[%s1928 + $0x4] sm:$0xf]
        %v1931 = vunpack.c.l.bf16 %v1929
        %v1932 = vunpack.c.l.bf16 %v1930
        %v1933 = vadd.f32 %v1926, %v1931
        %v1934 = vadd.f32 %v1927, %v1932
        %s1935 = scalar_lea.vmem %s1792, 456 [#allocation2]
        %v1936 = vld [vmem:[%s1935] sm:$0xf]
        %v1937 = vld [vmem:[%s1935 + $0x4] sm:$0xf]
        %v1938 = vunpack.c.l.bf16 %v1936
        %v1939 = vunpack.c.l.bf16 %v1937
        %v1940 = vadd.f32 %v1933, %v1938
        %v1941 = vadd.f32 %v1934, %v1939
        %s1942 = scalar_lea.vmem %s1792, 488 [#allocation2]
        %v1943 = vld [vmem:[%s1942] sm:$0xf]
        %v1944 = vld [vmem:[%s1942 + $0x4] sm:$0xf]
        %v1945 = vunpack.c.l.bf16 %v1943
        %v1946 = vunpack.c.l.bf16 %v1944
        %v1947 = vadd.f32 %v1940, %v1945
        %v1948 = vadd.f32 %v1941, %v1946
        %s1949 = scalar_lea.vmem %s1792, 520 [#allocation2]
        %v1950 = vld [vmem:[%s1949] sm:$0xf]
        %v1951 = vld [vmem:[%s1949 + $0x4] sm:$0xf]
        %v1952 = vunpack.c.l.bf16 %v1950
        %v1953 = vunpack.c.l.bf16 %v1951
        %v1954 = vadd.f32 %v1947, %v1952
        %v1955 = vadd.f32 %v1948, %v1953
        %s1956 = scalar_lea.vmem %s1792, 552 [#allocation2]
        %v1957 = vld [vmem:[%s1956] sm:$0xf]
        %v1958 = vld [vmem:[%s1956 + $0x4] sm:$0xf]
        %v1959 = vunpack.c.l.bf16 %v1957
        %v1960 = vunpack.c.l.bf16 %v1958
        %v1961 = vadd.f32 %v1954, %v1959
        %v1962 = vadd.f32 %v1955, %v1960
        %s1963 = scalar_lea.vmem %s1792, 584 [#allocation2]
        %v1964 = vld [vmem:[%s1963] sm:$0xf]
        %v1965 = vld [vmem:[%s1963 + $0x4] sm:$0xf]
        %v1966 = vunpack.c.l.bf16 %v1964
        %v1967 = vunpack.c.l.bf16 %v1965
        %v1968 = vadd.f32 %v1961, %v1966
        %v1969 = vadd.f32 %v1962, %v1967
        %s1970 = scalar_lea.vmem %s1792, 616 [#allocation2]
        %v1971 = vld [vmem:[%s1970] sm:$0xf]
        %v1972 = vld [vmem:[%s1970 + $0x4] sm:$0xf]
        %v1973 = vunpack.c.l.bf16 %v1971
        %v1974 = vunpack.c.l.bf16 %v1972
        %v1975 = vadd.f32 %v1968, %v1973
        %v1976 = vadd.f32 %v1969, %v1974
        %s1977 = scalar_lea.vmem %s1792, 648 [#allocation2]
        %v1978 = vld [vmem:[%s1977] sm:$0xf]
        %v1979 = vld [vmem:[%s1977 + $0x4] sm:$0xf]
        %v1980 = vunpack.c.l.bf16 %v1978
        %v1981 = vunpack.c.l.bf16 %v1979
        %v1982 = vadd.f32 %v1975, %v1980
        %v1983 = vadd.f32 %v1976, %v1981
        %s1984 = scalar_lea.vmem %s1792, 680 [#allocation2]
        %v1985 = vld [vmem:[%s1984] sm:$0xf]
        %v1986 = vld [vmem:[%s1984 + $0x4] sm:$0xf]
        %v1987 = vunpack.c.l.bf16 %v1985
        %v1988 = vunpack.c.l.bf16 %v1986
        %v1989 = vadd.f32 %v1982, %v1987
        %v1990 = vadd.f32 %v1983, %v1988
        %s1991 = scalar_lea.vmem %s1792, 712 [#allocation2]
        %v1992 = vld [vmem:[%s1991] sm:$0xf]
        %v1993 = vld [vmem:[%s1991 + $0x4] sm:$0xf]
        %v1994 = vunpack.c.l.bf16 %v1992
        %v1995 = vunpack.c.l.bf16 %v1993
        %v1996 = vadd.f32 %v1989, %v1994
        %v1997 = vadd.f32 %v1990, %v1995
        %s1998 = scalar_lea.vmem %s1792, 744 [#allocation2]
        %v1999 = vld [vmem:[%s1998] sm:$0xf]
        %v2000 = vld [vmem:[%s1998 + $0x4] sm:$0xf]
        %v2001 = vunpack.c.l.bf16 %v1999
        %v2002 = vunpack.c.l.bf16 %v2000
        %v2003 = vadd.f32 %v1996, %v2001
        %v2004 = vadd.f32 %v1997, %v2002
        %s2005 = scalar_lea.vmem %s1792, 792 [#allocation2]
        %v2006 = vld [vmem:[%s2005] sm:$0xf]
        %v2007 = vld [vmem:[%s2005 + $0x4] sm:$0xf]
        %v2008 = vunpack.c.l.bf16 %v2006
        %v2009 = vunpack.c.l.bf16 %v2007
        %v2010 = vadd.f32 %v2003, %v2008
        %v2011 = vadd.f32 %v2004, %v2009
        %s2012 = scalar_lea.vmem %s1792, 856 [#allocation2]
        %v2013 = vld [vmem:[%s2012] sm:$0xf]
        %v2014 = vld [vmem:[%s2012 + $0x4] sm:$0xf]
        %v2015 = vunpack.c.l.bf16 %v2013
        %v2016 = vunpack.c.l.bf16 %v2014
        %v2017 = vadd.f32 %v2010, %v2015
        %v2018 = vadd.f32 %v2011, %v2016
        %s2019 = scalar_lea.vmem %s1792, 896 [#allocation2]
        %v2020 = vld [vmem:[%s2019] sm:$0xf]
        %v2021 = vld [vmem:[%s2019 + $0x4] sm:$0xf]
        %v2022 = vunpack.c.l.bf16 %v2020
        %v2023 = vunpack.c.l.bf16 %v2021
        %v2024 = vadd.f32 %v2017, %v2022
        %v2025 = vadd.f32 %v2018, %v2023
        %s2026 = scalar_lea.vmem %s1792, 1024 [#allocation2]
        %v2027 = vld [vmem:[%s2026] sm:$0xf]
        %v2028 = vld [vmem:[%s2026 + $0x4] sm:$0xf]
        %v2029 = vunpack.c.l.bf16 %v2027
        %v2030 = vunpack.c.l.bf16 %v2028
        %v2031 = vadd.f32 %v2024, %v2029
        %v2032 = vadd.f32 %v2025, %v2030
        %s2033 = scalar_lea.vmem %s1792, 1152 [#allocation2]
        %v2034 = vld [vmem:[%s2033] sm:$0xf]
        %v2035 = vld [vmem:[%s2033 + $0x4] sm:$0xf]
        %v2036 = vunpack.c.l.bf16 %v2034
        %v2037 = vunpack.c.l.bf16 %v2035
        %v2038 = vadd.f32 %v2031, %v2036
        %v2039 = vadd.f32 %v2032, %v2037
        %s2040 = scalar_lea.vmem %s1792, 1288 [#allocation2]
        %v2041 = vld [vmem:[%s2040] sm:$0xf]
        %v2042 = vld [vmem:[%s2040 + $0x4] sm:$0xf]
        %v2043 = vunpack.c.l.bf16 %v2041
        %v2044 = vunpack.c.l.bf16 %v2042
        %v2045 = vadd.f32 %v2038, %v2043
        %v2046 = vadd.f32 %v2039, %v2044
        %s2047 = scalar_lea.vmem %s1792, 1360 [#allocation2]
        %v2048 = vld [vmem:[%s2047] sm:$0xf]
        %v2049 = vld [vmem:[%s2047 + $0x4] sm:$0xf]
        %v2050 = vunpack.c.l.bf16 %v2048
        %v2051 = vunpack.c.l.bf16 %v2049
        %v2052 = vadd.f32 %v2045, %v2050
        %v2053 = vadd.f32 %v2046, %v2051
        %s2054 = scalar_lea.vmem %s1792, 16 [#allocation2]
        %v2055 = vld [vmem:[%s2054] sm:$0xf]
        %v2056 = vld [vmem:[%s2054 + $0x4] sm:$0xf]
        %v2057 = vunpack.c.l.bf16 %v2055
        %v2058 = vunpack.c.l.bf16 %v2056
        %s2059 = scalar_lea.vmem %s1792, 48 [#allocation2]
        %v2060 = vld [vmem:[%s2059] sm:$0xf]
        %v2061 = vld [vmem:[%s2059 + $0x4] sm:$0xf]
        %v2062 = vunpack.c.l.bf16 %v2060
        %v2063 = vunpack.c.l.bf16 %v2061
        %v2064 = vadd.f32 %v2057, %v2062
        %v2065 = vadd.f32 %v2058, %v2063
        %s2066 = scalar_lea.vmem %s1792, 80 [#allocation2]
        %v2067 = vld [vmem:[%s2066] sm:$0xf]
        %v2068 = vld [vmem:[%s2066 + $0x4] sm:$0xf]
        %v2069 = vunpack.c.l.bf16 %v2067
        %v2070 = vunpack.c.l.bf16 %v2068
        %v2071 = vadd.f32 %v2064, %v2069
        %v2072 = vadd.f32 %v2065, %v2070
        %s2073 = scalar_lea.vmem %s1792, 112 [#allocation2]
        %v2074 = vld [vmem:[%s2073] sm:$0xf]
        %v2075 = vld [vmem:[%s2073 + $0x4] sm:$0xf]
        %v2076 = vunpack.c.l.bf16 %v2074
        %v2077 = vunpack.c.l.bf16 %v2075
        %v2078 = vadd.f32 %v2071, %v2076
        %v2079 = vadd.f32 %v2072, %v2077
        %s2080 = scalar_lea.vmem %s1792, 144 [#allocation2]
        %v2081 = vld [vmem:[%s2080] sm:$0xf]
        %v2082 = vld [vmem:[%s2080 + $0x4] sm:$0xf]
        %v2083 = vunpack.c.l.bf16 %v2081
        %v2084 = vunpack.c.l.bf16 %v2082
        %v2085 = vadd.f32 %v2078, %v2083
        %v2086 = vadd.f32 %v2079, %v2084
        %s2087 = scalar_lea.vmem %s1792, 176 [#allocation2]
        %v2088 = vld [vmem:[%s2087] sm:$0xf]
        %v2089 = vld [vmem:[%s2087 + $0x4] sm:$0xf]
        %v2090 = vunpack.c.l.bf16 %v2088
        %v2091 = vunpack.c.l.bf16 %v2089
        %v2092 = vadd.f32 %v2085, %v2090
        %v2093 = vadd.f32 %v2086, %v2091
        %s2094 = scalar_lea.vmem %s1792, 208 [#allocation2]
        %v2095 = vld [vmem:[%s2094] sm:$0xf]
        %v2096 = vld [vmem:[%s2094 + $0x4] sm:$0xf]
        %v2097 = vunpack.c.l.bf16 %v2095
        %v2098 = vunpack.c.l.bf16 %v2096
        %v2099 = vadd.f32 %v2092, %v2097
        %v2100 = vadd.f32 %v2093, %v2098
        %s2101 = scalar_lea.vmem %s1792, 240 [#allocation2]
        %v2102 = vld [vmem:[%s2101] sm:$0xf]
        %v2103 = vld [vmem:[%s2101 + $0x4] sm:$0xf]
        %v2104 = vunpack.c.l.bf16 %v2102
        %v2105 = vunpack.c.l.bf16 %v2103
        %v2106 = vadd.f32 %v2099, %v2104
        %v2107 = vadd.f32 %v2100, %v2105
        %s2108 = scalar_lea.vmem %s1792, 272 [#allocation2]
        %v2109 = vld [vmem:[%s2108] sm:$0xf]
        %v2110 = vld [vmem:[%s2108 + $0x4] sm:$0xf]
        %v2111 = vunpack.c.l.bf16 %v2109
        %v2112 = vunpack.c.l.bf16 %v2110
        %v2113 = vadd.f32 %v2106, %v2111
        %v2114 = vadd.f32 %v2107, %v2112
        %s2115 = scalar_lea.vmem %s1792, 304 [#allocation2]
        %v2116 = vld [vmem:[%s2115] sm:$0xf]
        %v2117 = vld [vmem:[%s2115 + $0x4] sm:$0xf]
        %v2118 = vunpack.c.l.bf16 %v2116
        %v2119 = vunpack.c.l.bf16 %v2117
        %v2120 = vadd.f32 %v2113, %v2118
        %v2121 = vadd.f32 %v2114, %v2119
        %s2122 = scalar_lea.vmem %s1792, 336 [#allocation2]
        %v2123 = vld [vmem:[%s2122] sm:$0xf]
        %v2124 = vld [vmem:[%s2122 + $0x4] sm:$0xf]
        %v2125 = vunpack.c.l.bf16 %v2123
        %v2126 = vunpack.c.l.bf16 %v2124
        %v2127 = vadd.f32 %v2120, %v2125
        %v2128 = vadd.f32 %v2121, %v2126
        %s2129 = scalar_lea.vmem %s1792, 368 [#allocation2]
        %v2130 = vld [vmem:[%s2129] sm:$0xf]
        %v2131 = vld [vmem:[%s2129 + $0x4] sm:$0xf]
        %v2132 = vunpack.c.l.bf16 %v2130
        %v2133 = vunpack.c.l.bf16 %v2131
        %v2134 = vadd.f32 %v2127, %v2132
        %v2135 = vadd.f32 %v2128, %v2133
        %s2136 = scalar_lea.vmem %s1792, 400 [#allocation2]
        %v2137 = vld [vmem:[%s2136] sm:$0xf]
        %v2138 = vld [vmem:[%s2136 + $0x4] sm:$0xf]
        %v2139 = vunpack.c.l.bf16 %v2137
        %v2140 = vunpack.c.l.bf16 %v2138
        %v2141 = vadd.f32 %v2134, %v2139
        %v2142 = vadd.f32 %v2135, %v2140
        %s2143 = scalar_lea.vmem %s1792, 432 [#allocation2]
        %v2144 = vld [vmem:[%s2143] sm:$0xf]
        %v2145 = vld [vmem:[%s2143 + $0x4] sm:$0xf]
        %v2146 = vunpack.c.l.bf16 %v2144
        %v2147 = vunpack.c.l.bf16 %v2145
        %v2148 = vadd.f32 %v2141, %v2146
        %v2149 = vadd.f32 %v2142, %v2147
        %s2150 = scalar_lea.vmem %s1792, 464 [#allocation2]
        %v2151 = vld [vmem:[%s2150] sm:$0xf]
        %v2152 = vld [vmem:[%s2150 + $0x4] sm:$0xf]
        %v2153 = vunpack.c.l.bf16 %v2151
        %v2154 = vunpack.c.l.bf16 %v2152
        %v2155 = vadd.f32 %v2148, %v2153
        %v2156 = vadd.f32 %v2149, %v2154
        %s2157 = scalar_lea.vmem %s1792, 496 [#allocation2]
        %v2158 = vld [vmem:[%s2157] sm:$0xf]
        %v2159 = vld [vmem:[%s2157 + $0x4] sm:$0xf]
        %v2160 = vunpack.c.l.bf16 %v2158
        %v2161 = vunpack.c.l.bf16 %v2159
        %v2162 = vadd.f32 %v2155, %v2160
        %v2163 = vadd.f32 %v2156, %v2161
        %s2164 = scalar_lea.vmem %s1792, 528 [#allocation2]
        %v2165 = vld [vmem:[%s2164] sm:$0xf]
        %v2166 = vld [vmem:[%s2164 + $0x4] sm:$0xf]
        %v2167 = vunpack.c.l.bf16 %v2165
        %v2168 = vunpack.c.l.bf16 %v2166
        %v2169 = vadd.f32 %v2162, %v2167
        %v2170 = vadd.f32 %v2163, %v2168
        %s2171 = scalar_lea.vmem %s1792, 560 [#allocation2]
        %v2172 = vld [vmem:[%s2171] sm:$0xf]
        %v2173 = vld [vmem:[%s2171 + $0x4] sm:$0xf]
        %v2174 = vunpack.c.l.bf16 %v2172
        %v2175 = vunpack.c.l.bf16 %v2173
        %v2176 = vadd.f32 %v2169, %v2174
        %v2177 = vadd.f32 %v2170, %v2175
        %s2178 = scalar_lea.vmem %s1792, 592 [#allocation2]
        %v2179 = vld [vmem:[%s2178] sm:$0xf]
        %v2180 = vld [vmem:[%s2178 + $0x4] sm:$0xf]
        %v2181 = vunpack.c.l.bf16 %v2179
        %v2182 = vunpack.c.l.bf16 %v2180
        %v2183 = vadd.f32 %v2176, %v2181
        %v2184 = vadd.f32 %v2177, %v2182
        %s2185 = scalar_lea.vmem %s1792, 624 [#allocation2]
        %v2186 = vld [vmem:[%s2185] sm:$0xf]
        %v2187 = vld [vmem:[%s2185 + $0x4] sm:$0xf]
        %v2188 = vunpack.c.l.bf16 %v2186
        %v2189 = vunpack.c.l.bf16 %v2187
        %v2190 = vadd.f32 %v2183, %v2188
        %v2191 = vadd.f32 %v2184, %v2189
        %s2192 = scalar_lea.vmem %s1792, 656 [#allocation2]
        %v2193 = vld [vmem:[%s2192] sm:$0xf]
        %v2194 = vld [vmem:[%s2192 + $0x4] sm:$0xf]
        %v2195 = vunpack.c.l.bf16 %v2193
        %v2196 = vunpack.c.l.bf16 %v2194
        %v2197 = vadd.f32 %v2190, %v2195
        %v2198 = vadd.f32 %v2191, %v2196
        %s2199 = scalar_lea.vmem %s1792, 688 [#allocation2]
        %v2200 = vld [vmem:[%s2199] sm:$0xf]
        %v2201 = vld [vmem:[%s2199 + $0x4] sm:$0xf]
        %v2202 = vunpack.c.l.bf16 %v2200
        %v2203 = vunpack.c.l.bf16 %v2201
        %v2204 = vadd.f32 %v2197, %v2202
        %v2205 = vadd.f32 %v2198, %v2203
        %s2206 = scalar_lea.vmem %s1792, 720 [#allocation2]
        %v2207 = vld [vmem:[%s2206] sm:$0xf]
        %v2208 = vld [vmem:[%s2206 + $0x4] sm:$0xf]
        %v2209 = vunpack.c.l.bf16 %v2207
        %v2210 = vunpack.c.l.bf16 %v2208
        %v2211 = vadd.f32 %v2204, %v2209
        %v2212 = vadd.f32 %v2205, %v2210
        %s2213 = scalar_lea.vmem %s1792, 760 [#allocation2]
        %v2214 = vld [vmem:[%s2213] sm:$0xf]
        %v2215 = vld [vmem:[%s2213 + $0x4] sm:$0xf]
        %v2216 = vunpack.c.l.bf16 %v2214
        %v2217 = vunpack.c.l.bf16 %v2215
        %v2218 = vadd.f32 %v2211, %v2216
        %v2219 = vadd.f32 %v2212, %v2217
        %s2220 = scalar_lea.vmem %s1792, 800 [#allocation2]
        %v2221 = vld [vmem:[%s2220] sm:$0xf]
        %v2222 = vld [vmem:[%s2220 + $0x4] sm:$0xf]
        %v2223 = vunpack.c.l.bf16 %v2221
        %v2224 = vunpack.c.l.bf16 %v2222
        %v2225 = vadd.f32 %v2218, %v2223
        %v2226 = vadd.f32 %v2219, %v2224
        %s2227 = scalar_lea.vmem %s1792, 864 [#allocation2]
        %v2228 = vld [vmem:[%s2227] sm:$0xf]
        %v2229 = vld [vmem:[%s2227 + $0x4] sm:$0xf]
        %v2230 = vunpack.c.l.bf16 %v2228
        %v2231 = vunpack.c.l.bf16 %v2229
        %v2232 = vadd.f32 %v2225, %v2230
        %v2233 = vadd.f32 %v2226, %v2231
        %s2234 = scalar_lea.vmem %s1792, 968 [#allocation2]
        %v2235 = vld [vmem:[%s2234] sm:$0xf]
        %v2236 = vld [vmem:[%s2234 + $0x4] sm:$0xf]
        %v2237 = vunpack.c.l.bf16 %v2235
        %v2238 = vunpack.c.l.bf16 %v2236
        %v2239 = vadd.f32 %v2232, %v2237
        %v2240 = vadd.f32 %v2233, %v2238
        %s2241 = scalar_lea.vmem %s1792, 1040 [#allocation2]
        %v2242 = vld [vmem:[%s2241] sm:$0xf]
        %v2243 = vld [vmem:[%s2241 + $0x4] sm:$0xf]
        %v2244 = vunpack.c.l.bf16 %v2242
        %v2245 = vunpack.c.l.bf16 %v2243
        %v2246 = vadd.f32 %v2239, %v2244
        %v2247 = vadd.f32 %v2240, %v2245
        %s2248 = scalar_lea.vmem %s1792, 1224 [#allocation2]
        %v2249 = vld [vmem:[%s2248] sm:$0xf]
        %v2250 = vld [vmem:[%s2248 + $0x4] sm:$0xf]
        %v2251 = vunpack.c.l.bf16 %v2249
        %v2252 = vunpack.c.l.bf16 %v2250
        %v2253 = vadd.f32 %v2246, %v2251
        %v2254 = vadd.f32 %v2247, %v2252
        %s2255 = scalar_lea.vmem %s1792, 1304 [#allocation2]
        %v2256 = vld [vmem:[%s2255] sm:$0xf]
        %v2257 = vld [vmem:[%s2255 + $0x4] sm:$0xf]
        %v2258 = vunpack.c.l.bf16 %v2256
        %v2259 = vunpack.c.l.bf16 %v2257
        %v2260 = vadd.f32 %v2253, %v2258
        %v2261 = vadd.f32 %v2254, %v2259
        %s2262 = scalar_lea.vmem %s1792, 1440 [#allocation2]
        %v2263 = vld [vmem:[%s2262] sm:$0xf]
        %v2264 = vld [vmem:[%s2262 + $0x4] sm:$0xf]
        %v2265 = vunpack.c.l.bf16 %v2263
        %v2266 = vunpack.c.l.bf16 %v2264
        %v2267 = vadd.f32 %v2260, %v2265
        %v2268 = vadd.f32 %v2261, %v2266
        %s2269 = scalar_lea.vmem %s1792, 24 [#allocation2]
        %v2270 = vld [vmem:[%s2269] sm:$0xf]
        %v2271 = vld [vmem:[%s2269 + $0x4] sm:$0xf]
        %v2272 = vunpack.c.l.bf16 %v2270
        %v2273 = vunpack.c.l.bf16 %v2271
        %s2274 = scalar_lea.vmem %s1792, 56 [#allocation2]
        %v2275 = vld [vmem:[%s2274] sm:$0xf]
        %v2276 = vld [vmem:[%s2274 + $0x4] sm:$0xf]
        %v2277 = vunpack.c.l.bf16 %v2275
        %v2278 = vunpack.c.l.bf16 %v2276
        %v2279 = vadd.f32 %v2272, %v2277
        %v2280 = vadd.f32 %v2273, %v2278
        %s2281 = scalar_lea.vmem %s1792, 88 [#allocation2]
        %v2282 = vld [vmem:[%s2281] sm:$0xf]
        %v2283 = vld [vmem:[%s2281 + $0x4] sm:$0xf]
        %v2284 = vunpack.c.l.bf16 %v2282
        %v2285 = vunpack.c.l.bf16 %v2283
        %v2286 = vadd.f32 %v2279, %v2284
        %v2287 = vadd.f32 %v2280, %v2285
        %s2288 = scalar_lea.vmem %s1792, 120 [#allocation2]
        %v2289 = vld [vmem:[%s2288] sm:$0xf]
        %v2290 = vld [vmem:[%s2288 + $0x4] sm:$0xf]
        %v2291 = vunpack.c.l.bf16 %v2289
        %v2292 = vunpack.c.l.bf16 %v2290
        %v2293 = vadd.f32 %v2286, %v2291
        %v2294 = vadd.f32 %v2287, %v2292
        %s2295 = scalar_lea.vmem %s1792, 152 [#allocation2]
        %v2296 = vld [vmem:[%s2295] sm:$0xf]
        %v2297 = vld [vmem:[%s2295 + $0x4] sm:$0xf]
        %v2298 = vunpack.c.l.bf16 %v2296
        %v2299 = vunpack.c.l.bf16 %v2297
        %v2300 = vadd.f32 %v2293, %v2298
        %v2301 = vadd.f32 %v2294, %v2299
        %s2302 = scalar_lea.vmem %s1792, 184 [#allocation2]
        %v2303 = vld [vmem:[%s2302] sm:$0xf]
        %v2304 = vld [vmem:[%s2302 + $0x4] sm:$0xf]
        %v2305 = vunpack.c.l.bf16 %v2303
        %v2306 = vunpack.c.l.bf16 %v2304
        %v2307 = vadd.f32 %v2300, %v2305
        %v2308 = vadd.f32 %v2301, %v2306
        %s2309 = scalar_lea.vmem %s1792, 216 [#allocation2]
        %v2310 = vld [vmem:[%s2309] sm:$0xf]
        %v2311 = vld [vmem:[%s2309 + $0x4] sm:$0xf]
        %v2312 = vunpack.c.l.bf16 %v2310
        %v2313 = vunpack.c.l.bf16 %v2311
        %v2314 = vadd.f32 %v2307, %v2312
        %v2315 = vadd.f32 %v2308, %v2313
        %s2316 = scalar_lea.vmem %s1792, 248 [#allocation2]
        %v2317 = vld [vmem:[%s2316] sm:$0xf]
        %v2318 = vld [vmem:[%s2316 + $0x4] sm:$0xf]
        %v2319 = vunpack.c.l.bf16 %v2317
        %v2320 = vunpack.c.l.bf16 %v2318
        %v2321 = vadd.f32 %v2314, %v2319
        %v2322 = vadd.f32 %v2315, %v2320
        %s2323 = scalar_lea.vmem %s1792, 280 [#allocation2]
        %v2324 = vld [vmem:[%s2323] sm:$0xf]
        %v2325 = vld [vmem:[%s2323 + $0x4] sm:$0xf]
        %v2326 = vunpack.c.l.bf16 %v2324
        %v2327 = vunpack.c.l.bf16 %v2325
        %v2328 = vadd.f32 %v2321, %v2326
        %v2329 = vadd.f32 %v2322, %v2327
        %s2330 = scalar_lea.vmem %s1792, 312 [#allocation2]
        %v2331 = vld [vmem:[%s2330] sm:$0xf]
        %v2332 = vld [vmem:[%s2330 + $0x4] sm:$0xf]
        %v2333 = vunpack.c.l.bf16 %v2331
        %v2334 = vunpack.c.l.bf16 %v2332
        %v2335 = vadd.f32 %v2328, %v2333
        %v2336 = vadd.f32 %v2329, %v2334
        %s2337 = scalar_lea.vmem %s1792, 344 [#allocation2]
        %v2338 = vld [vmem:[%s2337] sm:$0xf]
        %v2339 = vld [vmem:[%s2337 + $0x4] sm:$0xf]
        %v2340 = vunpack.c.l.bf16 %v2338
        %v2341 = vunpack.c.l.bf16 %v2339
        %v2342 = vadd.f32 %v2335, %v2340
        %v2343 = vadd.f32 %v2336, %v2341
        %s2344 = scalar_lea.vmem %s1792, 376 [#allocation2]
        %v2345 = vld [vmem:[%s2344] sm:$0xf]
        %v2346 = vld [vmem:[%s2344 + $0x4] sm:$0xf]
        %v2347 = vunpack.c.l.bf16 %v2345
        %v2348 = vunpack.c.l.bf16 %v2346
        %v2349 = vadd.f32 %v2342, %v2347
        %v2350 = vadd.f32 %v2343, %v2348
        %s2351 = scalar_lea.vmem %s1792, 408 [#allocation2]
        %v2352 = vld [vmem:[%s2351] sm:$0xf]
        %v2353 = vld [vmem:[%s2351 + $0x4] sm:$0xf]
        %v2354 = vunpack.c.l.bf16 %v2352
        %v2355 = vunpack.c.l.bf16 %v2353
        %v2356 = vadd.f32 %v2349, %v2354
        %v2357 = vadd.f32 %v2350, %v2355
        %s2358 = scalar_lea.vmem %s1792, 440 [#allocation2]
        %v2359 = vld [vmem:[%s2358] sm:$0xf]
        %v2360 = vld [vmem:[%s2358 + $0x4] sm:$0xf]
        %v2361 = vunpack.c.l.bf16 %v2359
        %v2362 = vunpack.c.l.bf16 %v2360
        %v2363 = vadd.f32 %v2356, %v2361
        %v2364 = vadd.f32 %v2357, %v2362
        %s2365 = scalar_lea.vmem %s1792, 472 [#allocation2]
        %v2366 = vld [vmem:[%s2365] sm:$0xf]
        %v2367 = vld [vmem:[%s2365 + $0x4] sm:$0xf]
        %v2368 = vunpack.c.l.bf16 %v2366
        %v2369 = vunpack.c.l.bf16 %v2367
        %v2370 = vadd.f32 %v2363, %v2368
        %v2371 = vadd.f32 %v2364, %v2369
        %s2372 = scalar_lea.vmem %s1792, 504 [#allocation2]
        %v2373 = vld [vmem:[%s2372] sm:$0xf]
        %v2374 = vld [vmem:[%s2372 + $0x4] sm:$0xf]
        %v2375 = vunpack.c.l.bf16 %v2373
        %v2376 = vunpack.c.l.bf16 %v2374
        %v2377 = vadd.f32 %v2370, %v2375
        %v2378 = vadd.f32 %v2371, %v2376
        %s2379 = scalar_lea.vmem %s1792, 536 [#allocation2]
        %v2380 = vld [vmem:[%s2379] sm:$0xf]
        %v2381 = vld [vmem:[%s2379 + $0x4] sm:$0xf]
        %v2382 = vunpack.c.l.bf16 %v2380
        %v2383 = vunpack.c.l.bf16 %v2381
        %v2384 = vadd.f32 %v2377, %v2382
        %v2385 = vadd.f32 %v2378, %v2383
        %s2386 = scalar_lea.vmem %s1792, 568 [#allocation2]
        %v2387 = vld [vmem:[%s2386] sm:$0xf]
        %v2388 = vld [vmem:[%s2386 + $0x4] sm:$0xf]
        %v2389 = vunpack.c.l.bf16 %v2387
        %v2390 = vunpack.c.l.bf16 %v2388
        %v2391 = vadd.f32 %v2384, %v2389
        %v2392 = vadd.f32 %v2385, %v2390
        %s2393 = scalar_lea.vmem %s1792, 600 [#allocation2]
        %v2394 = vld [vmem:[%s2393] sm:$0xf]
        %v2395 = vld [vmem:[%s2393 + $0x4] sm:$0xf]
        %v2396 = vunpack.c.l.bf16 %v2394
        %v2397 = vunpack.c.l.bf16 %v2395
        %v2398 = vadd.f32 %v2391, %v2396
        %v2399 = vadd.f32 %v2392, %v2397
        %s2400 = scalar_lea.vmem %s1792, 632 [#allocation2]
        %v2401 = vld [vmem:[%s2400] sm:$0xf]
        %v2402 = vld [vmem:[%s2400 + $0x4] sm:$0xf]
        %v2403 = vunpack.c.l.bf16 %v2401
        %v2404 = vunpack.c.l.bf16 %v2402
        %v2405 = vadd.f32 %v2398, %v2403
        %v2406 = vadd.f32 %v2399, %v2404
        %s2407 = scalar_lea.vmem %s1792, 664 [#allocation2]
        %v2408 = vld [vmem:[%s2407] sm:$0xf]
        %v2409 = vld [vmem:[%s2407 + $0x4] sm:$0xf]
        %v2410 = vunpack.c.l.bf16 %v2408
        %v2411 = vunpack.c.l.bf16 %v2409
        %v2412 = vadd.f32 %v2405, %v2410
        %v2413 = vadd.f32 %v2406, %v2411
        %s2414 = scalar_lea.vmem %s1792, 696 [#allocation2]
        %v2415 = vld [vmem:[%s2414] sm:$0xf]
        %v2416 = vld [vmem:[%s2414 + $0x4] sm:$0xf]
        %v2417 = vunpack.c.l.bf16 %v2415
        %v2418 = vunpack.c.l.bf16 %v2416
        %v2419 = vadd.f32 %v2412, %v2417
        %v2420 = vadd.f32 %v2413, %v2418
        %s2421 = scalar_lea.vmem %s1792, 728 [#allocation2]
        %v2422 = vld [vmem:[%s2421] sm:$0xf]
        %v2423 = vld [vmem:[%s2421 + $0x4] sm:$0xf]
        %v2424 = vunpack.c.l.bf16 %v2422
        %v2425 = vunpack.c.l.bf16 %v2423
        %v2426 = vadd.f32 %v2419, %v2424
        %v2427 = vadd.f32 %v2420, %v2425
        %s2428 = scalar_lea.vmem %s1792, 768 [#allocation2]
        %v2429 = vld [vmem:[%s2428] sm:$0xf]
        %v2430 = vld [vmem:[%s2428 + $0x4] sm:$0xf]
        %v2431 = vunpack.c.l.bf16 %v2429
        %v2432 = vunpack.c.l.bf16 %v2430
        %v2433 = vadd.f32 %v2426, %v2431
        %v2434 = vadd.f32 %v2427, %v2432
        %s2435 = scalar_lea.vmem %s1792, 832 [#allocation2]
        %v2436 = vld [vmem:[%s2435] sm:$0xf]
        %v2437 = vld [vmem:[%s2435 + $0x4] sm:$0xf]
        %v2438 = vunpack.c.l.bf16 %v2436
        %v2439 = vunpack.c.l.bf16 %v2437
        %v2440 = vadd.f32 %v2433, %v2438
        %v2441 = vadd.f32 %v2434, %v2439
        %s2442 = scalar_lea.vmem %s1792, 872 [#allocation2]
        %v2443 = vld [vmem:[%s2442] sm:$0xf]
        %v2444 = vld [vmem:[%s2442 + $0x4] sm:$0xf]
        %v2445 = vunpack.c.l.bf16 %v2443
        %v2446 = vunpack.c.l.bf16 %v2444
        %v2447 = vadd.f32 %v2440, %v2445
        %v2448 = vadd.f32 %v2441, %v2446
        %s2449 = scalar_lea.vmem %s1792, 976 [#allocation2]
        %v2450 = vld [vmem:[%s2449] sm:$0xf]
        %v2451 = vld [vmem:[%s2449 + $0x4] sm:$0xf]
        %v2452 = vunpack.c.l.bf16 %v2450
        %v2453 = vunpack.c.l.bf16 %v2451
        %v2454 = vadd.f32 %v2447, %v2452
        %v2455 = vadd.f32 %v2448, %v2453
        %s2456 = scalar_lea.vmem %s1792, 1064 [#allocation2]
        %v2457 = vld [vmem:[%s2456] sm:$0xf]
        %v2458 = vld [vmem:[%s2456 + $0x4] sm:$0xf]
        %v2459 = vunpack.c.l.bf16 %v2457
        %v2460 = vunpack.c.l.bf16 %v2458
        %v2461 = vadd.f32 %v2454, %v2459
        %v2462 = vadd.f32 %v2455, %v2460
        %s2463 = scalar_lea.vmem %s1792, 1248 [#allocation2]
        %v2464 = vld [vmem:[%s2463] sm:$0xf]
        %v2465 = vld [vmem:[%s2463 + $0x4] sm:$0xf]
        %v2466 = vunpack.c.l.bf16 %v2464
        %v2467 = vunpack.c.l.bf16 %v2465
        %v2468 = vadd.f32 %v2461, %v2466
        %v2469 = vadd.f32 %v2462, %v2467
        %s2470 = scalar_lea.vmem %s1792, 1320 [#allocation2]
        %v2471 = vld [vmem:[%s2470] sm:$0xf]
        %v2472 = vld [vmem:[%s2470 + $0x4] sm:$0xf]
        %v2473 = vunpack.c.l.bf16 %v2471
        %v2474 = vunpack.c.l.bf16 %v2472
        %v2475 = vadd.f32 %v2468, %v2473
        %v2476 = vadd.f32 %v2469, %v2474
        %s2477 = scalar_lea.vmem %s1792, 1448 [#allocation2]
        %v2478 = vld [vmem:[%s2477] sm:$0xf]
        %v2479 = vld [vmem:[%s2477 + $0x4] sm:$0xf]
        %v2480 = vunpack.c.l.bf16 %v2478
        %v2481 = vunpack.c.l.bf16 %v2479
        %v2482 = vadd.f32 %v2475, %v2480
        %v2483 = vadd.f32 %v2476, %v2481
        %s2484 = scalar_lea.vmem %s1792, 32 [#allocation2]
        %v2485 = vld [vmem:[%s2484] sm:$0xf]
        %v2486 = vld [vmem:[%s2484 + $0x4] sm:$0xf]
        %v2487 = vunpack.c.l.bf16 %v2485
        %v2488 = vunpack.c.l.bf16 %v2486
        %s2489 = scalar_lea.vmem %s1792, 64 [#allocation2]
        %v2490 = vld [vmem:[%s2489] sm:$0xf]
        %v2491 = vld [vmem:[%s2489 + $0x4] sm:$0xf]
        %v2492 = vunpack.c.l.bf16 %v2490
        %v2493 = vunpack.c.l.bf16 %v2491
        %v2494 = vadd.f32 %v2487, %v2492
        %v2495 = vadd.f32 %v2488, %v2493
        %s2496 = scalar_lea.vmem %s1792, 96 [#allocation2]
        %v2497 = vld [vmem:[%s2496] sm:$0xf]
        %v2498 = vld [vmem:[%s2496 + $0x4] sm:$0xf]
        %v2499 = vunpack.c.l.bf16 %v2497
        %v2500 = vunpack.c.l.bf16 %v2498
        %v2501 = vadd.f32 %v2494, %v2499
        %v2502 = vadd.f32 %v2495, %v2500
        %s2503 = scalar_lea.vmem %s1792, 128 [#allocation2]
        %v2504 = vld [vmem:[%s2503] sm:$0xf]
        %v2505 = vld [vmem:[%s2503 + $0x4] sm:$0xf]
        %v2506 = vunpack.c.l.bf16 %v2504
        %v2507 = vunpack.c.l.bf16 %v2505
        %v2508 = vadd.f32 %v2501, %v2506
        %v2509 = vadd.f32 %v2502, %v2507
        %s2510 = scalar_lea.vmem %s1792, 160 [#allocation2]
        %v2511 = vld [vmem:[%s2510] sm:$0xf]
        %v2512 = vld [vmem:[%s2510 + $0x4] sm:$0xf]
        %v2513 = vunpack.c.l.bf16 %v2511
        %v2514 = vunpack.c.l.bf16 %v2512
        %v2515 = vadd.f32 %v2508, %v2513
        %v2516 = vadd.f32 %v2509, %v2514
        %s2517 = scalar_lea.vmem %s1792, 192 [#allocation2]
        %v2518 = vld [vmem:[%s2517] sm:$0xf]
        %v2519 = vld [vmem:[%s2517 + $0x4] sm:$0xf]
        %v2520 = vunpack.c.l.bf16 %v2518
        %v2521 = vunpack.c.l.bf16 %v2519
        %v2522 = vadd.f32 %v2515, %v2520
        %v2523 = vadd.f32 %v2516, %v2521
        %s2524 = scalar_lea.vmem %s1792, 224 [#allocation2]
        %v2525 = vld [vmem:[%s2524] sm:$0xf]
        %v2526 = vld [vmem:[%s2524 + $0x4] sm:$0xf]
        %v2527 = vunpack.c.l.bf16 %v2525
        %v2528 = vunpack.c.l.bf16 %v2526
        %v2529 = vadd.f32 %v2522, %v2527
        %v2530 = vadd.f32 %v2523, %v2528
        %s2531 = scalar_lea.vmem %s1792, 256 [#allocation2]
        %v2532 = vld [vmem:[%s2531] sm:$0xf]
        %v2533 = vld [vmem:[%s2531 + $0x4] sm:$0xf]
        %v2534 = vunpack.c.l.bf16 %v2532
        %v2535 = vunpack.c.l.bf16 %v2533
        %v2536 = vadd.f32 %v2529, %v2534
        %v2537 = vadd.f32 %v2530, %v2535
        %s2538 = scalar_lea.vmem %s1792, 288 [#allocation2]
        %v2539 = vld [vmem:[%s2538] sm:$0xf]
        %v2540 = vld [vmem:[%s2538 + $0x4] sm:$0xf]
        %v2541 = vunpack.c.l.bf16 %v2539
        %v2542 = vunpack.c.l.bf16 %v2540
        %v2543 = vadd.f32 %v2536, %v2541
        %v2544 = vadd.f32 %v2537, %v2542
        %s2545 = scalar_lea.vmem %s1792, 320 [#allocation2]
        %v2546 = vld [vmem:[%s2545] sm:$0xf]
        %v2547 = vld [vmem:[%s2545 + $0x4] sm:$0xf]
        %v2548 = vunpack.c.l.bf16 %v2546
        %v2549 = vunpack.c.l.bf16 %v2547
        %v2550 = vadd.f32 %v2543, %v2548
        %v2551 = vadd.f32 %v2544, %v2549
        %s2552 = scalar_lea.vmem %s1792, 352 [#allocation2]
        %v2553 = vld [vmem:[%s2552] sm:$0xf]
        %v2554 = vld [vmem:[%s2552 + $0x4] sm:$0xf]
        %v2555 = vunpack.c.l.bf16 %v2553
        %v2556 = vunpack.c.l.bf16 %v2554
        %v2557 = vadd.f32 %v2550, %v2555
        %v2558 = vadd.f32 %v2551, %v2556
        %s2559 = scalar_lea.vmem %s1792, 384 [#allocation2]
        %v2560 = vld [vmem:[%s2559] sm:$0xf]
        %v2561 = vld [vmem:[%s2559 + $0x4] sm:$0xf]
        %v2562 = vunpack.c.l.bf16 %v2560
        %v2563 = vunpack.c.l.bf16 %v2561
        %v2564 = vadd.f32 %v2557, %v2562
        %v2565 = vadd.f32 %v2558, %v2563
        %s2566 = scalar_lea.vmem %s1792, 416 [#allocation2]
        %v2567 = vld [vmem:[%s2566] sm:$0xf]
        %v2568 = vld [vmem:[%s2566 + $0x4] sm:$0xf]
        %v2569 = vunpack.c.l.bf16 %v2567
        %v2570 = vunpack.c.l.bf16 %v2568
        %v2571 = vadd.f32 %v2564, %v2569
        %v2572 = vadd.f32 %v2565, %v2570
        %s2573 = scalar_lea.vmem %s1792, 448 [#allocation2]
        %v2574 = vld [vmem:[%s2573] sm:$0xf]
        %v2575 = vld [vmem:[%s2573 + $0x4] sm:$0xf]
        %v2576 = vunpack.c.l.bf16 %v2574
        %v2577 = vunpack.c.l.bf16 %v2575
        %v2578 = vadd.f32 %v2571, %v2576
        %v2579 = vadd.f32 %v2572, %v2577
        %s2580 = scalar_lea.vmem %s1792, 480 [#allocation2]
        %v2581 = vld [vmem:[%s2580] sm:$0xf]
        %v2582 = vld [vmem:[%s2580 + $0x4] sm:$0xf]
        %v2583 = vunpack.c.l.bf16 %v2581
        %v2584 = vunpack.c.l.bf16 %v2582
        %v2585 = vadd.f32 %v2578, %v2583
        %v2586 = vadd.f32 %v2579, %v2584
        %s2587 = scalar_lea.vmem %s1792, 512 [#allocation2]
        %v2588 = vld [vmem:[%s2587] sm:$0xf]
        %v2589 = vld [vmem:[%s2587 + $0x4] sm:$0xf]
        %v2590 = vunpack.c.l.bf16 %v2588
        %v2591 = vunpack.c.l.bf16 %v2589
        %v2592 = vadd.f32 %v2585, %v2590
        %v2593 = vadd.f32 %v2586, %v2591
        %s2594 = scalar_lea.vmem %s1792, 544 [#allocation2]
        %v2595 = vld [vmem:[%s2594] sm:$0xf]
        %v2596 = vld [vmem:[%s2594 + $0x4] sm:$0xf]
        %v2597 = vunpack.c.l.bf16 %v2595
        %v2598 = vunpack.c.l.bf16 %v2596
        %v2599 = vadd.f32 %v2592, %v2597
        %v2600 = vadd.f32 %v2593, %v2598
        %s2601 = scalar_lea.vmem %s1792, 576 [#allocation2]
        %v2602 = vld [vmem:[%s2601] sm:$0xf]
        %v2603 = vld [vmem:[%s2601 + $0x4] sm:$0xf]
        %v2604 = vunpack.c.l.bf16 %v2602
        %v2605 = vunpack.c.l.bf16 %v2603
        %v2606 = vadd.f32 %v2599, %v2604
        %v2607 = vadd.f32 %v2600, %v2605
        %s2608 = scalar_lea.vmem %s1792, 608 [#allocation2]
        %v2609 = vld [vmem:[%s2608] sm:$0xf]
        %v2610 = vld [vmem:[%s2608 + $0x4] sm:$0xf]
        %v2611 = vunpack.c.l.bf16 %v2609
        %v2612 = vunpack.c.l.bf16 %v2610
        %v2613 = vadd.f32 %v2606, %v2611
        %v2614 = vadd.f32 %v2607, %v2612
        %s2615 = scalar_lea.vmem %s1792, 640 [#allocation2]
        %v2616 = vld [vmem:[%s2615] sm:$0xf]
        %v2617 = vld [vmem:[%s2615 + $0x4] sm:$0xf]
        %v2618 = vunpack.c.l.bf16 %v2616
        %v2619 = vunpack.c.l.bf16 %v2617
        %v2620 = vadd.f32 %v2613, %v2618
        %v2621 = vadd.f32 %v2614, %v2619
        %s2622 = scalar_lea.vmem %s1792, 672 [#allocation2]
        %v2623 = vld [vmem:[%s2622] sm:$0xf]
        %v2624 = vld [vmem:[%s2622 + $0x4] sm:$0xf]
        %v2625 = vunpack.c.l.bf16 %v2623
        %v2626 = vunpack.c.l.bf16 %v2624
        %v2627 = vadd.f32 %v2620, %v2625
        %v2628 = vadd.f32 %v2621, %v2626
        %s2629 = scalar_lea.vmem %s1792, 704 [#allocation2]
        %v2630 = vld [vmem:[%s2629] sm:$0xf]
        %v2631 = vld [vmem:[%s2629 + $0x4] sm:$0xf]
        %v2632 = vunpack.c.l.bf16 %v2630
        %v2633 = vunpack.c.l.bf16 %v2631
        %v2634 = vadd.f32 %v2627, %v2632
        %v2635 = vadd.f32 %v2628, %v2633
        %s2636 = scalar_lea.vmem %s1792, 736 [#allocation2]
        %v2637 = vld [vmem:[%s2636] sm:$0xf]
        %v2638 = vld [vmem:[%s2636 + $0x4] sm:$0xf]
        %v2639 = vunpack.c.l.bf16 %v2637
        %v2640 = vunpack.c.l.bf16 %v2638
        %v2641 = vadd.f32 %v2634, %v2639
        %v2642 = vadd.f32 %v2635, %v2640
        %s2643 = scalar_lea.vmem %s1792, 784 [#allocation2]
        %v2644 = vld [vmem:[%s2643] sm:$0xf]
        %v2645 = vld [vmem:[%s2643 + $0x4] sm:$0xf]
        %v2646 = vunpack.c.l.bf16 %v2644
        %v2647 = vunpack.c.l.bf16 %v2645
        %v2648 = vadd.f32 %v2641, %v2646
        %v2649 = vadd.f32 %v2642, %v2647
        %s2650 = scalar_lea.vmem %s1792, 840 [#allocation2]
        %v2651 = vld [vmem:[%s2650] sm:$0xf]
        %v2652 = vld [vmem:[%s2650 + $0x4] sm:$0xf]
        %v2653 = vunpack.c.l.bf16 %v2651
        %v2654 = vunpack.c.l.bf16 %v2652
        %v2655 = vadd.f32 %v2648, %v2653
        %v2656 = vadd.f32 %v2649, %v2654
        %s2657 = scalar_lea.vmem %s1792, 880 [#allocation2]
        %v2658 = vld [vmem:[%s2657] sm:$0xf]
        %v2659 = vld [vmem:[%s2657 + $0x4] sm:$0xf]
        %v2660 = vunpack.c.l.bf16 %v2658
        %v2661 = vunpack.c.l.bf16 %v2659
        %v2662 = vadd.f32 %v2655, %v2660
        %v2663 = vadd.f32 %v2656, %v2661
        %s2664 = scalar_lea.vmem %s1792, 984 [#allocation2]
        %v2665 = vld [vmem:[%s2664] sm:$0xf]
        %v2666 = vld [vmem:[%s2664 + $0x4] sm:$0xf]
        %v2667 = vunpack.c.l.bf16 %v2665
        %v2668 = vunpack.c.l.bf16 %v2666
        %v2669 = vadd.f32 %v2662, %v2667
        %v2670 = vadd.f32 %v2663, %v2668
        %s2671 = scalar_lea.vmem %s1792, 1096 [#allocation2]
        %v2672 = vld [vmem:[%s2671] sm:$0xf]
        %v2673 = vld [vmem:[%s2671 + $0x4] sm:$0xf]
        %v2674 = vunpack.c.l.bf16 %v2672
        %v2675 = vunpack.c.l.bf16 %v2673
        %v2676 = vadd.f32 %v2669, %v2674
        %v2677 = vadd.f32 %v2670, %v2675
        %s2678 = scalar_lea.vmem %s1792, 1264 [#allocation2]
        %v2679 = vld [vmem:[%s2678] sm:$0xf]
        %v2680 = vld [vmem:[%s2678 + $0x4] sm:$0xf]
        %v2681 = vunpack.c.l.bf16 %v2679
        %v2682 = vunpack.c.l.bf16 %v2680
        %v2683 = vadd.f32 %v2676, %v2681
        %v2684 = vadd.f32 %v2677, %v2682
        %s2685 = scalar_lea.vmem %s1792, 1328 [#allocation2]
        %v2686 = vld [vmem:[%s2685] sm:$0xf]
        %v2687 = vld [vmem:[%s2685 + $0x4] sm:$0xf]
        %v2688 = vunpack.c.l.bf16 %v2686
        %v2689 = vunpack.c.l.bf16 %v2687
        %v2690 = vadd.f32 %v2683, %v2688
        %v2691 = vadd.f32 %v2684, %v2689
        %v2692 = vadd.f32 %v2052, %v2267
        %v2693 = vadd.f32 %v2053, %v2268
        %v2694 = vadd.f32 %v2482, %v2690
        %v2695 = vadd.f32 %v2483, %v2691
        %v2696 = vadd.f32 %v2692, %v2694
        %v2697 = vadd.f32 %v2693, %v2695
        %v2698 = vmul.f32 %v2696, 8.0
        %v2699 = vmul.f32 %v2697, 8.0
        %v2700 = vadd.f32 %v2698, 1.0
        %v2701 = vadd.f32 %v2699, 1.0
        %v2702 = vld [vmem:[%s1799] sm:$0xff]
        %v2703 = vld [vmem:[%s1799 + $0x8] sm:$0xff]
        %v2704 = vld [vmem:[%s1799 + $0x10] sm:$0xff]
        %v2705 = vld [vmem:[%s1799 + $0x18] sm:$0xff]
        %s2706 = scalar_lea.vmem %s1799, 32 [#allocation3]
        %v2707 = vld [vmem:[%s2706] sm:$0xff]
        %v2708 = vld [vmem:[%s2706 + $0x8] sm:$0xff]
        %v2709 = vld [vmem:[%s2706 + $0x10] sm:$0xff]
        %v2710 = vld [vmem:[%s2706 + $0x18] sm:$0xff]
        %v2711 = vadd.f32 %v2702, %v2707
        %v2712 = vadd.f32 %v2703, %v2708
        %v2713 = vadd.f32 %v2704, %v2709
        %v2714 = vadd.f32 %v2705, %v2710
        %s2715 = scalar_lea.vmem %s1799, 64 [#allocation3]
        %v2716 = vld [vmem:[%s2715] sm:$0xff]
        %v2717 = vld [vmem:[%s2715 + $0x8] sm:$0xff]
        %v2718 = vld [vmem:[%s2715 + $0x10] sm:$0xff]
        %v2719 = vld [vmem:[%s2715 + $0x18] sm:$0xff]
        %v2720 = vadd.f32 %v2711, %v2716
        %v2721 = vadd.f32 %v2712, %v2717
        %v2722 = vadd.f32 %v2713, %v2718
        %v2723 = vadd.f32 %v2714, %v2719
        %v2724 = vld [vmem:[%s2] sm:$0xff]
        %v2725 = vld [vmem:[%s2 + $0x8] sm:$0xff]
        %vm2726 = vcmask 261120
        %v2728 = vsel %vm2726, %v2724, 0
        %v2731 = vsel %vm2726, %v2725, 0
        %2733 = vmatprep.subr.mxu0 0.0
        %2734 = vmatpush1.msra.mxu0 %v2720
        %2735 = vmatprep.subr.mxu0 0.0
        %2736 = vmatpush1.msra.mxu0 %v2721
        %2737 = vmatprep.subr.mxu0 0.0
        %2738 = vmatpush1.msra.mxu0 %v2722
        %2739 = vmatprep.subr.mxu0 0.0
        %2740 = vmatpush1.msra.mxu0 %v2723
        %2741 = vmatprep.subr.mxu0 0.0
        %2742 = vmatpush1.msra.mxu0 0.0
        %2743 = vmatprep.subr.mxu0 0.0
        %2744 = vmatpush1.msra.mxu0 0.0
        %2745 = vmatprep.subr.mxu0 0.0
        %2746 = vmatpush1.msra.mxu0 0.0
        %2747 = vmatprep.subr.mxu0 0.0
        %2748 = vmatpush1.msra.mxu0 0.0
        %2749 = vmatprep.subr.mxu0 0.0
        %2750 = vmatpush1.msra.mxu0 0.0
        %2751 = vmatprep.subr.mxu0 0.0
        %2752 = vmatpush1.msra.mxu0 0.0
        %2753 = vmatprep.subr.mxu0 0.0
        %2754 = vmatpush1.msra.mxu0 0.0
        %2755 = vmatprep.subr.mxu0 0.0
        %2756 = vmatpush1.msra.mxu0 0.0
        %2757 = vmatprep.subr.mxu0 0.0
        %2758 = vmatpush1.msra.mxu0 0.0
        %2759 = vmatprep.subr.mxu0 0.0
        %2760 = vmatpush1.msra.mxu0 0.0
        %2761 = vmatprep.subr.mxu0 0.0
        %2762 = vmatpush1.msra.mxu0 0.0
        %2763 = vmatprep.subr.mxu0 0.0
        %2764 = vmatpush1.msra.mxu0 0.0
        %2765 = vmatprep.subr.mxu0 0.0
        %2766 = vmatpush1.msra.mxu0 0.0
        %2767 = vmatprep.subr.mxu0 0.0
        %2768 = vmatpush1.msra.mxu0 0.0
        %2769 = vmatprep.subr.mxu0 0.0
        %2770 = vmatpush1.msra.mxu0 0.0
        %2771 = vmatprep.subr.mxu0 0.0
        %2772 = vmatpush1.msra.mxu0 0.0
        %2773 = vmatprep.subr.mxu0 0.0
        %2774 = vmatpush1.msra.mxu0 0.0
        %2775 = vmatprep.subr.mxu0 0.0
        %2776 = vmatpush1.msra.mxu0 0.0
        %2777 = vmatprep.subr.mxu0 0.0
        %2778 = vmatpush1.msra.mxu0 0.0
        %2779 = vmatprep.subr.mxu0 0.0
        %2780 = vmatpush1.msra.mxu0 0.0
        %2781 = vmatprep.subr.mxu0 0.0
        %2782 = vmatpush1.msra.mxu0 0.0
        %2783 = vmatprep.subr.mxu0 0.0
        %2784 = vmatpush1.msra.mxu0 0.0
        %2785 = vmatprep.subr.mxu0 0.0
        %2786 = vmatpush1.msra.mxu0 0.0
        %2787 = vmatprep.subr.mxu0 0.0
        %2788 = vmatpush1.msra.mxu0 0.0
        %2789 = vmatprep.subr.mxu0 0.0
        %2790 = vmatpush1.msra.mxu0 0.0
        %2791 = vmatprep.subr.mxu0 0.0
        %2792 = vmatpush1.msra.mxu0 0.0
        %2793 = vmatprep.subr.mxu0 0.0
        %2794 = vmatpush1.msra.mxu0 0.0
        %2795 = vmatprep.subr.mxu0 0.0
        %2796 = vmatpush1.msra.mxu0 0.0
        %2797 = vmatprep.mubr.f32.mxu0 0.0
        %2798 = vmatmul.mubr.f32.gmra.mrb[0].mxu0 %v2728
        %v2799 = vpop.f32.mrb[0].mxu0
        %v2800 = vadd.f32 0.0, %v2799
        %v2801 = vpop.f32.mrb[0].mxu0
        %2802 = vmatprep.mubr.f32.mxu0 0.0
        %2803 = vmatmul.mubr.f32.gmra.mrb[0].mxu0 %v2731
        %v2804 = vpop.f32.mrb[0].mxu0
        %v2805 = vadd.f32 0.0, %v2804
        %v2806 = vpop.f32.mrb[0].mxu0
        %2807 = vdwg.mxu0
        %v2808 = vld [vmem:[%s3] sm:$0xff]
        %v2809 = vld [vmem:[%s3 + $0x8] sm:$0xff]
        %v2810 = vld [vmem:[%s3 + $0x10] sm:$0xff]
        %v2811 = vld [vmem:[%s3 + $0x18] sm:$0xff]
        %v2812 = vld [vmem:[%s3 + $0x20] sm:$0xff]
        %v2813 = vld [vmem:[%s3 + $0x28] sm:$0xff]
        %v2814 = vld [vmem:[%s3 + $0x30] sm:$0xff]
        %v2815 = vld [vmem:[%s3 + $0x38] sm:$0xff]
        %vm2816 = vcmask 523264
        %v2818 = vsel %vm2816, %v2800, 0
        %v2821 = vsel %vm2816, %v2805, 0
        %2823 = vmatprep.subr.mxu0 0.0
        %2824 = vmatpush1.msra.mxu0 %v2808
        %2825 = vmatprep.subr.mxu0 0.0
        %2826 = vmatpush1.msra.mxu0 %v2809
        %2827 = vmatprep.subr.mxu0 0.0
        %2828 = vmatpush1.msra.mxu0 %v2810
        %2829 = vmatprep.subr.mxu0 0.0
        %2830 = vmatpush1.msra.mxu0 %v2811
        %2831 = vmatprep.subr.mxu0 0.0
        %2832 = vmatpush1.msra.mxu0 %v2812
        %2833 = vmatprep.subr.mxu0 0.0
        %2834 = vmatpush1.msra.mxu0 %v2813
        %2835 = vmatprep.subr.mxu0 0.0
        %2836 = vmatpush1.msra.mxu0 %v2814
        %2837 = vmatprep.subr.mxu0 0.0
        %2838 = vmatpush1.msra.mxu0 %v2815
        %2839 = vmatprep.subr.mxu0 0.0
        %2840 = vmatpush1.msra.mxu0 0.0
        %2841 = vmatprep.subr.mxu0 0.0
        %2842 = vmatpush1.msra.mxu0 0.0
        %2843 = vmatprep.subr.mxu0 0.0
        %2844 = vmatpush1.msra.mxu0 0.0
        %2845 = vmatprep.subr.mxu0 0.0
        %2846 = vmatpush1.msra.mxu0 0.0
        %2847 = vmatprep.subr.mxu0 0.0
        %2848 = vmatpush1.msra.mxu0 0.0
        %2849 = vmatprep.subr.mxu0 0.0
        %2850 = vmatpush1.msra.mxu0 0.0
        %2851 = vmatprep.subr.mxu0 0.0
        %2852 = vmatpush1.msra.mxu0 0.0
        %2853 = vmatprep.subr.mxu0 0.0
        %2854 = vmatpush1.msra.mxu0 0.0
        %2855 = vmatprep.subr.mxu0 0.0
        %2856 = vmatpush1.msra.mxu0 0.0
        %2857 = vmatprep.subr.mxu0 0.0
        %2858 = vmatpush1.msra.mxu0 0.0
        %2859 = vmatprep.subr.mxu0 0.0
        %2860 = vmatpush1.msra.mxu0 0.0
        %2861 = vmatprep.subr.mxu0 0.0
        %2862 = vmatpush1.msra.mxu0 0.0
        %2863 = vmatprep.subr.mxu0 0.0
        %2864 = vmatpush1.msra.mxu0 0.0
        %2865 = vmatprep.subr.mxu0 0.0
        %2866 = vmatpush1.msra.mxu0 0.0
        %2867 = vmatprep.subr.mxu0 0.0
        %2868 = vmatpush1.msra.mxu0 0.0
        %2869 = vmatprep.subr.mxu0 0.0
        %2870 = vmatpush1.msra.mxu0 0.0
        %2871 = vmatprep.subr.mxu0 0.0
        %2872 = vmatpush1.msra.mxu0 0.0
        %2873 = vmatprep.subr.mxu0 0.0
        %2874 = vmatpush1.msra.mxu0 0.0
        %2875 = vmatprep.subr.mxu0 0.0
        %2876 = vmatpush1.msra.mxu0 0.0
        %2877 = vmatprep.subr.mxu0 0.0
        %2878 = vmatpush1.msra.mxu0 0.0
        %2879 = vmatprep.subr.mxu0 0.0
        %2880 = vmatpush1.msra.mxu0 0.0
        %2881 = vmatprep.subr.mxu0 0.0
        %2882 = vmatpush1.msra.mxu0 0.0
        %2883 = vmatprep.subr.mxu0 0.0
        %2884 = vmatpush1.msra.mxu0 0.0
        %2885 = vmatprep.subr.mxu0 0.0
        %2886 = vmatpush1.msra.mxu0 0.0
        %2887 = vmatprep.mubr.f32.mxu0 0.0
        %2888 = vmatmul.mubr.f32.gmra.mrb[0].mxu0 %v2818
        %v2889 = vpop.f32.mrb[0].mxu0
        %v2890 = vadd.f32 0.0, %v2889
        %v2891 = vpop.f32.mrb[0].mxu0
        %2892 = vmatprep.mubr.f32.mxu0 0.0
        %2893 = vmatmul.mubr.f32.gmra.mrb[0].mxu0 %v2821
        %v2894 = vpop.f32.mrb[0].mxu0
        %v2895 = vadd.f32 0.0, %v2894
        %v2896 = vpop.f32.mrb[0].mxu0
        %2897 = vdwg.mxu0
        %v2898 = vsel %vm2726, %v2700, 0.0
        %v2899 = vsel %vm2726, %v2701, 0.0
        %v2900 = vadd.f32 %v2898, %v2899
        %2901 = vadd.xlane.f32.xlu0 %v2900
        %v2902 = vpop.xlane.xlu0 %2901
        %v2903 = vrot.slane %v2902, 4
        %v2904 = vadd.f32 %v2902, %v2903
        %v2905 = vrot.slane %v2904, 2
        %v2906 = vadd.f32 %v2904, %v2905
        %v2907 = vrot.slane %v2906, 1
        %v2908 = vadd.f32 %v2906, %v2907
        %s2909 = vtos %v2908
        %v2910 = vstv %s2909
        %2911 = vst [vmem:[%s1836] sm:$0xff] %v2910
        %v2912 = vmul.f32 %v2700, %v2890
        %v2913 = vmul.f32 %v2701, %v2895
        %v2914 = vsel %vm2726, %v2912, 0.0
        %v2915 = vsel %vm2726, %v2913, 0.0
        %v2916 = vadd.f32 %v2914, %v2915
        %2917 = vadd.xlane.f32.xlu0 %v2916
        %v2918 = vpop.xlane.xlu0 %2917
        %v2919 = vrot.slane %v2918, 4
        %v2920 = vadd.f32 %v2918, %v2919
        %v2921 = vrot.slane %v2920, 2
        %v2922 = vadd.f32 %v2920, %v2921
        %v2923 = vrot.slane %v2922, 1
        %v2924 = vadd.f32 %v2922, %v2923
        %s2925 = vtos %v2924
        %v2926 = vstv %s2925
        %s2927 = scalar_lea.vmem %s1836, 8
        %2928 = vst [vmem:[%s2927] sm:$0xff] %v2926
        %s2929 = smul.u32 %s19, 2
        %s2930 = sadd.s32 %s2929, %s20
        %p2931 = scmp.lt.s32.totalorder %s2930, 3
        %s2932 = scalar_select %p2931, %s2930, 3
        %s2933 = smul.addr %s2932, 2
        %s2934 = smul.addr %s2933, 8
        %s2935 = scalar_lea.vmem %s4, %s2934
        // Predicated region
        $region116: #{object_aware_loss.1} parent=106 // pred_check
          %p2936 = pneg %p147
        $region117: #{object_aware_loss.1} parent=106 // pred_check_branch
          %2938 = sbr.rel (%p2936) target = $region119
        $region118: #{object_aware_loss.1} parent=106 // pred_region
          %s2939 = smul.u32 %s19, 2
          %s2940 = sadd.s32 %s2939, %s20
        $region119: #{object_aware_loss.1} parent=106 // pred_fallthru
          _
      $region107: #{object_aware_loss.1} parent=5 // pred_fallthru
        _
      %p2941 = scmp.le.s32.totalorder 2, %s10
      // Predicated region
      $region120: #{object_aware_loss.1} parent=5 // pred_check
        %p2942 = pneg %p2941
      $region121: #{object_aware_loss.1} parent=5 // pred_check_branch
        %2944 = sbr.rel (%p2942) target = $region123
      $region122: #{object_aware_loss.1} parent=5 // pred_region
        %s2945 = ssub.s32 %s10, 2
        // Predicated region
        $region124: #{object_aware_loss.1} parent=122 // pred_check
          %p2946 = pneg %p153
        $region125: #{object_aware_loss.1} parent=122 // pred_check_branch
          %2948 = sbr.rel (%p2946) target = $region127
        $region126: #{object_aware_loss.1} parent=122 // pred_region
          %s2949 = smul.u32 %s21, 2
          %s2950 = sadd.s32 %s2949, %s22
          %p2951 = scmp.lt.s32.totalorder %s2950, 3
          %s2952 = scalar_select %p2951, %s2950, 3
          %s2953 = smul.addr %s2952, 2
          %s2954 = smul.addr %s2953, 8
          %s2955 = scalar_lea.vmem %s4, %s2954
        $region127: #{object_aware_loss.1} parent=122 // pred_fallthru
          _
      $region123: #{object_aware_loss.1} parent=5 // pred_fallthru
        _
    $region6: #{object_aware_loss.1} parent=1 // loop_footer
      %s14 = sadd.s32 1, %s10
    $region7: #{object_aware_loss.1} parent=1 // loop_footer_branch
      %9 = sbr.rel target = $region3
    $region8: #{object_aware_loss.1} parent=1 // loop_exit
      _

</llo_original>
